<compile_context>
chip_gen: v6e
topology: v6e:2x2x1
jax: 0.10.0
libtpu: 0.0.40
codegen_flags: <defaults>
</compile_context>

<pallas_src>
import jax
import jax.numpy as jnp
from jax.experimental import pallas as pl
from jax.experimental.pallas import tpu as pltpu


def _down_kernel(xa_ref, xb_ref, w1_ref, s1_ref, b1_ref, w2_ref, s2_ref,
                 b2_ref, o_ref, pad1, pad2, col1, col2, acc):
    """One (batch element, row strip of S output rows) per grid step.

    xa_ref : (1, S, 2, Wp, 2*Cin) bf16  pooled rows [r0-2, r0+S-2), r0 = s*S
    xb_ref : (1, 4, 2, Wp, 2*Cin) bf16  pooled rows [r0+S-2, r0+S+2)
             (rows outside the image arrive as zeros: wrapper zero-pads 2 rows
              of the pre-pool input on each side, and max-pool of zeros is 0,
              which is exactly conv1's zero padding)
    w1_ref : (3, 3*Cin,   CmidP) bf16   conv1 weights, one dy slab per row
    w2_ref : (3, 3*CmidP, CoutP) bf16   conv2 weights (Cmid/Cout zero-padded)
    s*/b*  : (1, C) f32                 folded conv-bias + eval-mode BN affine
    o_ref  : (1, S, Wp, CoutP) bf16     lane-dense output strip
    pad1   : (S+4, Wp+2, Cin)   bf16    pooled input + zero column halo
    pad2   : (S+2, Wp+2, CmidP) bf16    conv1 activation + zero column halo
    col1   : (S+2, Wp, 3*Cin)   bf16    per-dy im2col slab for conv1
    col2   : (S,   Wp, 3*CmidP) bf16    per-dy im2col slab for conv2
    acc    : ((S+2)*Wp, max(CmidP, CoutP)) f32  shared explicit accumulator
    """
    S = o_ref.shape[1]
    Wp = o_ref.shape[2]
    CoutP = o_ref.shape[3]
    Cin = pad1.shape[2]
    CmidP = pad2.shape[2]
    R1 = S + 2                      # conv1 rows needed (strip +/- 1-row halo)

    strip = pl.program_id(1)
    last_strip = pl.num_programs(1) - 1

    # ---- MaxPool2d(2): max over the row phase, then the two lane halves ---
    def pool(v):                              # (r, 2, Wp, 2*Cin) -> (r, Wp, Cin)
        r = jnp.maximum(v[:, 0], v[:, 1])
        return jnp.maximum(r[:, :, :Cin], r[:, :, Cin:])

    # Zero only the 1-wide column halos; the row halo is already zero in HBM.
    zc1 = jnp.zeros((S + 4, 1, Cin), pad1.dtype)
    pad1[:, 0:1, :] = zc1
    pad1[:, Wp + 1:Wp + 2, :] = zc1
    pad1[0:S, 1:Wp + 1, :] = pool(xa_ref[0])
    pad1[S:S + 4, 1:Wp + 1, :] = pool(xb_ref[0])

    # ---- Conv1 3x3 pad=1: three dy-slab MXU dots -> shared f32 accumulator -
    for dy in range(3):
        for dx in range(3):
            col1[:, :, dx * Cin:(dx + 1) * Cin] = pad1[dy:dy + R1, dx:dx + Wp, :]
        part = jnp.dot(col1[...].reshape(R1 * Wp, 3 * Cin), w1_ref[dy],
                       preferred_element_type=jnp.float32)
        if dy == 0:
            acc[0:R1 * Wp, 0:CmidP] = part
        else:
            acc[0:R1 * Wp, 0:CmidP] += part
    h = jnp.maximum(acc[0:R1 * Wp, 0:CmidP] * s1_ref[...] + b1_ref[...], 0.0)

    # ---- stage conv1 activation (bf16) into the zero-column-halo pad2 -----
    zc2 = jnp.zeros((R1, 1, CmidP), pad2.dtype)
    pad2[:, 0:1, :] = zc2
    pad2[:, Wp + 1:Wp + 2, :] = zc2
    pad2[:, 1:Wp + 1, :] = h.astype(pad2.dtype).reshape(R1, Wp, CmidP)

    # conv2 must see ZERO row padding at the image border, not conv1(zeros).
    @pl.when(strip == 0)
    def _():
        pad2[0:1, :, :] = jnp.zeros((1, Wp + 2, CmidP), pad2.dtype)

    @pl.when(strip == last_strip)
    def _():
        pad2[R1 - 1:R1, :, :] = jnp.zeros((1, Wp + 2, CmidP), pad2.dtype)

    # ---- Conv2 3x3 pad=1: three dy-slab MXU dots, affine + ReLU, bf16 store
    for dy in range(3):
        for dx in range(3):
            col2[:, :, dx * CmidP:(dx + 1) * CmidP] = pad2[dy:dy + S,
                                                           dx:dx + Wp, :]
        part = jnp.dot(col2[...].reshape(S * Wp, 3 * CmidP), w2_ref[dy],
                       preferred_element_type=jnp.float32)
        if dy == 0:
            acc[0:S * Wp, 0:CoutP] = part
        else:
            acc[0:S * Wp, 0:CoutP] += part
    y = jnp.maximum(acc[0:S * Wp, 0:CoutP] * s2_ref[...] + b2_ref[...], 0.0)
    o_ref[0] = y.astype(o_ref.dtype).reshape(S, Wp, CoutP)


def down_forward_nhwc(x_nhwc, params, *, eps=1e-5, strip=None,
                      out_dtype=jnp.bfloat16):
    """Down.forward on NHWC activations (preferred path: no NCHW transposes).

    Returns NHWC with `out_dtype` and the channel dim sliced back to Cout.
    (A real model can keep the CoutP-padded, bf16 output for the next layer.)
    """
    N, H, W, Cin = x_nhwc.shape
    assert H % 2 == 0 and W % 2 == 0, "MaxPool2d(2) needs even H, W"
    Hp, Wp = H // 2, W // 2
    assert Wp % 8 == 0, "Wp must be a multiple of 8 (free sublane merges)"
    assert Hp % 4 == 0, "Hp must be a multiple of 4 (halo block alignment)"

    if strip is None:   # ~16 rows: fits v7x 64 MiB VMEM, keeps MXU M >= 2 tiles
        strip = next((c for c in (16, 32, 8, 4) if c <= Hp and Hp % c == 0), Hp)
    assert Hp % strip == 0 and strip % 4 == 0
    S = strip
    n_strips = Hp // S

    Cmid = params["conv1_w"].shape[0]
    Cout = params["conv2_w"].shape[0]
    CmidP = ((Cmid + 127) // 128) * 128     # lane-dense conv1 N / aligned taps
    CoutP = ((Cout + 127) // 128) * 128     # lane-dense output stores

    # --- input: bf16, regroup the 2x2 pool window, zero-pad 2 halo rows -----
    # (N,H,W,C) -> (N,Hp,2,Wp,2C) is a free row-major reshape; cast+pad fuse
    # into one XLA copy.  The 2-row zero padding makes every strip's halo an
    # ordinary in-bounds BlockSpec window (pool of zeros == conv zero pad).
    xg = x_nhwc.astype(jnp.bfloat16).reshape(N, Hp, 2, Wp, 2 * Cin)
    xg = jnp.pad(xg, ((0, 0), (2, 2), (0, 0), (0, 0), (0, 0)))

    # --- weights: PyTorch OIHW -> (ky, kx*ci, co), zero-pad channel dims ----
    w1 = jnp.transpose(params["conv1_w"], (2, 3, 1, 0))          # (3,3,Cin,Cmid)
    w1 = jnp.pad(w1, ((0, 0), (0, 0), (0, 0), (0, CmidP - Cmid)))
    w1 = w1.reshape(3, 3 * Cin, CmidP).astype(jnp.bfloat16)
    w2 = jnp.transpose(params["conv2_w"], (2, 3, 1, 0))          # (3,3,Cmid,Cout)
    w2 = jnp.pad(w2, ((0, 0), (0, 0), (0, CmidP - Cmid), (0, CoutP - Cout)))
    w2 = w2.reshape(3, 3 * CmidP, CoutP).astype(jnp.bfloat16)

    # --- fold conv bias + eval-mode BatchNorm into per-channel scale/bias ---
    s1 = params["bn1_gamma"] / jnp.sqrt(params["bn1_var"] + eps)
    b1 = (params["conv1_b"] - params["bn1_mean"]) * s1 + params["bn1_beta"]
    s2 = params["bn2_gamma"] / jnp.sqrt(params["bn2_var"] + eps)
    b2 = (params["conv2_b"] - params["bn2_mean"]) * s2 + params["bn2_beta"]
    s1 = jnp.pad(s1, (0, CmidP - Cmid)).reshape(1, CmidP).astype(jnp.float32)
    b1 = jnp.pad(b1, (0, CmidP - Cmid)).reshape(1, CmidP).astype(jnp.float32)
    s2 = jnp.pad(s2, (0, CoutP - Cout)).reshape(1, CoutP).astype(jnp.float32)
    b2 = jnp.pad(b2, (0, CoutP - Cout)).reshape(1, CoutP).astype(jnp.float32)

    def const(shape):
        rank = len(shape)
        return pl.BlockSpec(shape, lambda n, s, _r=rank: (0,) * _r)

    halo_blk = S // 4    # xb delivers padded rows [(s+1)*S, (s+1)*S + 4)

    cost = pl.CostEstimate(
        flops=int(2 * N * Hp * Wp * 9 * (Cin * CmidP + CmidP * CoutP)),
        transcendentals=0,
        bytes_accessed=int(xg.size * xg.dtype.itemsize
                           + w1.size * 2 + w2.size * 2
                           + N * Hp * Wp * CoutP * jnp.dtype(out_dtype).itemsize))

    out = pl.pallas_call(
        _down_kernel,
        out_shape=jax.ShapeDtypeStruct((N, Hp, Wp, CoutP), out_dtype),
        grid_spec=pltpu.PrefetchScalarGridSpec(
            num_scalar_prefetch=0,
            grid=(N, n_strips),
            in_specs=[
                # S-row main window (pooled rows [s*S-2, s*S+S-2))
                pl.BlockSpec((1, S, 2, Wp, 2 * Cin),
                             lambda n, s: (n, s, 0, 0, 0)),
                # 4-row halo window (pooled rows [s*S+S-2, s*S+S+2))
                pl.BlockSpec((1, 4, 2, Wp, 2 * Cin),
                             lambda n, s: (n, (s + 1) * halo_blk, 0, 0, 0)),
                const(w1.shape), const(s1.shape), const(b1.shape),
                const(w2.shape), const(s2.shape), const(b2.shape),
            ],
            out_specs=pl.BlockSpec((1, S, Wp, CoutP),
                                   lambda n, s: (n, s, 0, 0)),
            scratch_shapes=[
                pltpu.VMEM((S + 4, Wp + 2, Cin), jnp.bfloat16),     # pad1
                pltpu.VMEM((S + 2, Wp + 2, CmidP), jnp.bfloat16),   # pad2
                pltpu.VMEM((S + 2, Wp, 3 * Cin), jnp.bfloat16),     # col1
                pltpu.VMEM((S, Wp, 3 * CmidP), jnp.bfloat16),       # col2
                pltpu.VMEM(((S + 2) * Wp, max(CmidP, CoutP)),
                           jnp.float32),                            # acc
            ]),
        compiler_params=pltpu.CompilerParams(
            dimension_semantics=("parallel", "parallel"),
            vmem_limit_bytes=48 * 1024 * 1024),
        cost_estimate=cost,
    )(xg, xg, w1, s1, b1, w2, s2, b2)

    return out[..., :Cout]


def down_forward(x_nchw, params, *, eps=1e-5, strip=None):
    """NCHW-in / NCHW-out compatibility wrapper matching the PyTorch module.

    A real UNet should call down_forward_nhwc directly and keep activations in
    NHWC/bf16 between layers: each NCHW<->NHWC transpose here is a full HBM
    round trip comparable to the kernel's own traffic.
    """
    x = jnp.transpose(x_nchw, (0, 2, 3, 1))
    y = down_forward_nhwc(x, params, eps=eps, strip=strip)
    return jnp.transpose(y, (0, 3, 1, 2)).astype(jnp.float32)


def down_reference(x_nchw, params, *, eps=1e-5, mxu_dtype=jnp.float32):
    """Pure-JAX reference. mxu_dtype=bf16 emulates the kernel's MXU casts."""
    x = jnp.transpose(x_nchw, (0, 2, 3, 1)).astype(jnp.float32)
    x = jax.lax.reduce_window(x, -jnp.inf, jax.lax.max,
                              (1, 2, 2, 1), (1, 2, 2, 1), "VALID")

    def conv_bn_relu(x, w_oihw, b, g, beta, mean, var):
        w = jnp.transpose(w_oihw, (2, 3, 1, 0))
        y = jax.lax.conv_general_dilated(
            x.astype(mxu_dtype), w.astype(mxu_dtype), (1, 1), "SAME",
            dimension_numbers=("NHWC", "HWIO", "NHWC"),
            preferred_element_type=jnp.float32) + b
        y = (y - mean) / jnp.sqrt(var + eps) * g + beta
        return jnp.maximum(y, 0.0)

    x = conv_bn_relu(x, params["conv1_w"], params["conv1_b"],
                     params["bn1_gamma"], params["bn1_beta"],
                     params["bn1_mean"], params["bn1_var"])
    x = conv_bn_relu(x, params["conv2_w"], params["conv2_b"],
                     params["bn2_gamma"], params["bn2_beta"],
                     params["bn2_mean"], params["bn2_var"])
    return jnp.transpose(x, (0, 3, 1, 2))


if __name__ == "__main__":
    # Down(in_channels=4, out_channels=8); x: (N=2, C=4, H=16, W=16) NCHW.
    N, Cin, H, W = 2, 4, 16, 16
    Cout = 8                      # DoubleConv: mid_channels == out_channels
    keys = jax.random.split(jax.random.PRNGKey(0), 16)

    x = jax.random.normal(keys[0], (N, Cin, H, W), jnp.float32)
    params = {
        "conv1_w":  0.1 * jax.random.normal(keys[1], (Cout, Cin, 3, 3), jnp.float32),
        "conv1_b":  0.1 * jax.random.normal(keys[2], (Cout,), jnp.float32),
        "bn1_gamma": 1.0 + 0.1 * jax.random.normal(keys[3], (Cout,), jnp.float32),
        "bn1_beta": 0.1 * jax.random.normal(keys[4], (Cout,), jnp.float32),
        "bn1_mean": 0.1 * jax.random.normal(keys[5], (Cout,), jnp.float32),
        "bn1_var":  0.5 + jax.random.uniform(keys[6], (Cout,), jnp.float32),
        "conv2_w":  0.1 * jax.random.normal(keys[7], (Cout, Cout, 3, 3), jnp.float32),
        "conv2_b":  0.1 * jax.random.normal(keys[8], (Cout,), jnp.float32),
        "bn2_gamma": 1.0 + 0.1 * jax.random.normal(keys[9], (Cout,), jnp.float32),
        "bn2_beta": 0.1 * jax.random.normal(keys[10], (Cout,), jnp.float32),
        "bn2_mean": 0.1 * jax.random.normal(keys[11], (Cout,), jnp.float32),
        "bn2_var":  0.5 + jax.random.uniform(keys[12], (Cout,), jnp.float32),
    }

    # Multi-strip path (Hp = 8, strip = 4 -> 2 strips, exercises the halo and
    # the first/last-strip boundary zeroing).
    out = jax.block_until_ready(down_forward(x, params, strip=4))
    assert out.shape == (N, Cout, H // 2, W // 2), out.shape

    # Single-strip path (default strip == Hp here) must agree with it.
    out1 = jax.block_until_ready(down_forward(x, params))
    assert float(jnp.max(jnp.abs(out - out1))) < 1e-5

    # Tight check vs. a reference using the same bf16 MXU-input rounding
    # (remaining delta: accumulation order + bf16 output rounding).
    ref_b = jax.block_until_ready(
        down_reference(x, params, mxu_dtype=jnp.bfloat16))
    assert float(jnp.max(jnp.abs(out - ref_b))) < 3e-2

    # Loose check vs. the pure-f32 reference (bf16 inputs/weights/output).
    ref_f32 = jax.block_until_ready(down_reference(x, params))
    assert float(jnp.max(jnp.abs(out - ref_f32))) < 1e-1

    print("KERNEL_OK")
</pallas_src>

<mosaic_0001>
module attributes {stable_mosaic.version = 11 : i64} {
  func.func @_down_kernel(%arg0: i32, %arg1: i32, %arg2: memref<1x4x2x8x8xbf16, #tpu.memory_space<vmem>>, %arg3: memref<1x4x2x8x8xbf16, #tpu.memory_space<vmem>>, %arg4: memref<3x12x128xbf16, #tpu.memory_space<vmem>>, %arg5: memref<1x128xf32, #tpu.memory_space<vmem>>, %arg6: memref<1x128xf32, #tpu.memory_space<vmem>>, %arg7: memref<3x384x128xbf16, #tpu.memory_space<vmem>>, %arg8: memref<1x128xf32, #tpu.memory_space<vmem>>, %arg9: memref<1x128xf32, #tpu.memory_space<vmem>>, %arg10: memref<1x4x8x128xbf16, #tpu.memory_space<vmem>>, %arg11: memref<8x10x4xbf16, #tpu.memory_space<vmem>>, %arg12: memref<6x10x128xbf16, #tpu.memory_space<vmem>>, %arg13: memref<6x8x12xbf16, #tpu.memory_space<vmem>>, %arg14: memref<4x8x384xbf16, #tpu.memory_space<vmem>>, %arg15: memref<48x128xf32, #tpu.memory_space<vmem>>) attributes {dimension_semantics = [#tpu.dimension_semantics<parallel>, #tpu.dimension_semantics<parallel>], iteration_bounds = array<i64: 2, 2>, scalar_prefetch = 0 : i64, scratch_operands = 5 : i64, tpu.core_type = #tpu.core_type<tc>, window_params = [{transform_indices = @transform_0, window_bounds = array<i64: 1, 4, 2, 8, 8>}, {transform_indices = @transform_1, window_bounds = array<i64: 1, 4, 2, 8, 8>}, {pipeline_mode = #tpu.pipeline_mode<synchronous>, transform_indices = @transform_2, window_bounds = array<i64: 3, 12, 128>}, {pipeline_mode = #tpu.pipeline_mode<synchronous>, transform_indices = @transform_3, window_bounds = array<i64: 1, 128>}, {pipeline_mode = #tpu.pipeline_mode<synchronous>, transform_indices = @transform_4, window_bounds = array<i64: 1, 128>}, {pipeline_mode = #tpu.pipeline_mode<synchronous>, transform_indices = @transform_5, window_bounds = array<i64: 3, 384, 128>}, {pipeline_mode = #tpu.pipeline_mode<synchronous>, transform_indices = @transform_6, window_bounds = array<i64: 1, 128>}, {pipeline_mode = #tpu.pipeline_mode<synchronous>, transform_indices = @transform_7, window_bounds = array<i64: 1, 128>}, {transform_indices = @transform_8, window_bounds = array<i64: 1, 4, 8, 128>}]} {
    %cst = arith.constant 0.000000e+00 : bf16
    %0 = vector.broadcast %cst : bf16 to vector<8x1x4xbf16>
    %c0 = arith.constant 0 : index
    %c0_0 = arith.constant 0 : index
    %c0_1 = arith.constant 0 : index
    %1 = vector.load %arg11[%c0, %c0_0, %c0_1] : memref<8x10x4xbf16, #tpu.memory_space<vmem>>, vector<8x1x4xbf16>
    tpu.vector_store %arg11[%c0, %c0_0, %c0_1], %0 {strides = array<i32>} : memref<8x10x4xbf16, #tpu.memory_space<vmem>>, vector<8x1x4xbf16>,
    %c0_2 = arith.constant 0 : index
    %c9 = arith.constant 9 : index
    %c0_3 = arith.constant 0 : index
    %2 = vector.load %arg11[%c0_2, %c9, %c0_3] : memref<8x10x4xbf16, #tpu.memory_space<vmem>>, vector<8x1x4xbf16>
    tpu.vector_store %arg11[%c0_2, %c9, %c0_3], %0 {strides = array<i32>} : memref<8x10x4xbf16, #tpu.memory_space<vmem>>, vector<8x1x4xbf16>,
    %c0_4 = arith.constant 0 : index
    %c0_5 = arith.constant 0 : index
    %c0_6 = arith.constant 0 : index
    %c0_7 = arith.constant 0 : index
    %c0_8 = arith.constant 0 : index
    %3 = vector.load %arg2[%c0_4, %c0_5, %c0_6, %c0_7, %c0_8] : memref<1x4x2x8x8xbf16, #tpu.memory_space<vmem>>, vector<1x4x2x8x8xbf16>
    %4 = vector.shape_cast %3 : vector<1x4x2x8x8xbf16> to vector<4x2x8x8xbf16>
    %5 = vector.extract_strided_slice %4 {offsets = [0, 0, 0, 0], sizes = [4, 1, 8, 8], strides = [1, 1, 1, 1]} : vector<4x2x8x8xbf16> to vector<4x1x8x8xbf16>
    %6 = vector.shape_cast %5 : vector<4x1x8x8xbf16> to vector<4x8x8xbf16>
    %7 = vector.extract_strided_slice %4 {offsets = [0, 1, 0, 0], sizes = [4, 1, 8, 8], strides = [1, 1, 1, 1]} : vector<4x2x8x8xbf16> to vector<4x1x8x8xbf16>
    %8 = vector.shape_cast %7 : vector<4x1x8x8xbf16> to vector<4x8x8xbf16>
    %9 = arith.maximumf %6, %8 : vector<4x8x8xbf16>
    %10 = vector.extract_strided_slice %9 {offsets = [0, 0, 0], sizes = [4, 8, 4], strides = [1, 1, 1]} : vector<4x8x8xbf16> to vector<4x8x4xbf16>
    %11 = vector.extract_strided_slice %9 {offsets = [0, 0, 4], sizes = [4, 8, 4], strides = [1, 1, 1]} : vector<4x8x8xbf16> to vector<4x8x4xbf16>
    %12 = arith.maximumf %10, %11 : vector<4x8x4xbf16>
    %c0_9 = arith.constant 0 : index
    %c1 = arith.constant 1 : index
    %c0_10 = arith.constant 0 : index
    %13 = vector.load %arg11[%c0_9, %c1, %c0_10] : memref<8x10x4xbf16, #tpu.memory_space<vmem>>, vector<4x8x4xbf16>
    tpu.vector_store %arg11[%c0_9, %c1, %c0_10], %12 {strides = array<i32>} : memref<8x10x4xbf16, #tpu.memory_space<vmem>>, vector<4x8x4xbf16>,
    %c0_11 = arith.constant 0 : index
    %c0_12 = arith.constant 0 : index
    %c0_13 = arith.constant 0 : index
    %c0_14 = arith.constant 0 : index
    %c0_15 = arith.constant 0 : index
    %14 = vector.load %arg3[%c0_11, %c0_12, %c0_13, %c0_14, %c0_15] : memref<1x4x2x8x8xbf16, #tpu.memory_space<vmem>>, vector<1x4x2x8x8xbf16>
    %15 = vector.shape_cast %14 : vector<1x4x2x8x8xbf16> to vector<4x2x8x8xbf16>
    %16 = vector.extract_strided_slice %15 {offsets = [0, 0, 0, 0], sizes = [4, 1, 8, 8], strides = [1, 1, 1, 1]} : vector<4x2x8x8xbf16> to vector<4x1x8x8xbf16>
    %17 = vector.shape_cast %16 : vector<4x1x8x8xbf16> to vector<4x8x8xbf16>
    %18 = vector.extract_strided_slice %15 {offsets = [0, 1, 0, 0], sizes = [4, 1, 8, 8], strides = [1, 1, 1, 1]} : vector<4x2x8x8xbf16> to vector<4x1x8x8xbf16>
    %19 = vector.shape_cast %18 : vector<4x1x8x8xbf16> to vector<4x8x8xbf16>
    %20 = arith.maximumf %17, %19 : vector<4x8x8xbf16>
    %21 = vector.extract_strided_slice %20 {offsets = [0, 0, 0], sizes = [4, 8, 4], strides = [1, 1, 1]} : vector<4x8x8xbf16> to vector<4x8x4xbf16>
    %22 = vector.extract_strided_slice %20 {offsets = [0, 0, 4], sizes = [4, 8, 4], strides = [1, 1, 1]} : vector<4x8x8xbf16> to vector<4x8x4xbf16>
    %23 = arith.maximumf %21, %22 : vector<4x8x4xbf16>
    %c4 = arith.constant 4 : index
    %c1_16 = arith.constant 1 : index
    %c0_17 = arith.constant 0 : index
    %24 = vector.load %arg11[%c4, %c1_16, %c0_17] : memref<8x10x4xbf16, #tpu.memory_space<vmem>>, vector<4x8x4xbf16>
    tpu.vector_store %arg11[%c4, %c1_16, %c0_17], %23 {strides = array<i32>} : memref<8x10x4xbf16, #tpu.memory_space<vmem>>, vector<4x8x4xbf16>,
    %c0_18 = arith.constant 0 : index
    %c0_19 = arith.constant 0 : index
    %c0_20 = arith.constant 0 : index
    %25 = vector.load %arg11[%c0_18, %c0_19, %c0_20] : memref<8x10x4xbf16, #tpu.memory_space<vmem>>, vector<6x8x4xbf16>
    %c0_21 = arith.constant 0 : index
    %c0_22 = arith.constant 0 : index
    %c0_23 = arith.constant 0 : index
    %26 = vector.load %arg13[%c0_21, %c0_22, %c0_23] : memref<6x8x12xbf16, #tpu.memory_space<vmem>>, vector<6x8x4xbf16>
    tpu.vector_store %arg13[%c0_21, %c0_22, %c0_23], %25 {strides = array<i32>} : memref<6x8x12xbf16, #tpu.memory_space<vmem>>, vector<6x8x4xbf16>,
    %c0_24 = arith.constant 0 : index
    %c1_25 = arith.constant 1 : index
    %c0_26 = arith.constant 0 : index
    %27 = vector.load %arg11[%c0_24, %c1_25, %c0_26] : memref<8x10x4xbf16, #tpu.memory_space<vmem>>, vector<6x8x4xbf16>
    %c0_27 = arith.constant 0 : index
    %c0_28 = arith.constant 0 : index
    %c4_29 = arith.constant 4 : index
    %28 = vector.load %arg13[%c0_27, %c0_28, %c4_29] : memref<6x8x12xbf16, #tpu.memory_space<vmem>>, vector<6x8x4xbf16>
    tpu.vector_store %arg13[%c0_27, %c0_28, %c4_29], %27 {strides = array<i32>} : memref<6x8x12xbf16, #tpu.memory_space<vmem>>, vector<6x8x4xbf16>,
    %c0_30 = arith.constant 0 : index
    %c2 = arith.constant 2 : index
    %c0_31 = arith.constant 0 : index
    %29 = vector.load %arg11[%c0_30, %c2, %c0_31] : memref<8x10x4xbf16, #tpu.memory_space<vmem>>, vector<6x8x4xbf16>
    %c0_32 = arith.constant 0 : index
    %c0_33 = arith.constant 0 : index
    %c8 = arith.constant 8 : index
    %30 = vector.load %arg13[%c0_32, %c0_33, %c8] : memref<6x8x12xbf16, #tpu.memory_space<vmem>>, vector<6x8x4xbf16>
    tpu.vector_store %arg13[%c0_32, %c0_33, %c8], %29 {strides = array<i32>} : memref<6x8x12xbf16, #tpu.memory_space<vmem>>, vector<6x8x4xbf16>,
    %c0_34 = arith.constant 0 : index
    %c0_35 = arith.constant 0 : index
    %c0_36 = arith.constant 0 : index
    %31 = vector.load %arg13[%c0_34, %c0_35, %c0_36] : memref<6x8x12xbf16, #tpu.memory_space<vmem>>, vector<6x8x12xbf16>
    %32 = vector.shape_cast %31 : vector<6x8x12xbf16> to vector<48x12xbf16>
    %c0_37 = arith.constant 0 : index
    %c0_38 = arith.constant 0 : index
    %c0_39 = arith.constant 0 : index
    %33 = vector.load %arg4[%c0_37, %c0_38, %c0_39] : memref<3x12x128xbf16, #tpu.memory_space<vmem>>, vector<1x12x128xbf16>
    %34 = vector.shape_cast %33 : vector<1x12x128xbf16> to vector<12x128xbf16>
    %cst_40 = arith.constant dense<0.000000e+00> : vector<48x128xf32>
    %35 = tpu.matmul %32, %34, %cst_40 {dimension_numbers = #tpu.dot_dimension_numbers<[1], [0], [0], [1], [0, 0, 1, 1], [], []>} : vector<48x12xbf16>, vector<12x128xbf16>, vector<48x128xf32> -> vector<48x128xf32>
    %c0_41 = arith.constant 0 : index
    %c0_42 = arith.constant 0 : index
    %36 = vector.load %arg15[%c0_41, %c0_42] : memref<48x128xf32, #tpu.memory_space<vmem>>, vector<48x128xf32>
    tpu.vector_store %arg15[%c0_41, %c0_42], %35 {strides = array<i32>} : memref<48x128xf32, #tpu.memory_space<vmem>>, vector<48x128xf32>,
    %c1_43 = arith.constant 1 : index
    %c0_44 = arith.constant 0 : index
    %c0_45 = arith.constant 0 : index
    %37 = vector.load %arg11[%c1_43, %c0_44, %c0_45] : memref<8x10x4xbf16, #tpu.memory_space<vmem>>, vector<6x8x4xbf16>
    %c0_46 = arith.constant 0 : index
    %c0_47 = arith.constant 0 : index
    %c0_48 = arith.constant 0 : index
    %38 = vector.load %arg13[%c0_46, %c0_47, %c0_48] : memref<6x8x12xbf16, #tpu.memory_space<vmem>>, vector<6x8x4xbf16>
    tpu.vector_store %arg13[%c0_46, %c0_47, %c0_48], %37 {strides = array<i32>} : memref<6x8x12xbf16, #tpu.memory_space<vmem>>, vector<6x8x4xbf16>,
    %c1_49 = arith.constant 1 : index
    %c1_50 = arith.constant 1 : index
    %c0_51 = arith.constant 0 : index
    %39 = vector.load %arg11[%c1_49, %c1_50, %c0_51] : memref<8x10x4xbf16, #tpu.memory_space<vmem>>, vector<6x8x4xbf16>
    %c0_52 = arith.constant 0 : index
    %c0_53 = arith.constant 0 : index
    %c4_54 = arith.constant 4 : index
    %40 = vector.load %arg13[%c0_52, %c0_53, %c4_54] : memref<6x8x12xbf16, #tpu.memory_space<vmem>>, vector<6x8x4xbf16>
    tpu.vector_store %arg13[%c0_52, %c0_53, %c4_54], %39 {strides = array<i32>} : memref<6x8x12xbf16, #tpu.memory_space<vmem>>, vector<6x8x4xbf16>,
    %c1_55 = arith.constant 1 : index
    %c2_56 = arith.constant 2 : index
    %c0_57 = arith.constant 0 : index
    %41 = vector.load %arg11[%c1_55, %c2_56, %c0_57] : memref<8x10x4xbf16, #tpu.memory_space<vmem>>, vector<6x8x4xbf16>
    %c0_58 = arith.constant 0 : index
    %c0_59 = arith.constant 0 : index
    %c8_60 = arith.constant 8 : index
    %42 = vector.load %arg13[%c0_58, %c0_59, %c8_60] : memref<6x8x12xbf16, #tpu.memory_space<vmem>>, vector<6x8x4xbf16>
    tpu.vector_store %arg13[%c0_58, %c0_59, %c8_60], %41 {strides = array<i32>} : memref<6x8x12xbf16, #tpu.memory_space<vmem>>, vector<6x8x4xbf16>,
    %c0_61 = arith.constant 0 : index
    %c0_62 = arith.constant 0 : index
    %c0_63 = arith.constant 0 : index
    %43 = vector.load %arg13[%c0_61, %c0_62, %c0_63] : memref<6x8x12xbf16, #tpu.memory_space<vmem>>, vector<6x8x12xbf16>
    %44 = vector.shape_cast %43 : vector<6x8x12xbf16> to vector<48x12xbf16>
    %c1_64 = arith.constant 1 : index
    %c0_65 = arith.constant 0 : index
    %c0_66 = arith.constant 0 : index
    %45 = vector.load %arg4[%c1_64, %c0_65, %c0_66] : memref<3x12x128xbf16, #tpu.memory_space<vmem>>, vector<1x12x128xbf16>
    %46 = vector.shape_cast %45 : vector<1x12x128xbf16> to vector<12x128xbf16>
    %cst_67 = arith.constant dense<0.000000e+00> : vector<48x128xf32>
    %47 = tpu.matmul %44, %46, %cst_67 {dimension_numbers = #tpu.dot_dimension_numbers<[1], [0], [0], [1], [0, 0, 1, 1], [], []>} : vector<48x12xbf16>, vector<12x128xbf16>, vector<48x128xf32> -> vector<48x128xf32>
    %c0_68 = arith.constant 0 : index
    %c0_69 = arith.constant 0 : index
    %48 = vector.load %arg15[%c0_68, %c0_69] : memref<48x128xf32, #tpu.memory_space<vmem>>, vector<48x128xf32>
    %49 = arith.addf %48, %47 : vector<48x128xf32>
    %c0_70 = arith.constant 0 : index
    %c0_71 = arith.constant 0 : index
    %50 = vector.load %arg15[%c0_70, %c0_71] : memref<48x128xf32, #tpu.memory_space<vmem>>, vector<48x128xf32>
    tpu.vector_store %arg15[%c0_70, %c0_71], %49 {strides = array<i32>} : memref<48x128xf32, #tpu.memory_space<vmem>>, vector<48x128xf32>,
    %c2_72 = arith.constant 2 : index
    %c0_73 = arith.constant 0 : index
    %c0_74 = arith.constant 0 : index
    %51 = vector.load %arg11[%c2_72, %c0_73, %c0_74] : memref<8x10x4xbf16, #tpu.memory_space<vmem>>, vector<6x8x4xbf16>
    %c0_75 = arith.constant 0 : index
    %c0_76 = arith.constant 0 : index
    %c0_77 = arith.constant 0 : index
    %52 = vector.load %arg13[%c0_75, %c0_76, %c0_77] : memref<6x8x12xbf16, #tpu.memory_space<vmem>>, vector<6x8x4xbf16>
    tpu.vector_store %arg13[%c0_75, %c0_76, %c0_77], %51 {strides = array<i32>} : memref<6x8x12xbf16, #tpu.memory_space<vmem>>, vector<6x8x4xbf16>,
    %c2_78 = arith.constant 2 : index
    %c1_79 = arith.constant 1 : index
    %c0_80 = arith.constant 0 : index
    %53 = vector.load %arg11[%c2_78, %c1_79, %c0_80] : memref<8x10x4xbf16, #tpu.memory_space<vmem>>, vector<6x8x4xbf16>
    %c0_81 = arith.constant 0 : index
    %c0_82 = arith.constant 0 : index
    %c4_83 = arith.constant 4 : index
    %54 = vector.load %arg13[%c0_81, %c0_82, %c4_83] : memref<6x8x12xbf16, #tpu.memory_space<vmem>>, vector<6x8x4xbf16>
    tpu.vector_store %arg13[%c0_81, %c0_82, %c4_83], %53 {strides = array<i32>} : memref<6x8x12xbf16, #tpu.memory_space<vmem>>, vector<6x8x4xbf16>,
    %c2_84 = arith.constant 2 : index
    %c2_85 = arith.constant 2 : index
    %c0_86 = arith.constant 0 : index
    %55 = vector.load %arg11[%c2_84, %c2_85, %c0_86] : memref<8x10x4xbf16, #tpu.memory_space<vmem>>, vector<6x8x4xbf16>
    %c0_87 = arith.constant 0 : index
    %c0_88 = arith.constant 0 : index
    %c8_89 = arith.constant 8 : index
    %56 = vector.load %arg13[%c0_87, %c0_88, %c8_89] : memref<6x8x12xbf16, #tpu.memory_space<vmem>>, vector<6x8x4xbf16>
    tpu.vector_store %arg13[%c0_87, %c0_88, %c8_89], %55 {strides = array<i32>} : memref<6x8x12xbf16, #tpu.memory_space<vmem>>, vector<6x8x4xbf16>,
    %c0_90 = arith.constant 0 : index
    %c0_91 = arith.constant 0 : index
    %c0_92 = arith.constant 0 : index
    %57 = vector.load %arg13[%c0_90, %c0_91, %c0_92] : memref<6x8x12xbf16, #tpu.memory_space<vmem>>, vector<6x8x12xbf16>
    %58 = vector.shape_cast %57 : vector<6x8x12xbf16> to vector<48x12xbf16>
    %c2_93 = arith.constant 2 : index
    %c0_94 = arith.constant 0 : index
    %c0_95 = arith.constant 0 : index
    %59 = vector.load %arg4[%c2_93, %c0_94, %c0_95] : memref<3x12x128xbf16, #tpu.memory_space<vmem>>, vector<1x12x128xbf16>
    %60 = vector.shape_cast %59 : vector<1x12x128xbf16> to vector<12x128xbf16>
    %cst_96 = arith.constant dense<0.000000e+00> : vector<48x128xf32>
    %61 = tpu.matmul %58, %60, %cst_96 {dimension_numbers = #tpu.dot_dimension_numbers<[1], [0], [0], [1], [0, 0, 1, 1], [], []>} : vector<48x12xbf16>, vector<12x128xbf16>, vector<48x128xf32> -> vector<48x128xf32>
    %c0_97 = arith.constant 0 : index
    %c0_98 = arith.constant 0 : index
    %62 = vector.load %arg15[%c0_97, %c0_98] : memref<48x128xf32, #tpu.memory_space<vmem>>, vector<48x128xf32>
    %63 = arith.addf %62, %61 : vector<48x128xf32>
    %c0_99 = arith.constant 0 : index
    %c0_100 = arith.constant 0 : index
    %64 = vector.load %arg15[%c0_99, %c0_100] : memref<48x128xf32, #tpu.memory_space<vmem>>, vector<48x128xf32>
    tpu.vector_store %arg15[%c0_99, %c0_100], %63 {strides = array<i32>} : memref<48x128xf32, #tpu.memory_space<vmem>>, vector<48x128xf32>,
    %c0_101 = arith.constant 0 : index
    %c0_102 = arith.constant 0 : index
    %65 = vector.load %arg15[%c0_101, %c0_102] : memref<48x128xf32, #tpu.memory_space<vmem>>, vector<48x128xf32>
    %c0_103 = arith.constant 0 : index
    %c0_104 = arith.constant 0 : index
    %66 = vector.load %arg5[%c0_103, %c0_104] : memref<1x128xf32, #tpu.memory_space<vmem>>, vector<1x128xf32>
    %67 = vector.broadcast %66 : vector<1x128xf32> to vector<48x128xf32>
    %68 = arith.mulf %65, %67 : vector<48x128xf32>
    %c0_105 = arith.constant 0 : index
    %c0_106 = arith.constant 0 : index
    %69 = vector.load %arg6[%c0_105, %c0_106] : memref<1x128xf32, #tpu.memory_space<vmem>>, vector<1x128xf32>
    %70 = vector.broadcast %69 : vector<1x128xf32> to vector<48x128xf32>
    %71 = arith.addf %68, %70 : vector<48x128xf32>
    %cst_107 = arith.constant 0.000000e+00 : f32
    %72 = vector.broadcast %cst_107 : f32 to vector<48x128xf32>
    %73 = arith.maximumf %71, %72 : vector<48x128xf32>
    %cst_108 = arith.constant 0.000000e+00 : bf16
    %74 = vector.broadcast %cst_108 : bf16 to vector<6x1x128xbf16>
    %c0_109 = arith.constant 0 : index
    %c0_110 = arith.constant 0 : index
    %c0_111 = arith.constant 0 : index
    %75 = vector.load %arg12[%c0_109, %c0_110, %c0_111] : memref<6x10x128xbf16, #tpu.memory_space<vmem>>, vector<6x1x128xbf16>
    tpu.vector_store %arg12[%c0_109, %c0_110, %c0_111], %74 {strides = array<i32>} : memref<6x10x128xbf16, #tpu.memory_space<vmem>>, vector<6x1x128xbf16>,
    %c0_112 = arith.constant 0 : index
    %c9_113 = arith.constant 9 : index
    %c0_114 = arith.constant 0 : index
    %76 = vector.load %arg12[%c0_112, %c9_113, %c0_114] : memref<6x10x128xbf16, #tpu.memory_space<vmem>>, vector<6x1x128xbf16>
    tpu.vector_store %arg12[%c0_112, %c9_113, %c0_114], %74 {strides = array<i32>} : memref<6x10x128xbf16, #tpu.memory_space<vmem>>, vector<6x1x128xbf16>,
    %77 = arith.truncf %73 : vector<48x128xf32> to vector<48x128xbf16>
    %78 = vector.shape_cast %77 : vector<48x128xbf16> to vector<6x8x128xbf16>
    %c0_115 = arith.constant 0 : index
    %c1_116 = arith.constant 1 : index
    %c0_117 = arith.constant 0 : index
    %79 = vector.load %arg12[%c0_115, %c1_116, %c0_117] : memref<6x10x128xbf16, #tpu.memory_space<vmem>>, vector<6x8x128xbf16>
    tpu.vector_store %arg12[%c0_115, %c1_116, %c0_117], %78 {strides = array<i32>} : memref<6x10x128xbf16, #tpu.memory_space<vmem>>, vector<6x8x128xbf16>,
    %c0_i32 = arith.constant 0 : i32
    %80 = arith.cmpi eq, %arg1, %c0_i32 : i32
    %81 = arith.extui %80 : i1 to i32
    %c0_i32_118 = arith.constant 0 : i32
    %82 = arith.cmpi ne, %81, %c0_i32_118 : i32
    scf.if %82 {
      %cst_214 = arith.constant 0.000000e+00 : bf16
      %140 = vector.broadcast %cst_214 : bf16 to vector<1x10x128xbf16>
      %c0_215 = arith.constant 0 : index
      %c0_216 = arith.constant 0 : index
      %c0_217 = arith.constant 0 : index
      %141 = vector.load %arg12[%c0_215, %c0_216, %c0_217] : memref<6x10x128xbf16, #tpu.memory_space<vmem>>, vector<1x10x128xbf16>
      tpu.vector_store %arg12[%c0_215, %c0_216, %c0_217], %140 {strides = array<i32>} : memref<6x10x128xbf16, #tpu.memory_space<vmem>>, vector<1x10x128xbf16>,
    } else {
    }
    %c1_i32 = arith.constant 1 : i32
    %83 = arith.cmpi eq, %arg1, %c1_i32 : i32
    %84 = arith.extui %83 : i1 to i32
    %c0_i32_119 = arith.constant 0 : i32
    %85 = arith.cmpi ne, %84, %c0_i32_119 : i32
    scf.if %85 {
      %cst_214 = arith.constant 0.000000e+00 : bf16
      %140 = vector.broadcast %cst_214 : bf16 to vector<1x10x128xbf16>
      %c5 = arith.constant 5 : index
      %c0_215 = arith.constant 0 : index
      %c0_216 = arith.constant 0 : index
      %141 = vector.load %arg12[%c5, %c0_215, %c0_216] : memref<6x10x128xbf16, #tpu.memory_space<vmem>>, vector<1x10x128xbf16>
      tpu.vector_store %arg12[%c5, %c0_215, %c0_216], %140 {strides = array<i32>} : memref<6x10x128xbf16, #tpu.memory_space<vmem>>, vector<1x10x128xbf16>,
    } else {
    }
    %c0_120 = arith.constant 0 : index
    %c0_121 = arith.constant 0 : index
    %c0_122 = arith.constant 0 : index
    %86 = vector.load %arg12[%c0_120, %c0_121, %c0_122] : memref<6x10x128xbf16, #tpu.memory_space<vmem>>, vector<4x8x128xbf16>
    %c0_123 = arith.constant 0 : index
    %c0_124 = arith.constant 0 : index
    %c0_125 = arith.constant 0 : index
    %87 = vector.load %arg14[%c0_123, %c0_124, %c0_125] : memref<4x8x384xbf16, #tpu.memory_space<vmem>>, vector<4x8x128xbf16>
    tpu.vector_store %arg14[%c0_123, %c0_124, %c0_125], %86 {strides = array<i32>} : memref<4x8x384xbf16, #tpu.memory_space<vmem>>, vector<4x8x128xbf16>,
    %c0_126 = arith.constant 0 : index
    %c1_127 = arith.constant 1 : index
    %c0_128 = arith.constant 0 : index
    %88 = vector.load %arg12[%c0_126, %c1_127, %c0_128] : memref<6x10x128xbf16, #tpu.memory_space<vmem>>, vector<4x8x128xbf16>
    %c0_129 = arith.constant 0 : index
    %c0_130 = arith.constant 0 : index
    %c128 = arith.constant 128 : index
    %89 = vector.load %arg14[%c0_129, %c0_130, %c128] : memref<4x8x384xbf16, #tpu.memory_space<vmem>>, vector<4x8x128xbf16>
    tpu.vector_store %arg14[%c0_129, %c0_130, %c128], %88 {strides = array<i32>} : memref<4x8x384xbf16, #tpu.memory_space<vmem>>, vector<4x8x128xbf16>,
    %c0_131 = arith.constant 0 : index
    %c2_132 = arith.constant 2 : index
    %c0_133 = arith.constant 0 : index
    %90 = vector.load %arg12[%c0_131, %c2_132, %c0_133] : memref<6x10x128xbf16, #tpu.memory_space<vmem>>, vector<4x8x128xbf16>
    %c0_134 = arith.constant 0 : index
    %c0_135 = arith.constant 0 : index
    %c256 = arith.constant 256 : index
    %91 = vector.load %arg14[%c0_134, %c0_135, %c256] : memref<4x8x384xbf16, #tpu.memory_space<vmem>>, vector<4x8x128xbf16>
    tpu.vector_store %arg14[%c0_134, %c0_135, %c256], %90 {strides = array<i32>} : memref<4x8x384xbf16, #tpu.memory_space<vmem>>, vector<4x8x128xbf16>,
    %c0_136 = arith.constant 0 : index
    %c0_137 = arith.constant 0 : index
    %c0_138 = arith.constant 0 : index
    %92 = vector.load %arg14[%c0_136, %c0_137, %c0_138] : memref<4x8x384xbf16, #tpu.memory_space<vmem>>, vector<4x8x384xbf16>
    %93 = vector.shape_cast %92 : vector<4x8x384xbf16> to vector<32x384xbf16>
    %c0_139 = arith.constant 0 : index
    %c0_140 = arith.constant 0 : index
    %c0_141 = arith.constant 0 : index
    %94 = vector.load %arg7[%c0_139, %c0_140, %c0_141] : memref<3x384x128xbf16, #tpu.memory_space<vmem>>, vector<1x384x128xbf16>
    %95 = vector.shape_cast %94 : vector<1x384x128xbf16> to vector<384x128xbf16>
    %cst_142 = arith.constant dense<0.000000e+00> : vector<32x128xf32>
    %96 = tpu.matmul %93, %95, %cst_142 {dimension_numbers = #tpu.dot_dimension_numbers<[1], [0], [0], [1], [0, 0, 1, 1], [], []>} : vector<32x384xbf16>, vector<384x128xbf16>, vector<32x128xf32> -> vector<32x128xf32>
    %c0_143 = arith.constant 0 : index
    %c0_144 = arith.constant 0 : index
    %97 = vector.load %arg15[%c0_143, %c0_144] : memref<48x128xf32, #tpu.memory_space<vmem>>, vector<32x128xf32>
    tpu.vector_store %arg15[%c0_143, %c0_144], %96 {strides = array<i32>} : memref<48x128xf32, #tpu.memory_space<vmem>>, vector<32x128xf32>,
    %c1_145 = arith.constant 1 : index
    %c0_146 = arith.constant 0 : index
    %c0_147 = arith.constant 0 : index
    %98 = vector.load %arg12[%c1_145, %c0_146, %c0_147] : memref<6x10x128xbf16, #tpu.memory_space<vmem>>, vector<4x8x128xbf16>
    %c0_148 = arith.constant 0 : index
    %c0_149 = arith.constant 0 : index
    %c0_150 = arith.constant 0 : index
    %99 = vector.load %arg14[%c0_148, %c0_149, %c0_150] : memref<4x8x384xbf16, #tpu.memory_space<vmem>>, vector<4x8x128xbf16>
    tpu.vector_store %arg14[%c0_148, %c0_149, %c0_150], %98 {strides = array<i32>} : memref<4x8x384xbf16, #tpu.memory_space<vmem>>, vector<4x8x128xbf16>,
    %c1_151 = arith.constant 1 : index
    %c1_152 = arith.constant 1 : index
    %c0_153 = arith.constant 0 : index
    %100 = vector.load %arg12[%c1_151, %c1_152, %c0_153] : memref<6x10x128xbf16, #tpu.memory_space<vmem>>, vector<4x8x128xbf16>
    %c0_154 = arith.constant 0 : index
    %c0_155 = arith.constant 0 : index
    %c128_156 = arith.constant 128 : index
    %101 = vector.load %arg14[%c0_154, %c0_155, %c128_156] : memref<4x8x384xbf16, #tpu.memory_space<vmem>>, vector<4x8x128xbf16>
    tpu.vector_store %arg14[%c0_154, %c0_155, %c128_156], %100 {strides = array<i32>} : memref<4x8x384xbf16, #tpu.memory_space<vmem>>, vector<4x8x128xbf16>,
    %c1_157 = arith.constant 1 : index
    %c2_158 = arith.constant 2 : index
    %c0_159 = arith.constant 0 : index
    %102 = vector.load %arg12[%c1_157, %c2_158, %c0_159] : memref<6x10x128xbf16, #tpu.memory_space<vmem>>, vector<4x8x128xbf16>
    %c0_160 = arith.constant 0 : index
    %c0_161 = arith.constant 0 : index
    %c256_162 = arith.constant 256 : index
    %103 = vector.load %arg14[%c0_160, %c0_161, %c256_162] : memref<4x8x384xbf16, #tpu.memory_space<vmem>>, vector<4x8x128xbf16>
    tpu.vector_store %arg14[%c0_160, %c0_161, %c256_162], %102 {strides = array<i32>} : memref<4x8x384xbf16, #tpu.memory_space<vmem>>, vector<4x8x128xbf16>,
    %c0_163 = arith.constant 0 : index
    %c0_164 = arith.constant 0 : index
    %c0_165 = arith.constant 0 : index
    %104 = vector.load %arg14[%c0_163, %c0_164, %c0_165] : memref<4x8x384xbf16, #tpu.memory_space<vmem>>, vector<4x8x384xbf16>
    %105 = vector.shape_cast %104 : vector<4x8x384xbf16> to vector<32x384xbf16>
    %c1_166 = arith.constant 1 : index
    %c0_167 = arith.constant 0 : index
    %c0_168 = arith.constant 0 : index
    %106 = vector.load %arg7[%c1_166, %c0_167, %c0_168] : memref<3x384x128xbf16, #tpu.memory_space<vmem>>, vector<1x384x128xbf16>
    %107 = vector.shape_cast %106 : vector<1x384x128xbf16> to vector<384x128xbf16>
    %cst_169 = arith.constant dense<0.000000e+00> : vector<32x128xf32>
    %108 = tpu.matmul %105, %107, %cst_169 {dimension_numbers = #tpu.dot_dimension_numbers<[1], [0], [0], [1], [0, 0, 1, 1], [], []>} : vector<32x384xbf16>, vector<384x128xbf16>, vector<32x128xf32> -> vector<32x128xf32>
    %c0_170 = arith.constant 0 : index
    %c0_171 = arith.constant 0 : index
    %109 = vector.load %arg15[%c0_170, %c0_171] : memref<48x128xf32, #tpu.memory_space<vmem>>, vector<32x128xf32>
    %110 = arith.addf %109, %108 : vector<32x128xf32>
    %c0_172 = arith.constant 0 : index
    %c0_173 = arith.constant 0 : index
    %111 = vector.load %arg15[%c0_172, %c0_173] : memref<48x128xf32, #tpu.memory_space<vmem>>, vector<32x128xf32>
    tpu.vector_store %arg15[%c0_172, %c0_173], %110 {strides = array<i32>} : memref<48x128xf32, #tpu.memory_space<vmem>>, vector<32x128xf32>,
    %c2_174 = arith.constant 2 : index
    %c0_175 = arith.constant 0 : index
    %c0_176 = arith.constant 0 : index
    %112 = vector.load %arg12[%c2_174, %c0_175, %c0_176] : memref<6x10x128xbf16, #tpu.memory_space<vmem>>, vector<4x8x128xbf16>
    %c0_177 = arith.constant 0 : index
    %c0_178 = arith.constant 0 : index
    %c0_179 = arith.constant 0 : index
    %113 = vector.load %arg14[%c0_177, %c0_178, %c0_179] : memref<4x8x384xbf16, #tpu.memory_space<vmem>>, vector<4x8x128xbf16>
    tpu.vector_store %arg14[%c0_177, %c0_178, %c0_179], %112 {strides = array<i32>} : memref<4x8x384xbf16, #tpu.memory_space<vmem>>, vector<4x8x128xbf16>,
    %c2_180 = arith.constant 2 : index
    %c1_181 = arith.constant 1 : index
    %c0_182 = arith.constant 0 : index
    %114 = vector.load %arg12[%c2_180, %c1_181, %c0_182] : memref<6x10x128xbf16, #tpu.memory_space<vmem>>, vector<4x8x128xbf16>
    %c0_183 = arith.constant 0 : index
    %c0_184 = arith.constant 0 : index
    %c128_185 = arith.constant 128 : index
    %115 = vector.load %arg14[%c0_183, %c0_184, %c128_185] : memref<4x8x384xbf16, #tpu.memory_space<vmem>>, vector<4x8x128xbf16>
    tpu.vector_store %arg14[%c0_183, %c0_184, %c128_185], %114 {strides = array<i32>} : memref<4x8x384xbf16, #tpu.memory_space<vmem>>, vector<4x8x128xbf16>,
    %c2_186 = arith.constant 2 : index
    %c2_187 = arith.constant 2 : index
    %c0_188 = arith.constant 0 : index
    %116 = vector.load %arg12[%c2_186, %c2_187, %c0_188] : memref<6x10x128xbf16, #tpu.memory_space<vmem>>, vector<4x8x128xbf16>
    %c0_189 = arith.constant 0 : index
    %c0_190 = arith.constant 0 : index
    %c256_191 = arith.constant 256 : index
    %117 = vector.load %arg14[%c0_189, %c0_190, %c256_191] : memref<4x8x384xbf16, #tpu.memory_space<vmem>>, vector<4x8x128xbf16>
    tpu.vector_store %arg14[%c0_189, %c0_190, %c256_191], %116 {strides = array<i32>} : memref<4x8x384xbf16, #tpu.memory_space<vmem>>, vector<4x8x128xbf16>,
    %c0_192 = arith.constant 0 : index
    %c0_193 = arith.constant 0 : index
    %c0_194 = arith.constant 0 : index
    %118 = vector.load %arg14[%c0_192, %c0_193, %c0_194] : memref<4x8x384xbf16, #tpu.memory_space<vmem>>, vector<4x8x384xbf16>
    %119 = vector.shape_cast %118 : vector<4x8x384xbf16> to vector<32x384xbf16>
    %c2_195 = arith.constant 2 : index
    %c0_196 = arith.constant 0 : index
    %c0_197 = arith.constant 0 : index
    %120 = vector.load %arg7[%c2_195, %c0_196, %c0_197] : memref<3x384x128xbf16, #tpu.memory_space<vmem>>, vector<1x384x128xbf16>
    %121 = vector.shape_cast %120 : vector<1x384x128xbf16> to vector<384x128xbf16>
    %cst_198 = arith.constant dense<0.000000e+00> : vector<32x128xf32>
    %122 = tpu.matmul %119, %121, %cst_198 {dimension_numbers = #tpu.dot_dimension_numbers<[1], [0], [0], [1], [0, 0, 1, 1], [], []>} : vector<32x384xbf16>, vector<384x128xbf16>, vector<32x128xf32> -> vector<32x128xf32>
    %c0_199 = arith.constant 0 : index
    %c0_200 = arith.constant 0 : index
    %123 = vector.load %arg15[%c0_199, %c0_200] : memref<48x128xf32, #tpu.memory_space<vmem>>, vector<32x128xf32>
    %124 = arith.addf %123, %122 : vector<32x128xf32>
    %c0_201 = arith.constant 0 : index
    %c0_202 = arith.constant 0 : index
    %125 = vector.load %arg15[%c0_201, %c0_202] : memref<48x128xf32, #tpu.memory_space<vmem>>, vector<32x128xf32>
    tpu.vector_store %arg15[%c0_201, %c0_202], %124 {strides = array<i32>} : memref<48x128xf32, #tpu.memory_space<vmem>>, vector<32x128xf32>,
    %c0_203 = arith.constant 0 : index
    %c0_204 = arith.constant 0 : index
    %126 = vector.load %arg15[%c0_203, %c0_204] : memref<48x128xf32, #tpu.memory_space<vmem>>, vector<32x128xf32>
    %c0_205 = arith.constant 0 : index
    %c0_206 = arith.constant 0 : index
    %127 = vector.load %arg8[%c0_205, %c0_206] : memref<1x128xf32, #tpu.memory_space<vmem>>, vector<1x128xf32>
    %128 = vector.broadcast %127 : vector<1x128xf32> to vector<32x128xf32>
    %129 = arith.mulf %126, %128 : vector<32x128xf32>
    %c0_207 = arith.constant 0 : index
    %c0_208 = arith.constant 0 : index
    %130 = vector.load %arg9[%c0_207, %c0_208] : memref<1x128xf32, #tpu.memory_space<vmem>>, vector<1x128xf32>
    %131 = vector.broadcast %130 : vector<1x128xf32> to vector<32x128xf32>
    %132 = arith.addf %129, %131 : vector<32x128xf32>
    %cst_209 = arith.constant 0.000000e+00 : f32
    %133 = vector.broadcast %cst_209 : f32 to vector<32x128xf32>
    %134 = arith.maximumf %132, %133 : vector<32x128xf32>
    %135 = arith.truncf %134 : vector<32x128xf32> to vector<32x128xbf16>
    %136 = vector.shape_cast %135 : vector<32x128xbf16> to vector<4x8x128xbf16>
    %c0_210 = arith.constant 0 : index
    %c0_211 = arith.constant 0 : index
    %c0_212 = arith.constant 0 : index
    %c0_213 = arith.constant 0 : index
    %137 = vector.load %arg10[%c0_210, %c0_211, %c0_212, %c0_213] : memref<1x4x8x128xbf16, #tpu.memory_space<vmem>>, vector<1x4x8x128xbf16>
    %138 = vector.shape_cast %137 : vector<1x4x8x128xbf16> to vector<4x8x128xbf16>
    %139 = vector.shape_cast %136 : vector<4x8x128xbf16> to vector<1x4x8x128xbf16>
    tpu.vector_store %arg10[%c0_210, %c0_211, %c0_212, %c0_213], %139 {strides = array<i32>} : memref<1x4x8x128xbf16, #tpu.memory_space<vmem>>, vector<1x4x8x128xbf16>,
    return
  }
  func.func @transform_0(%arg0: i32, %arg1: i32) -> (i32, i32, i32, i32, i32) {
    %c0_i32 = arith.constant 0 : i32
    %c0_i32_0 = arith.constant 0 : i32
    %c0_i32_1 = arith.constant 0 : i32
    %c0_i32_2 = arith.constant 0 : i32
    return %arg0, %arg1, %c0_i32, %c0_i32_0, %c0_i32_1 : i32, i32, i32, i32, i32
  }
  func.func @transform_1(%arg0: i32, %arg1: i32) -> (i32, i32, i32, i32, i32) {
    %c1_i32 = arith.constant 1 : i32
    %0 = arith.addi %arg1, %c1_i32 : i32
    %c1_i32_0 = arith.constant 1 : i32
    %1 = arith.muli %0, %c1_i32_0 : i32
    %c0_i32 = arith.constant 0 : i32
    %c0_i32_1 = arith.constant 0 : i32
    %c0_i32_2 = arith.constant 0 : i32
    %c0_i32_3 = arith.constant 0 : i32
    return %arg0, %1, %c0_i32, %c0_i32_1, %c0_i32_2 : i32, i32, i32, i32, i32
  }
  func.func @transform_2(%arg0: i32, %arg1: i32) -> (i32, i32, i32) {
    %c0_i32 = arith.constant 0 : i32
    %c0_i32_0 = arith.constant 0 : i32
    %c0_i32_1 = arith.constant 0 : i32
    %c0_i32_2 = arith.constant 0 : i32
    return %c0_i32, %c0_i32_0, %c0_i32_1 : i32, i32, i32
  }
  func.func @transform_3(%arg0: i32, %arg1: i32) -> (i32, i32) {
    %c0_i32 = arith.constant 0 : i32
    %c0_i32_0 = arith.constant 0 : i32
    %c0_i32_1 = arith.constant 0 : i32
    return %c0_i32, %c0_i32_0 : i32, i32
  }
  func.func @transform_4(%arg0: i32, %arg1: i32) -> (i32, i32) {
    %c0_i32 = arith.constant 0 : i32
    %c0_i32_0 = arith.constant 0 : i32
    %c0_i32_1 = arith.constant 0 : i32
    return %c0_i32, %c0_i32_0 : i32, i32
  }
  func.func @transform_5(%arg0: i32, %arg1: i32) -> (i32, i32, i32) {
    %c0_i32 = arith.constant 0 : i32
    %c0_i32_0 = arith.constant 0 : i32
    %c0_i32_1 = arith.constant 0 : i32
    %c0_i32_2 = arith.constant 0 : i32
    return %c0_i32, %c0_i32_0, %c0_i32_1 : i32, i32, i32
  }
  func.func @transform_6(%arg0: i32, %arg1: i32) -> (i32, i32) {
    %c0_i32 = arith.constant 0 : i32
    %c0_i32_0 = arith.constant 0 : i32
    %c0_i32_1 = arith.constant 0 : i32
    return %c0_i32, %c0_i32_0 : i32, i32
  }
  func.func @transform_7(%arg0: i32, %arg1: i32) -> (i32, i32) {
    %c0_i32 = arith.constant 0 : i32
    %c0_i32_0 = arith.constant 0 : i32
    %c0_i32_1 = arith.constant 0 : i32
    return %c0_i32, %c0_i32_0 : i32, i32
  }
  func.func @transform_8(%arg0: i32, %arg1: i32) -> (i32, i32, i32, i32) {
    %c0_i32 = arith.constant 0 : i32
    %c0_i32_0 = arith.constant 0 : i32
    %c0_i32_1 = arith.constant 0 : i32
    return %arg0, %arg1, %c0_i32, %c0_i32_0 : i32, i32, i32, i32
  }
}

</mosaic_0001>

<llo_original>
// kernel: tpu_custom_call.1
$region0: #{tpu_custom_call.1}
  #allocation0 [shape = 'u32[]', space=smem, size = 0x4, offset = 0x4, fixed_abs, tag = 'smem constant byte address 0x4 - core index']
  #allocation1 [shape = 'u32[144,128]{1,0:T(1,128)}', space=vmem, size = 0x12000, scoped, tag = 'internal scratch']
  #allocation2 [shape = 'bf16[8,10,4]{2,1,0:T(8,128)(2,1)}', space=vmem, size = 0x8000, scoped, tag = 'scratch operand']
  #allocation3 [shape = 'bf16[6,10,128]{2,1,0:T(8,128)(2,1)}', space=vmem, size = 0x6000, scoped, tag = 'scratch operand']
  #allocation4 [shape = 'bf16[6,8,12]{2,1,0:T(8,128)(2,1)}', space=vmem, size = 0x3000, scoped, tag = 'scratch operand']
  #allocation5 [shape = 'bf16[4,8,384]{2,1,0:T(8,128)(2,1)}', space=vmem, size = 0x6000, scoped, tag = 'scratch operand']
  #allocation6 [shape = 'f32[48,128]{1,0:T(8,128)}', space=vmem, size = 0x6000, scoped, tag = 'scratch operand']
  %s0 = inlined_call_operand.vmem [shape: bf16[2,12,2,8,8], index: 0, kind: input, shape index: {}]
  %s1 = inlined_call_operand.vmem [shape: bf16[2,12,2,8,8], index: 1, kind: input, shape index: {}]
  %s2 = inlined_call_operand.vmem [shape: bf16[3,12,128], index: 2, kind: input, shape index: {}]
  %s3 = inlined_call_operand.vmem [shape: f32[1,128], index: 3, kind: input, shape index: {}]
  %s4 = inlined_call_operand.vmem [shape: f32[1,128], index: 4, kind: input, shape index: {}]
  %s5 = inlined_call_operand.vmem [shape: bf16[3,384,128], index: 5, kind: input, shape index: {}]
  %s6 = inlined_call_operand.vmem [shape: f32[1,128], index: 6, kind: input, shape index: {}]
  %s7 = inlined_call_operand.vmem [shape: f32[1,128], index: 7, kind: input, shape index: {}]
  %s8 = inlined_call_operand.hbm [shape: bf16[2,8,8,128], index: 8, kind: output, shape index: {}]
  %s9 = sld [smem:[#allocation0]]
  $region73: #{tpu_custom_call.1} parent=0
    _
  %s11 = ssub.s32 1, %s9
  %s12 = scalar_select 0, %s11, %s9
  $region1: #{tpu_custom_call.1} parent=0
    #allocation7 [shape = 'u8[16384]{0}', space=vmem, size = 0x4000, scoped, tag = 'output window, operand 0']
    #allocation8 [shape = 's32[2]{0}', space=sflag, size = 0x8, scoped, tag = 'scoped memory for tpu_custom_call.1']
    %13 = vsyncpa [#allocation8], 0
    %s14 = scalar_lea.sflag [#allocation8], 1
    %15 = vsyncpa %s14, 0
    loop: start=0, step=1, limit=6
    $region2: #{tpu_custom_call.1} parent=1 // loop_pre_header
      _
    $region3: #{tpu_custom_call.1} parent=1 // loop_header
      %s17 = sphi 0, %s21
      %p18 = scmp.ge.s32.totalorder %s17, 6
      %s24 = sphi 0, %s36
      %s25 = sphi 0, %s32
      %s26 = sphi 0, %s24
      %s27 = sphi 0, %s25
      %s28 = sphi 0, %s26
      %s29 = sphi 0, %s27
      %s41 = sphi 0, %s43
      %s44 = sphi 0, %s41
      %s45 = sphi 0, %s44
      %s61 = sphi 0, %s45
      %s71 = sphi 0, %s73
      %s74 = sphi 0, %s71
      %s75 = sphi 0, %s74
      %s91 = sphi 0, %s75
      %s95 = sphi 0, %s95
      %s97 = sphi 0, %s95
      %s98 = sphi 0, %s97
      %s112 = sphi 0, %s98
      %s116 = sphi 0, %s116
      %s118 = sphi 0, %s116
      %s119 = sphi 0, %s118
      %s133 = sphi 0, %s119
      %s137 = sphi 0, %s137
      %s139 = sphi 0, %s137
      %s140 = sphi 0, %s139
      %s154 = sphi 0, %s140
      %s158 = sphi 0, %s158
      %s160 = sphi 0, %s158
      %s161 = sphi 0, %s160
      %s175 = sphi 0, %s161
      %s179 = sphi 0, %s179
      %s181 = sphi 0, %s179
      %s182 = sphi 0, %s181
      %s196 = sphi 0, %s182
      %s200 = sphi 0, %s200
      %s202 = sphi 0, %s200
      %s203 = sphi 0, %s202
      %s217 = sphi 0, %s203
      %s225 = sphi 0, %s227
      %s228 = sphi 0, %s225
      %s229 = sphi 0, %s228
      %s245 = sphi 0, %s229
    $region4: #{tpu_custom_call.1} parent=1 // loop_header_branch
      %20 = sbr.rel (%p18) target = $region8
    $region5: #{tpu_custom_call.1} parent=1 // loop_body
      %s22 = ssub.s32 %s17, 1
      %s23 = ssub.s32 %s17, 2
      %s30 = sadd.s32 1, %s25
      %p31 = scmp.ge.s32.totalorder %s30, 2
      %s32 = scalar_select %p31, 0, %s30
      %s33 = sadd.s32 1, %s24
      %s34 = scalar_select %p31, %s33, %s24
      %p35 = scmp.ge.s32.totalorder %s34, 2
      %s36 = scalar_select %p35, 0, %s34
      %s37 = ssub.s32 %s24, %s36
      %s38 = ssub.s32 %s25, %s32
      %s39 = sor.u32 %s37, %s38
      %p40 = scmp.eq.s32.totalorder %s39, 0
      %s42 = sadd.s32 %s41, 1
      %s43 = scalar_select %p40, %s41, %s42
      %p46 = pneg %p40
      %p47 = scmp.eq.s32.totalorder %s17, 3
      %p48 = por %p46, %p47
      %p49 = scmp.ne.s32.totalorder %s41, %s44
      %p50 = scmp.eq.s32.totalorder %s17, 0
      %p51 = por %p49, %p50
      %p52 = scmp.ne.s32.totalorder %s41, %s44
      %p53 = scmp.eq.s32.totalorder %s22, 3
      %p54 = por %p52, %p53
      %p55 = scmp.ne.s32.totalorder %s44, %s45
      %p56 = scmp.eq.s32.totalorder %s22, 0
      %p57 = por %p55, %p56
      %p58 = scmp.ne.s32.totalorder %s44, %s45
      %p59 = scmp.eq.s32.totalorder %s23, 3
      %p60 = por %p58, %p59
      %p62 = scmp.ne.s32.totalorder %s45, %s61
      %p63 = scmp.eq.s32.totalorder %s23, 0
      %p64 = por %p62, %p63
      %s65 = sadd.s32 %s25, 1
      %s66 = sadd.s32 %s32, 1
      %s67 = ssub.s32 %s24, %s36
      %s68 = ssub.s32 %s65, %s66
      %s69 = sor.u32 %s67, %s68
      %p70 = scmp.eq.s32.totalorder %s69, 0
      %s72 = sadd.s32 %s71, 1
      %s73 = scalar_select %p70, %s71, %s72
      %p76 = pneg %p70
      %p77 = scmp.eq.s32.totalorder %s17, 3
      %p78 = por %p76, %p77
      %p79 = scmp.ne.s32.totalorder %s71, %s74
      %p80 = scmp.eq.s32.totalorder %s17, 0
      %p81 = por %p79, %p80
      %p82 = scmp.ne.s32.totalorder %s71, %s74
      %p83 = scmp.eq.s32.totalorder %s22, 3
      %p84 = por %p82, %p83
      %p85 = scmp.ne.s32.totalorder %s74, %s75
      %p86 = scmp.eq.s32.totalorder %s22, 0
      %p87 = por %p85, %p86
      %p88 = scmp.ne.s32.totalorder %s74, %s75
      %p89 = scmp.eq.s32.totalorder %s23, 3
      %p90 = por %p88, %p89
      %p92 = scmp.ne.s32.totalorder %s75, %s91
      %p93 = scmp.eq.s32.totalorder %s23, 0
      %p94 = por %p92, %p93
      %s96 = sadd.s32 %s95, 1
      %p99 = scmp.eq.s32.totalorder %s17, 3
      %p100 = scmp.ne.s32.totalorder %s95, %s97
      %p101 = scmp.eq.s32.totalorder %s17, 0
      %p102 = por %p100, %p101
      %p103 = scmp.ne.s32.totalorder %s95, %s97
      %p104 = scmp.eq.s32.totalorder %s22, 3
      %p105 = por %p103, %p104
      %p106 = scmp.ne.s32.totalorder %s97, %s98
      %p107 = scmp.eq.s32.totalorder %s22, 0
      %p108 = por %p106, %p107
      %p109 = scmp.ne.s32.totalorder %s97, %s98
      %p110 = scmp.eq.s32.totalorder %s23, 3
      %p111 = por %p109, %p110
      %p113 = scmp.ne.s32.totalorder %s98, %s112
      %p114 = scmp.eq.s32.totalorder %s23, 0
      %p115 = por %p113, %p114
      %s117 = sadd.s32 %s116, 1
      %p120 = scmp.eq.s32.totalorder %s17, 3
      %p121 = scmp.ne.s32.totalorder %s116, %s118
      %p122 = scmp.eq.s32.totalorder %s17, 0
      %p123 = por %p121, %p122
      %p124 = scmp.ne.s32.totalorder %s116, %s118
      %p125 = scmp.eq.s32.totalorder %s22, 3
      %p126 = por %p124, %p125
      %p127 = scmp.ne.s32.totalorder %s118, %s119
      %p128 = scmp.eq.s32.totalorder %s22, 0
      %p129 = por %p127, %p128
      %p130 = scmp.ne.s32.totalorder %s118, %s119
      %p131 = scmp.eq.s32.totalorder %s23, 3
      %p132 = por %p130, %p131
      %p134 = scmp.ne.s32.totalorder %s119, %s133
      %p135 = scmp.eq.s32.totalorder %s23, 0
      %p136 = por %p134, %p135
      %s138 = sadd.s32 %s137, 1
      %p141 = scmp.eq.s32.totalorder %s17, 3
      %p142 = scmp.ne.s32.totalorder %s137, %s139
      %p143 = scmp.eq.s32.totalorder %s17, 0
      %p144 = por %p142, %p143
      %p145 = scmp.ne.s32.totalorder %s137, %s139
      %p146 = scmp.eq.s32.totalorder %s22, 3
      %p147 = por %p145, %p146
      %p148 = scmp.ne.s32.totalorder %s139, %s140
      %p149 = scmp.eq.s32.totalorder %s22, 0
      %p150 = por %p148, %p149
      %p151 = scmp.ne.s32.totalorder %s139, %s140
      %p152 = scmp.eq.s32.totalorder %s23, 3
      %p153 = por %p151, %p152
      %p155 = scmp.ne.s32.totalorder %s140, %s154
      %p156 = scmp.eq.s32.totalorder %s23, 0
      %p157 = por %p155, %p156
      %s159 = sadd.s32 %s158, 1
      %p162 = scmp.eq.s32.totalorder %s17, 3
      %p163 = scmp.ne.s32.totalorder %s158, %s160
      %p164 = scmp.eq.s32.totalorder %s17, 0
      %p165 = por %p163, %p164
      %p166 = scmp.ne.s32.totalorder %s158, %s160
      %p167 = scmp.eq.s32.totalorder %s22, 3
      %p168 = por %p166, %p167
      %p169 = scmp.ne.s32.totalorder %s160, %s161
      %p170 = scmp.eq.s32.totalorder %s22, 0
      %p171 = por %p169, %p170
      %p172 = scmp.ne.s32.totalorder %s160, %s161
      %p173 = scmp.eq.s32.totalorder %s23, 3
      %p174 = por %p172, %p173
      %p176 = scmp.ne.s32.totalorder %s161, %s175
      %p177 = scmp.eq.s32.totalorder %s23, 0
      %p178 = por %p176, %p177
      %s180 = sadd.s32 %s179, 1
      %p183 = scmp.eq.s32.totalorder %s17, 3
      %p184 = scmp.ne.s32.totalorder %s179, %s181
      %p185 = scmp.eq.s32.totalorder %s17, 0
      %p186 = por %p184, %p185
      %p187 = scmp.ne.s32.totalorder %s179, %s181
      %p188 = scmp.eq.s32.totalorder %s22, 3
      %p189 = por %p187, %p188
      %p190 = scmp.ne.s32.totalorder %s181, %s182
      %p191 = scmp.eq.s32.totalorder %s22, 0
      %p192 = por %p190, %p191
      %p193 = scmp.ne.s32.totalorder %s181, %s182
      %p194 = scmp.eq.s32.totalorder %s23, 3
      %p195 = por %p193, %p194
      %p197 = scmp.ne.s32.totalorder %s182, %s196
      %p198 = scmp.eq.s32.totalorder %s23, 0
      %p199 = por %p197, %p198
      %s201 = sadd.s32 %s200, 1
      %p204 = scmp.eq.s32.totalorder %s17, 3
      %p205 = scmp.ne.s32.totalorder %s200, %s202
      %p206 = scmp.eq.s32.totalorder %s17, 0
      %p207 = por %p205, %p206
      %p208 = scmp.ne.s32.totalorder %s200, %s202
      %p209 = scmp.eq.s32.totalorder %s22, 3
      %p210 = por %p208, %p209
      %p211 = scmp.ne.s32.totalorder %s202, %s203
      %p212 = scmp.eq.s32.totalorder %s22, 0
      %p213 = por %p211, %p212
      %p214 = scmp.ne.s32.totalorder %s202, %s203
      %p215 = scmp.eq.s32.totalorder %s23, 3
      %p216 = por %p214, %p215
      %p218 = scmp.ne.s32.totalorder %s203, %s217
      %p219 = scmp.eq.s32.totalorder %s23, 0
      %p220 = por %p218, %p219
      %s221 = ssub.s32 %s24, %s36
      %s222 = ssub.s32 %s25, %s32
      %s223 = sor.u32 %s221, %s222
      %p224 = scmp.eq.s32.totalorder %s223, 0
      %s226 = sadd.s32 %s225, 1
      %s227 = scalar_select %p224, %s225, %s226
      %p230 = pneg %p224
      %p231 = scmp.eq.s32.totalorder %s17, 3
      %p232 = por %p230, %p231
      %p233 = scmp.ne.s32.totalorder %s225, %s228
      %p234 = scmp.eq.s32.totalorder %s17, 0
      %p235 = por %p233, %p234
      %p236 = scmp.ne.s32.totalorder %s225, %s228
      %p237 = scmp.eq.s32.totalorder %s22, 3
      %p238 = por %p236, %p237
      %p239 = scmp.ne.s32.totalorder %s228, %s229
      %p240 = scmp.eq.s32.totalorder %s22, 0
      %p241 = por %p239, %p240
      %p242 = scmp.ne.s32.totalorder %s228, %s229
      %p243 = scmp.eq.s32.totalorder %s23, 3
      %p244 = por %p242, %p243
      %p246 = scmp.ne.s32.totalorder %s229, %s245
      %p247 = scmp.eq.s32.totalorder %s23, 0
      %p248 = por %p246, %p247
      %p249 = scmp.le.s32.totalorder 1, %s17
      %p250 = scmp.lt.s32.totalorder %s17, 5
      %p251 = pnand %p249, %p250
      %p252 = pneg %p251
      // Predicated region
      $region9: #{tpu_custom_call.1} parent=5 // pred_check
        _
      $region10: #{tpu_custom_call.1} parent=5 // pred_check_branch
        %254 = sbr.rel (%p251) target = $region12
      $region11: #{tpu_custom_call.1} parent=5 // pred_region
        %s255 = ssub.s32 %s17, 1
        // Predicated region
        $region13: #{tpu_custom_call.1} parent=11 // pred_check
          %p256 = pneg %p108
        $region14: #{tpu_custom_call.1} parent=11 // pred_check_branch
          %258 = sbr.rel (%p256) target = $region16
        $region15: #{tpu_custom_call.1} parent=11 // pred_region
          _
        $region16: #{tpu_custom_call.1} parent=11 // pred_fallthru
          _
        // Predicated region
        $region17: #{tpu_custom_call.1} parent=11 // pred_check
          %p259 = pneg %p129
        $region18: #{tpu_custom_call.1} parent=11 // pred_check_branch
          %261 = sbr.rel (%p259) target = $region20
        $region19: #{tpu_custom_call.1} parent=11 // pred_region
          _
        $region20: #{tpu_custom_call.1} parent=11 // pred_fallthru
          _
        // Predicated region
        $region21: #{tpu_custom_call.1} parent=11 // pred_check
          %p262 = pneg %p150
        $region22: #{tpu_custom_call.1} parent=11 // pred_check_branch
          %264 = sbr.rel (%p262) target = $region24
        $region23: #{tpu_custom_call.1} parent=11 // pred_region
          _
        $region24: #{tpu_custom_call.1} parent=11 // pred_fallthru
          _
        // Predicated region
        $region25: #{tpu_custom_call.1} parent=11 // pred_check
          %p265 = pneg %p171
        $region26: #{tpu_custom_call.1} parent=11 // pred_check_branch
          %267 = sbr.rel (%p265) target = $region28
        $region27: #{tpu_custom_call.1} parent=11 // pred_region
          _
        $region28: #{tpu_custom_call.1} parent=11 // pred_fallthru
          _
        // Predicated region
        $region29: #{tpu_custom_call.1} parent=11 // pred_check
          %p268 = pneg %p192
        $region30: #{tpu_custom_call.1} parent=11 // pred_check_branch
          %270 = sbr.rel (%p268) target = $region32
        $region31: #{tpu_custom_call.1} parent=11 // pred_region
          _
        $region32: #{tpu_custom_call.1} parent=11 // pred_fallthru
          _
        // Predicated region
        $region33: #{tpu_custom_call.1} parent=11 // pred_check
          %p271 = pneg %p213
        $region34: #{tpu_custom_call.1} parent=11 // pred_check_branch
          %273 = sbr.rel (%p271) target = $region36
        $region35: #{tpu_custom_call.1} parent=11 // pred_region
          _
        $region36: #{tpu_custom_call.1} parent=11 // pred_fallthru
          _
      $region12: #{tpu_custom_call.1} parent=5 // pred_fallthru
        _
      %p274 = scmp.lt.s32.totalorder %s17, 4
      // Predicated region
      $region37: #{tpu_custom_call.1} parent=5 // pred_check
        %p275 = pneg %p274
      $region38: #{tpu_custom_call.1} parent=5 // pred_check_branch
        %277 = sbr.rel (%p275) target = $region40
      $region39: #{tpu_custom_call.1} parent=5 // pred_region
        // Predicated region
        $region41: #{tpu_custom_call.1} parent=39 // pred_check
          %p278 = pneg %p51
        $region42: #{tpu_custom_call.1} parent=39 // pred_check_branch
          %280 = sbr.rel (%p278) target = $region44
        $region43: #{tpu_custom_call.1} parent=39 // pred_region
          %s281 = smul.u32 4, %s25
          %p282 = scmp.lt.s32.totalorder %s24, 1
          %s283 = scalar_select %p282, %s24, 1
          %p284 = scmp.lt.s32.totalorder %s281, 11
          %s285 = scalar_select %p284, %s281, 11
          %s286 = smul.addr %s285, 2
          %s287 = smul.addr %s283, 24
          %s288 = sadd.s32 %s286, %s287
          %s289 = smul.addr %s288, 4
          %s290 = scalar_lea.vmem %s0, %s289
          %s291 = smul.u32 4, %s25
        $region44: #{tpu_custom_call.1} parent=39 // pred_fallthru
          _
        // Predicated region
        $region45: #{tpu_custom_call.1} parent=39 // pred_check
          %p292 = pneg %p81
        $region46: #{tpu_custom_call.1} parent=39 // pred_check_branch
          %294 = sbr.rel (%p292) target = $region48
        $region47: #{tpu_custom_call.1} parent=39 // pred_region
          %s295 = sadd.s32 %s25, 1
          %s296 = smul.u32 4, %s295
          %p297 = scmp.lt.s32.totalorder %s24, 1
          %s298 = scalar_select %p297, %s24, 1
          %p299 = scmp.lt.s32.totalorder %s296, 11
          %s300 = scalar_select %p299, %s296, 11
          %s301 = smul.addr %s300, 2
          %s302 = smul.addr %s298, 24
          %s303 = sadd.s32 %s301, %s302
          %s304 = smul.addr %s303, 4
          %s305 = scalar_lea.vmem %s1, %s304
          %s306 = sadd.s32 %s25, 1
          %s307 = smul.u32 4, %s306
        $region48: #{tpu_custom_call.1} parent=39 // pred_fallthru
          _
      $region40: #{tpu_custom_call.1} parent=5 // pred_fallthru
        _
      %p308 = scmp.le.s32.totalorder 1, %s17
      %p309 = scmp.lt.s32.totalorder %s17, 5
      %p310 = pnand %p308, %p309
      %p311 = pneg %p310
      // Predicated region
      $region49: #{tpu_custom_call.1} parent=5 // pred_check
        _
      $region50: #{tpu_custom_call.1} parent=5 // pred_check_branch
        %313 = sbr.rel (%p310) target = $region52
      $region51: #{tpu_custom_call.1} parent=5 // pred_region
        %s314 = ssub.s32 %s17, 1
        %s315 = smul.u32 4, %s27
        %p316 = scmp.lt.s32.totalorder %s26, 1
        %s317 = scalar_select %p316, %s26, 1
        %p318 = scmp.lt.s32.totalorder %s315, 11
        %s319 = scalar_select %p318, %s315, 11
        %s320 = smul.addr %s319, 2
        %s321 = smul.addr %s317, 24
        %s322 = sadd.s32 %s320, %s321
        %s323 = smul.addr %s322, 4
        %s324 = scalar_lea.vmem %s0, %s323
        %p325 = pneg %p57
        %p326 = pneg %p54
        %s327 = sadd.s32 %s27, 1
        %s328 = smul.u32 4, %s327
        %p329 = scmp.lt.s32.totalorder %s26, 1
        %s330 = scalar_select %p329, %s26, 1
        %p331 = scmp.lt.s32.totalorder %s328, 11
        %s332 = scalar_select %p331, %s328, 11
        %s333 = smul.addr %s332, 2
        %s334 = smul.addr %s330, 24
        %s335 = sadd.s32 %s333, %s334
        %s336 = smul.addr %s335, 4
        %s337 = scalar_lea.vmem %s1, %s336
        %p338 = pneg %p87
        %p339 = pneg %p84
        %p340 = pneg %p108
        %p341 = pneg %p105
        %p342 = pneg %p129
        %p343 = pneg %p126
        %p344 = pneg %p150
        %p345 = pneg %p147
        %p346 = pneg %p171
        %p347 = pneg %p168
        %p348 = pneg %p192
        %p349 = pneg %p189
        %p350 = pneg %p213
        %p351 = pneg %p210
        %p352 = pneg %p241
        %p353 = pneg %p238
        %s354 = sand.u32 %s228, 1
        %s355 = scalar_lea.sflag [#allocation8], %s354
        %s356 = sand.u32 %s228, 1
        %s357 = smul.addr %s356, 16
        %s358 = scalar_lea.vmem [#allocation7], %s357
        %s359 = smul.u32 4, %s27
        %p360 = scmp.lt.s32.totalorder %s26, 1
        %s361 = scalar_select %p360, %s26, 1
        %p362 = scmp.lt.s32.totalorder %s359, 11
        %s363 = scalar_select %p362, %s359, 11
        %s364 = smul.addr %s363, 2
        %s365 = smul.addr %s361, 24
        %s366 = sadd.s32 %s364, %s365
        %s367 = smul.addr %s366, 4
        %s368 = scalar_lea.vmem %s0, %s367
        %s369 = smul.u32 4, %s27
        %s370 = sadd.s32 %s27, 1
        %s371 = smul.u32 4, %s370
        %p372 = scmp.lt.s32.totalorder %s26, 1
        %s373 = scalar_select %p372, %s26, 1
        %p374 = scmp.lt.s32.totalorder %s371, 11
        %s375 = scalar_select %p374, %s371, 11
        %s376 = smul.addr %s375, 2
        %s377 = smul.addr %s373, 24
        %s378 = sadd.s32 %s376, %s377
        %s379 = smul.addr %s378, 4
        %s380 = scalar_lea.vmem %s1, %s379
        %s381 = sadd.s32 %s27, 1
        %s382 = smul.u32 4, %s381
        %s383 = smul.u32 4, %s27
        %vm385 = vcmask 24576
        %vm386 = vsmask.f32 256
        %vm387 = vmand %vm385, %vm386
        %v388 = vld [vmem:[#allocation2] sm:$0x1]
        %v389 = vsel %vm387, 0, %v388
        %390 = vst [vmem:[#allocation2] sm:$0x1] %v389
        %v391 = vld [vmem:[#allocation2 + $0x8] sm:$0x1]
        %v392 = vsel %vm387, 0, %v391
        %393 = vst [vmem:[#allocation2 + $0x8] sm:$0x1] %v392
        %v394 = vld [vmem:[#allocation2 + $0x10] sm:$0x1]
        %v395 = vsel %vm387, 0, %v394
        %396 = vst [vmem:[#allocation2 + $0x10] sm:$0x1] %v395
        %v397 = vld [vmem:[#allocation2 + $0x18] sm:$0x1]
        %v398 = vsel %vm387, 0, %v397
        %399 = vst [vmem:[#allocation2 + $0x18] sm:$0x1] %v398
        %v400 = vld [vmem:[#allocation2 + $0x20] sm:$0x1]
        %v401 = vsel %vm387, 0, %v400
        %402 = vst [vmem:[#allocation2 + $0x20] sm:$0x1] %v401
        %v403 = vld [vmem:[#allocation2 + $0x28] sm:$0x1]
        %v404 = vsel %vm387, 0, %v403
        %405 = vst [vmem:[#allocation2 + $0x28] sm:$0x1] %v404
        %v406 = vld [vmem:[#allocation2 + $0x30] sm:$0x1]
        %v407 = vsel %vm387, 0, %v406
        %408 = vst [vmem:[#allocation2 + $0x30] sm:$0x1] %v407
        %v409 = vld [vmem:[#allocation2 + $0x38] sm:$0x1]
        %v410 = vsel %vm387, 0, %v409
        %411 = vst [vmem:[#allocation2 + $0x38] sm:$0x1] %v410
        %vm412 = vsmask.f32 7938
        %vm413 = vmand %vm385, %vm412
        %v414 = vld [vmem:[#allocation2 + $0x4] sm:$0x1]
        %v415 = vsel %vm413, 0, %v414
        %416 = vst [vmem:[#allocation2 + $0x4] sm:$0x1] %v415
        %v417 = vld [vmem:[#allocation2 + $0xc] sm:$0x1]
        %v418 = vsel %vm413, 0, %v417
        %419 = vst [vmem:[#allocation2 + $0xc] sm:$0x1] %v418
        %v420 = vld [vmem:[#allocation2 + $0x14] sm:$0x1]
        %v421 = vsel %vm413, 0, %v420
        %422 = vst [vmem:[#allocation2 + $0x14] sm:$0x1] %v421
        %v423 = vld [vmem:[#allocation2 + $0x1c] sm:$0x1]
        %v424 = vsel %vm413, 0, %v423
        %425 = vst [vmem:[#allocation2 + $0x1c] sm:$0x1] %v424
        %v426 = vld [vmem:[#allocation2 + $0x24] sm:$0x1]
        %v427 = vsel %vm413, 0, %v426
        %428 = vst [vmem:[#allocation2 + $0x24] sm:$0x1] %v427
        %v429 = vld [vmem:[#allocation2 + $0x2c] sm:$0x1]
        %v430 = vsel %vm413, 0, %v429
        %431 = vst [vmem:[#allocation2 + $0x2c] sm:$0x1] %v430
        %v432 = vld [vmem:[#allocation2 + $0x34] sm:$0x1]
        %v433 = vsel %vm413, 0, %v432
        %434 = vst [vmem:[#allocation2 + $0x34] sm:$0x1] %v433
        %v435 = vld [vmem:[#allocation2 + $0x3c] sm:$0x1]
        %v436 = vsel %vm413, 0, %v435
        %437 = vst [vmem:[#allocation2 + $0x3c] sm:$0x1] %v436
        %v438 = vld [vmem:[%s368] sm:$0xf]
        %v439 = vld [vmem:[%s368 + $0x4] sm:$0xf]
        %v440 = vld [vmem:[%s368 + $0x8] sm:$0xf]
        %v441 = vld [vmem:[%s368 + $0xc] sm:$0xf]
        %v442 = vld [vmem:[%s368 + $0x10] sm:$0xf]
        %v443 = vld [vmem:[%s368 + $0x14] sm:$0xf]
        %v444 = vld [vmem:[%s368 + $0x18] sm:$0xf]
        %v445 = vld [vmem:[%s368 + $0x1c] sm:$0xf]
        %v446 = vmax.bf16 %v438, %v439
        %v447 = vmax.bf16 %v440, %v441
        %v448 = vmax.bf16 %v442, %v443
        %v449 = vmax.bf16 %v444, %v445
        %454 = vrot.lane.b32.xlu0 %v446, 124
        %v455 = vpop.permute.xlu0 %454
        %456 = vrot.lane.b32.xlu0 %v447, 124
        %v457 = vpop.permute.xlu0 %456
        %458 = vrot.lane.b32.xlu0 %v448, 124
        %v459 = vpop.permute.xlu0 %458
        %460 = vrot.lane.b32.xlu0 %v449, 124
        %v461 = vpop.permute.xlu0 %460
        %v466 = vmax.bf16 %v446, %v455
        %v467 = vmax.bf16 %v447, %v457
        %v468 = vmax.bf16 %v448, %v459
        %v469 = vmax.bf16 %v449, %v461
        %v471 = vshrl.u32 %v466, 16
        %v473 = vrot.slane %v471, 7
        %v474 = vshll.u32 %v466, 16
        %v476 = vor.u32 %v473, %v474
        %v477 = vrot.slane %v473, 4
        %v479 = vshrl.u32 %v467, 16
        %v481 = vrot.slane %v479, 7
        %v482 = vshll.u32 %v467, 16
        %v484 = vor.u32 %v481, %v482
        %v485 = vrot.slane %v481, 4
        %v487 = vshrl.u32 %v468, 16
        %v489 = vrot.slane %v487, 7
        %v490 = vshll.u32 %v468, 16
        %v492 = vor.u32 %v489, %v490
        %v493 = vrot.slane %v489, 4
        %v495 = vshrl.u32 %v469, 16
        %v497 = vrot.slane %v495, 7
        %v498 = vshll.u32 %v469, 16
        %v500 = vor.u32 %v497, %v498
        %v501 = vrot.slane %v497, 4
        %vm510 = vcmask 27648
        %vm511 = vmand %vm510, %vm412
        %v512 = vld [vmem:[#allocation2] sm:$0xf]
        %v513 = vsel %vm511, %v476, %v512
        %514 = vst [vmem:[#allocation2] sm:$0xf] %v513
        %v515 = vld [vmem:[#allocation2 + $0x4] sm:$0x1]
        %v516 = vsel %vm387, %v477, %v515
        %517 = vst [vmem:[#allocation2 + $0x4] sm:$0x1] %v516
        %v518 = vld [vmem:[#allocation2 + $0x8] sm:$0xf]
        %v519 = vsel %vm511, %v484, %v518
        %520 = vst [vmem:[#allocation2 + $0x8] sm:$0xf] %v519
        %v521 = vld [vmem:[#allocation2 + $0xc] sm:$0x1]
        %v522 = vsel %vm387, %v485, %v521
        %523 = vst [vmem:[#allocation2 + $0xc] sm:$0x1] %v522
        %v524 = vld [vmem:[#allocation2 + $0x10] sm:$0xf]
        %v525 = vsel %vm511, %v492, %v524
        %526 = vst [vmem:[#allocation2 + $0x10] sm:$0xf] %v525
        %v527 = vld [vmem:[#allocation2 + $0x14] sm:$0x1]
        %v528 = vsel %vm387, %v493, %v527
        %529 = vst [vmem:[#allocation2 + $0x14] sm:$0x1] %v528
        %v530 = vld [vmem:[#allocation2 + $0x18] sm:$0xf]
        %v531 = vsel %vm511, %v500, %v530
        %532 = vst [vmem:[#allocation2 + $0x18] sm:$0xf] %v531
        %v533 = vld [vmem:[#allocation2 + $0x1c] sm:$0x1]
        %v534 = vsel %vm387, %v501, %v533
        %535 = vst [vmem:[#allocation2 + $0x1c] sm:$0x1] %v534
        %v536 = vld [vmem:[%s380] sm:$0xf]
        %v537 = vld [vmem:[%s380 + $0x4] sm:$0xf]
        %v538 = vld [vmem:[%s380 + $0x8] sm:$0xf]
        %v539 = vld [vmem:[%s380 + $0xc] sm:$0xf]
        %v540 = vld [vmem:[%s380 + $0x10] sm:$0xf]
        %v541 = vld [vmem:[%s380 + $0x14] sm:$0xf]
        %v542 = vld [vmem:[%s380 + $0x18] sm:$0xf]
        %v543 = vld [vmem:[%s380 + $0x1c] sm:$0xf]
        %v544 = vmax.bf16 %v536, %v537
        %v545 = vmax.bf16 %v538, %v539
        %v546 = vmax.bf16 %v540, %v541
        %v547 = vmax.bf16 %v542, %v543
        %552 = vrot.lane.b32.xlu0 %v544, 124
        %v553 = vpop.permute.xlu0 %552
        %554 = vrot.lane.b32.xlu0 %v545, 124
        %v555 = vpop.permute.xlu0 %554
        %556 = vrot.lane.b32.xlu0 %v546, 124
        %v557 = vpop.permute.xlu0 %556
        %558 = vrot.lane.b32.xlu0 %v547, 124
        %v559 = vpop.permute.xlu0 %558
        %v564 = vmax.bf16 %v544, %v553
        %v565 = vmax.bf16 %v545, %v555
        %v566 = vmax.bf16 %v546, %v557
        %v567 = vmax.bf16 %v547, %v559
        %v569 = vshrl.u32 %v564, 16
        %v571 = vrot.slane %v569, 7
        %v572 = vshll.u32 %v564, 16
        %v574 = vor.u32 %v571, %v572
        %v575 = vrot.slane %v571, 4
        %v577 = vshrl.u32 %v565, 16
        %v579 = vrot.slane %v577, 7
        %v580 = vshll.u32 %v565, 16
        %v582 = vor.u32 %v579, %v580
        %v583 = vrot.slane %v579, 4
        %v585 = vshrl.u32 %v566, 16
        %v587 = vrot.slane %v585, 7
        %v588 = vshll.u32 %v566, 16
        %v590 = vor.u32 %v587, %v588
        %v591 = vrot.slane %v587, 4
        %v593 = vshrl.u32 %v567, 16
        %v595 = vrot.slane %v593, 7
        %v596 = vshll.u32 %v567, 16
        %v598 = vor.u32 %v595, %v596
        %v599 = vrot.slane %v595, 4
        %s608 = scalar_lea.vmem [#allocation2], 32
        %v609 = vld [vmem:[%s608] sm:$0xf]
        %v610 = vsel %vm511, %v574, %v609
        %611 = vst [vmem:[%s608] sm:$0xf] %v610
        %v612 = vld [vmem:[%s608 + $0x4] sm:$0x1]
        %v613 = vsel %vm387, %v575, %v612
        %614 = vst [vmem:[%s608 + $0x4] sm:$0x1] %v613
        %v615 = vld [vmem:[%s608 + $0x8] sm:$0xf]
        %v616 = vsel %vm511, %v582, %v615
        %617 = vst [vmem:[%s608 + $0x8] sm:$0xf] %v616
        %v618 = vld [vmem:[%s608 + $0xc] sm:$0x1]
        %v619 = vsel %vm387, %v583, %v618
        %620 = vst [vmem:[%s608 + $0xc] sm:$0x1] %v619
        %v621 = vld [vmem:[%s608 + $0x10] sm:$0xf]
        %v622 = vsel %vm511, %v590, %v621
        %623 = vst [vmem:[%s608 + $0x10] sm:$0xf] %v622
        %v624 = vld [vmem:[%s608 + $0x14] sm:$0x1]
        %v625 = vsel %vm387, %v591, %v624
        %626 = vst [vmem:[%s608 + $0x14] sm:$0x1] %v625
        %v627 = vld [vmem:[%s608 + $0x18] sm:$0xf]
        %v628 = vsel %vm511, %v598, %v627
        %629 = vst [vmem:[%s608 + $0x18] sm:$0xf] %v628
        %v630 = vld [vmem:[%s608 + $0x1c] sm:$0x1]
        %v631 = vsel %vm387, %v599, %v630
        %632 = vst [vmem:[%s608 + $0x1c] sm:$0x1] %v631
        %v633 = vld [vmem:[#allocation2] sm:$0xf]
        %v634 = vld [vmem:[#allocation2 + $0x8] sm:$0xf]
        %v635 = vld [vmem:[#allocation2 + $0x10] sm:$0xf]
        %v636 = vld [vmem:[#allocation2 + $0x18] sm:$0xf]
        %v637 = vld [vmem:[#allocation2 + $0x20] sm:$0xf]
        %v638 = vld [vmem:[#allocation2 + $0x28] sm:$0xf]
        %vm639 = vcmask 27648
        %640 = vst.msk [vmem:[#allocation4] sm:$0xf] %vm639, %v633
        %641 = vst.msk [vmem:[#allocation4 + $0x4] sm:$0xf] %vm639, %v634
        %642 = vst.msk [vmem:[#allocation4 + $0x8] sm:$0xf] %vm639, %v635
        %643 = vst.msk [vmem:[#allocation4 + $0xc] sm:$0xf] %vm639, %v636
        %644 = vst.msk [vmem:[#allocation4 + $0x10] sm:$0xf] %vm639, %v637
        %645 = vst.msk [vmem:[#allocation4 + $0x14] sm:$0xf] %vm639, %v638
        %v646 = vld [vmem:[#allocation2] sm:$0xf]
        %v647 = vld [vmem:[#allocation2 + $0x4] sm:$0x1]
        %v648 = vld [vmem:[#allocation2 + $0x8] sm:$0xf]
        %v649 = vld [vmem:[#allocation2 + $0xc] sm:$0x1]
        %v650 = vld [vmem:[#allocation2 + $0x10] sm:$0xf]
        %v651 = vld [vmem:[#allocation2 + $0x14] sm:$0x1]
        %v652 = vld [vmem:[#allocation2 + $0x18] sm:$0xf]
        %v653 = vld [vmem:[#allocation2 + $0x1c] sm:$0x1]
        %v654 = vld [vmem:[#allocation2 + $0x20] sm:$0xf]
        %v655 = vld [vmem:[#allocation2 + $0x24] sm:$0x1]
        %v656 = vld [vmem:[#allocation2 + $0x28] sm:$0xf]
        %v657 = vld [vmem:[#allocation2 + $0x2c] sm:$0x1]
        %vm658 = vsmask.f32 3328
        %vm659 = vsmask.f32 7440
        %vm660 = vmor %vm658, %vm659
        %v662 = vshrl.u32 %v646, 16
        %v664 = vrot.slane %v662, 4
        %v665 = vshll.u32 %v646, 16
        %v667 = vrot.slane %v665, 5
        %v668 = vor.u32 %v664, %v667
        %v669 = vrot.slane %v668, 4
        %v671 = vshll.u32 %v647, 16
        %v673 = vrot.slane %v671, 5
        %v674 = vsel %vm660, %v669, %v673
        %v676 = vshrl.u32 %v648, 16
        %v678 = vrot.slane %v676, 4
        %v679 = vshll.u32 %v648, 16
        %v681 = vrot.slane %v679, 5
        %v682 = vor.u32 %v678, %v681
        %v683 = vrot.slane %v682, 4
        %v685 = vshll.u32 %v649, 16
        %v687 = vrot.slane %v685, 5
        %v688 = vsel %vm660, %v683, %v687
        %v690 = vshrl.u32 %v650, 16
        %v692 = vrot.slane %v690, 4
        %v693 = vshll.u32 %v650, 16
        %v695 = vrot.slane %v693, 5
        %v696 = vor.u32 %v692, %v695
        %v697 = vrot.slane %v696, 4
        %v699 = vshll.u32 %v651, 16
        %v701 = vrot.slane %v699, 5
        %v702 = vsel %vm660, %v697, %v701
        %v704 = vshrl.u32 %v652, 16
        %v706 = vrot.slane %v704, 4
        %v707 = vshll.u32 %v652, 16
        %v709 = vrot.slane %v707, 5
        %v710 = vor.u32 %v706, %v709
        %v711 = vrot.slane %v710, 4
        %v713 = vshll.u32 %v653, 16
        %v715 = vrot.slane %v713, 5
        %v716 = vsel %vm660, %v711, %v715
        %v718 = vshrl.u32 %v654, 16
        %v720 = vrot.slane %v718, 4
        %v721 = vshll.u32 %v654, 16
        %v723 = vrot.slane %v721, 5
        %v724 = vor.u32 %v720, %v723
        %v725 = vrot.slane %v724, 4
        %v727 = vshll.u32 %v655, 16
        %v729 = vrot.slane %v727, 5
        %v730 = vsel %vm660, %v725, %v729
        %v732 = vshrl.u32 %v656, 16
        %v734 = vrot.slane %v732, 4
        %v735 = vshll.u32 %v656, 16
        %v737 = vrot.slane %v735, 5
        %v738 = vor.u32 %v734, %v737
        %v739 = vrot.slane %v738, 4
        %v741 = vshll.u32 %v657, 16
        %v743 = vrot.slane %v741, 5
        %v744 = vsel %vm660, %v739, %v743
        %745 = vrot.lane.b32.xlu0 %v674, 4
        %v746 = vpop.permute.xlu0 %745
        %747 = vrot.lane.b32.xlu0 %v688, 4
        %v748 = vpop.permute.xlu0 %747
        %749 = vrot.lane.b32.xlu0 %v702, 4
        %v750 = vpop.permute.xlu0 %749
        %751 = vrot.lane.b32.xlu0 %v716, 4
        %v752 = vpop.permute.xlu0 %751
        %753 = vrot.lane.b32.xlu0 %v730, 4
        %v754 = vpop.permute.xlu0 %753
        %755 = vrot.lane.b32.xlu0 %v744, 4
        %v756 = vpop.permute.xlu0 %755
        %vm763 = vcmask 60448
        %764 = vst.msk [vmem:[#allocation4] sm:$0xf] %vm763, %v746
        %765 = vst.msk [vmem:[#allocation4 + $0x4] sm:$0xf] %vm763, %v748
        %766 = vst.msk [vmem:[#allocation4 + $0x8] sm:$0xf] %vm763, %v750
        %767 = vst.msk [vmem:[#allocation4 + $0xc] sm:$0xf] %vm763, %v752
        %768 = vst.msk [vmem:[#allocation4 + $0x10] sm:$0xf] %vm763, %v754
        %769 = vst.msk [vmem:[#allocation4 + $0x14] sm:$0xf] %vm763, %v756
        %v770 = vld [vmem:[#allocation2] sm:$0xe]
        %v771 = vld [vmem:[#allocation2 + $0x4] sm:$0x1]
        %v772 = vld [vmem:[#allocation2 + $0x8] sm:$0xe]
        %v773 = vld [vmem:[#allocation2 + $0xc] sm:$0x1]
        %v774 = vld [vmem:[#allocation2 + $0x10] sm:$0xe]
        %v775 = vld [vmem:[#allocation2 + $0x14] sm:$0x1]
        %v776 = vld [vmem:[#allocation2 + $0x18] sm:$0xe]
        %v777 = vld [vmem:[#allocation2 + $0x1c] sm:$0x1]
        %v778 = vld [vmem:[#allocation2 + $0x20] sm:$0xe]
        %v779 = vld [vmem:[#allocation2 + $0x24] sm:$0x1]
        %v780 = vld [vmem:[#allocation2 + $0x28] sm:$0xe]
        %v781 = vld [vmem:[#allocation2 + $0x2c] sm:$0x1]
        %vm794 = vcmask 1042432
        %vm795 = vcmask 1046532
        %vm796 = vmor %vm794, %vm795
        %v797 = vrot.slane %v770, 5
        %v798 = vrot.slane %v797, 4
        %v799 = vrot.slane %v771, 5
        %v800 = vsel %vm796, %v798, %v799
        %v801 = vrot.slane %v772, 5
        %v802 = vrot.slane %v801, 4
        %v803 = vrot.slane %v773, 5
        %v804 = vsel %vm796, %v802, %v803
        %v805 = vrot.slane %v774, 5
        %v806 = vrot.slane %v805, 4
        %v807 = vrot.slane %v775, 5
        %v808 = vsel %vm796, %v806, %v807
        %v809 = vrot.slane %v776, 5
        %v810 = vrot.slane %v809, 4
        %v811 = vrot.slane %v777, 5
        %v812 = vsel %vm796, %v810, %v811
        %v813 = vrot.slane %v778, 5
        %v814 = vrot.slane %v813, 4
        %v815 = vrot.slane %v779, 5
        %v816 = vsel %vm796, %v814, %v815
        %v817 = vrot.slane %v780, 5
        %v818 = vrot.slane %v817, 4
        %v819 = vrot.slane %v781, 5
        %v820 = vsel %vm796, %v818, %v819
        %821 = vrot.lane.b32.xlu0 %v800, 8
        %v822 = vpop.permute.xlu0 %821
        %823 = vrot.lane.b32.xlu0 %v804, 8
        %v824 = vpop.permute.xlu0 %823
        %825 = vrot.lane.b32.xlu0 %v808, 8
        %v826 = vpop.permute.xlu0 %825
        %827 = vrot.lane.b32.xlu0 %v812, 8
        %v828 = vpop.permute.xlu0 %827
        %829 = vrot.lane.b32.xlu0 %v816, 8
        %v830 = vpop.permute.xlu0 %829
        %831 = vrot.lane.b32.xlu0 %v820, 8
        %v832 = vpop.permute.xlu0 %831
        %vm839 = vcmask 93248
        %840 = vst.msk [vmem:[#allocation4] sm:$0xf] %vm839, %v822
        %841 = vst.msk [vmem:[#allocation4 + $0x4] sm:$0xf] %vm839, %v824
        %842 = vst.msk [vmem:[#allocation4 + $0x8] sm:$0xf] %vm839, %v826
        %843 = vst.msk [vmem:[#allocation4 + $0xc] sm:$0xf] %vm839, %v828
        %844 = vst.msk [vmem:[#allocation4 + $0x10] sm:$0xf] %vm839, %v830
        %845 = vst.msk [vmem:[#allocation4 + $0x14] sm:$0xf] %vm839, %v832
        %v846 = vld [vmem:[#allocation4] sm:$0xf]
        %v847 = vld [vmem:[#allocation4 + $0x4] sm:$0xf]
        %v848 = vld [vmem:[#allocation4 + $0x8] sm:$0xf]
        %v849 = vld [vmem:[#allocation4 + $0xc] sm:$0xf]
        %v850 = vld [vmem:[#allocation4 + $0x10] sm:$0xf]
        %v851 = vld [vmem:[#allocation4 + $0x14] sm:$0xf]
        %v852 = vld [vmem:[%s2] sm:$0xf]
        %v853 = vld [vmem:[%s2 + $0x4] sm:$0x3]
        %v860 = vunpack.c.l.b16 %v846
        %v861 = vunpack.c.l.b16 %v847
        %v862 = vunpack.c.l.b16 %v848
        %v863 = vunpack.c.l.b16 %v849
        %v864 = vunpack.c.l.b16 %v850
        %v865 = vunpack.c.l.b16 %v851
        %v866 = vpack.c.b16 %v861, %v860
        %v867 = vpack.c.b16 %v863, %v862
        %v868 = vpack.c.b16 %v865, %v864
        %v871 = vunpack.c.l.b16 %v852
        %v872 = vunpack.c.l.b16 %v853
        %v873 = vpack.c.b16 %v872, %v871
        %vm874 = vcmask 97280
        %v876 = vsel %vm874, %v866, 0
        %v879 = vsel %vm874, %v867, 0
        %v882 = vsel %vm874, %v868, 0
        %vm884 = vcmask 1045504
        %v886 = vsel %vm884, %v873, 0
        %888 = vmatprep.subr.bf16.mxu0 0
        %889 = vmatpush1.bf16.msra.mxu0 0
        %890 = vmatprep.subr.bf16.mxu0 0
        %891 = vmatpush1.bf16.msra.mxu0 0
        %892 = vmatprep.subr.bf16.mxu0 0
        %893 = vmatpush1.bf16.msra.mxu0 0
        %894 = vmatprep.subr.bf16.mxu0 0
        %895 = vmatpush1.bf16.msra.mxu0 0
        %896 = vmatprep.subr.bf16.mxu0 0
        %897 = vmatpush1.bf16.msra.mxu0 0
        %898 = vmatprep.subr.bf16.mxu0 0
        %899 = vmatpush1.bf16.msra.mxu0 0
        %900 = vmatprep.subr.bf16.mxu0 0
        %901 = vmatpush1.bf16.msra.mxu0 0
        %902 = vmatprep.subr.bf16.mxu0 0
        %903 = vmatpush1.bf16.msra.mxu0 %v886
        %904 = vmatprep.subr.bf16.mxu0 0
        %905 = vmatpush2.bf16.msra.mxu0 0
        %906 = vmatprep.subr.bf16.mxu0 0
        %907 = vmatpush2.bf16.msra.mxu0 0
        %908 = vmatprep.subr.bf16.mxu0 0
        %909 = vmatpush2.bf16.msra.mxu0 0
        %910 = vmatprep.subr.bf16.mxu0 0
        %911 = vmatpush2.bf16.msra.mxu0 0
        %912 = vmatprep.subr.bf16.mxu0 0
        %913 = vmatpush2.bf16.msra.mxu0 0
        %914 = vmatprep.subr.bf16.mxu0 0
        %915 = vmatpush2.bf16.msra.mxu0 0
        %916 = vmatprep.subr.bf16.mxu0 0
        %917 = vmatpush2.bf16.msra.mxu0 0
        %918 = vmatprep.subr.bf16.mxu0 0
        %919 = vmatpush2.bf16.msra.mxu0 0
        %920 = vmatprep.mubr.bf16.mxu0 0
        %921 = vmatmul.mubr.bf16.gmra.mxu0 %v876
        %v922 = vpop.f32.mrf.mxu0
        %v923 = vadd.f32 0.0, %v922
        %v924 = vpop.f32.mrf.mxu0
        %v925 = vpop.f32.mrf.mxu0
        %v926 = vadd.f32 0.0, %v925
        %v927 = vpop.f32.mrf.mxu0
        %928 = vmatprep.mubr.bf16.mxu0 0
        %929 = vmatmul.mubr.bf16.gmra.mxu0 %v879
        %v930 = vpop.f32.mrf.mxu0
        %v931 = vadd.f32 0.0, %v930
        %v932 = vpop.f32.mrf.mxu0
        %v933 = vpop.f32.mrf.mxu0
        %v934 = vadd.f32 0.0, %v933
        %v935 = vpop.f32.mrf.mxu0
        %936 = vmatprep.mubr.bf16.mxu0 0
        %937 = vmatmul.mubr.bf16.gmra.mxu0 %v882
        %v938 = vpop.f32.mrf.mxu0
        %v939 = vadd.f32 0.0, %v938
        %v940 = vpop.f32.mrf.mxu0
        %v941 = vpop.f32.mrf.mxu0
        %v942 = vadd.f32 0.0, %v941
        %v943 = vpop.f32.mrf.mxu0
        %944 = vdwg.mxu0
        %945 = vst [vmem:[#allocation6] sm:$0xff] %v923
        %946 = vst [vmem:[#allocation6 + $0x8] sm:$0xff] %v926
        %947 = vst [vmem:[#allocation6 + $0x10] sm:$0xff] %v931
        %948 = vst [vmem:[#allocation6 + $0x18] sm:$0xff] %v934
        %949 = vst [vmem:[#allocation6 + $0x20] sm:$0xff] %v939
        %950 = vst [vmem:[#allocation6 + $0x28] sm:$0xff] %v942
        %s951 = scalar_lea.vmem [#allocation2], 8
        %v952 = vld [vmem:[%s951] sm:$0xf]
        %v953 = vld [vmem:[%s951 + $0x8] sm:$0xf]
        %v954 = vld [vmem:[%s951 + $0x10] sm:$0xf]
        %v955 = vld [vmem:[%s951 + $0x18] sm:$0xf]
        %v956 = vld [vmem:[%s951 + $0x20] sm:$0xf]
        %v957 = vld [vmem:[%s951 + $0x28] sm:$0xf]
        %958 = vst.msk [vmem:[#allocation4] sm:$0xf] %vm639, %v952
        %959 = vst.msk [vmem:[#allocation4 + $0x4] sm:$0xf] %vm639, %v953
        %960 = vst.msk [vmem:[#allocation4 + $0x8] sm:$0xf] %vm639, %v954
        %961 = vst.msk [vmem:[#allocation4 + $0xc] sm:$0xf] %vm639, %v955
        %962 = vst.msk [vmem:[#allocation4 + $0x10] sm:$0xf] %vm639, %v956
        %963 = vst.msk [vmem:[#allocation4 + $0x14] sm:$0xf] %vm639, %v957
        %v964 = vld [vmem:[%s951] sm:$0xf]
        %v965 = vld [vmem:[%s951 + $0x4] sm:$0x1]
        %v966 = vld [vmem:[%s951 + $0x8] sm:$0xf]
        %v967 = vld [vmem:[%s951 + $0xc] sm:$0x1]
        %v968 = vld [vmem:[%s951 + $0x10] sm:$0xf]
        %v969 = vld [vmem:[%s951 + $0x14] sm:$0x1]
        %v970 = vld [vmem:[%s951 + $0x18] sm:$0xf]
        %v971 = vld [vmem:[%s951 + $0x1c] sm:$0x1]
        %v972 = vld [vmem:[%s951 + $0x20] sm:$0xf]
        %v973 = vld [vmem:[%s951 + $0x24] sm:$0x1]
        %v974 = vld [vmem:[%s951 + $0x28] sm:$0xf]
        %v975 = vld [vmem:[%s951 + $0x2c] sm:$0x1]
        %v977 = vshrl.u32 %v964, 16
        %v979 = vrot.slane %v977, 4
        %v980 = vshll.u32 %v964, 16
        %v982 = vrot.slane %v980, 5
        %v983 = vor.u32 %v979, %v982
        %v984 = vrot.slane %v983, 4
        %v986 = vshll.u32 %v965, 16
        %v988 = vrot.slane %v986, 5
        %v989 = vsel %vm660, %v984, %v988
        %v991 = vshrl.u32 %v966, 16
        %v993 = vrot.slane %v991, 4
        %v994 = vshll.u32 %v966, 16
        %v996 = vrot.slane %v994, 5
        %v997 = vor.u32 %v993, %v996
        %v998 = vrot.slane %v997, 4
        %v1000 = vshll.u32 %v967, 16
        %v1002 = vrot.slane %v1000, 5
        %v1003 = vsel %vm660, %v998, %v1002
        %v1005 = vshrl.u32 %v968, 16
        %v1007 = vrot.slane %v1005, 4
        %v1008 = vshll.u32 %v968, 16
        %v1010 = vrot.slane %v1008, 5
        %v1011 = vor.u32 %v1007, %v1010
        %v1012 = vrot.slane %v1011, 4
        %v1014 = vshll.u32 %v969, 16
        %v1016 = vrot.slane %v1014, 5
        %v1017 = vsel %vm660, %v1012, %v1016
        %v1019 = vshrl.u32 %v970, 16
        %v1021 = vrot.slane %v1019, 4
        %v1022 = vshll.u32 %v970, 16
        %v1024 = vrot.slane %v1022, 5
        %v1025 = vor.u32 %v1021, %v1024
        %v1026 = vrot.slane %v1025, 4
        %v1028 = vshll.u32 %v971, 16
        %v1030 = vrot.slane %v1028, 5
        %v1031 = vsel %vm660, %v1026, %v1030
        %v1033 = vshrl.u32 %v972, 16
        %v1035 = vrot.slane %v1033, 4
        %v1036 = vshll.u32 %v972, 16
        %v1038 = vrot.slane %v1036, 5
        %v1039 = vor.u32 %v1035, %v1038
        %v1040 = vrot.slane %v1039, 4
        %v1042 = vshll.u32 %v973, 16
        %v1044 = vrot.slane %v1042, 5
        %v1045 = vsel %vm660, %v1040, %v1044
        %v1047 = vshrl.u32 %v974, 16
        %v1049 = vrot.slane %v1047, 4
        %v1050 = vshll.u32 %v974, 16
        %v1052 = vrot.slane %v1050, 5
        %v1053 = vor.u32 %v1049, %v1052
        %v1054 = vrot.slane %v1053, 4
        %v1056 = vshll.u32 %v975, 16
        %v1058 = vrot.slane %v1056, 5
        %v1059 = vsel %vm660, %v1054, %v1058
        %1060 = vrot.lane.b32.xlu0 %v989, 4
        %v1061 = vpop.permute.xlu0 %1060
        %1062 = vrot.lane.b32.xlu0 %v1003, 4
        %v1063 = vpop.permute.xlu0 %1062
        %1064 = vrot.lane.b32.xlu0 %v1017, 4
        %v1065 = vpop.permute.xlu0 %1064
        %1066 = vrot.lane.b32.xlu0 %v1031, 4
        %v1067 = vpop.permute.xlu0 %1066
        %1068 = vrot.lane.b32.xlu0 %v1045, 4
        %v1069 = vpop.permute.xlu0 %1068
        %1070 = vrot.lane.b32.xlu0 %v1059, 4
        %v1071 = vpop.permute.xlu0 %1070
        %1078 = vst.msk [vmem:[#allocation4] sm:$0xf] %vm763, %v1061
        %1079 = vst.msk [vmem:[#allocation4 + $0x4] sm:$0xf] %vm763, %v1063
        %1080 = vst.msk [vmem:[#allocation4 + $0x8] sm:$0xf] %vm763, %v1065
        %1081 = vst.msk [vmem:[#allocation4 + $0xc] sm:$0xf] %vm763, %v1067
        %1082 = vst.msk [vmem:[#allocation4 + $0x10] sm:$0xf] %vm763, %v1069
        %1083 = vst.msk [vmem:[#allocation4 + $0x14] sm:$0xf] %vm763, %v1071
        %v1084 = vld [vmem:[%s951] sm:$0xe]
        %v1085 = vld [vmem:[%s951 + $0x4] sm:$0x1]
        %v1086 = vld [vmem:[%s951 + $0x8] sm:$0xe]
        %v1087 = vld [vmem:[%s951 + $0xc] sm:$0x1]
        %v1088 = vld [vmem:[%s951 + $0x10] sm:$0xe]
        %v1089 = vld [vmem:[%s951 + $0x14] sm:$0x1]
        %v1090 = vld [vmem:[%s951 + $0x18] sm:$0xe]
        %v1091 = vld [vmem:[%s951 + $0x1c] sm:$0x1]
        %v1092 = vld [vmem:[%s951 + $0x20] sm:$0xe]
        %v1093 = vld [vmem:[%s951 + $0x24] sm:$0x1]
        %v1094 = vld [vmem:[%s951 + $0x28] sm:$0xe]
        %v1095 = vld [vmem:[%s951 + $0x2c] sm:$0x1]
        %v1108 = vrot.slane %v1084, 5
        %v1109 = vrot.slane %v1108, 4
        %v1110 = vrot.slane %v1085, 5
        %v1111 = vsel %vm796, %v1109, %v1110
        %v1112 = vrot.slane %v1086, 5
        %v1113 = vrot.slane %v1112, 4
        %v1114 = vrot.slane %v1087, 5
        %v1115 = vsel %vm796, %v1113, %v1114
        %v1116 = vrot.slane %v1088, 5
        %v1117 = vrot.slane %v1116, 4
        %v1118 = vrot.slane %v1089, 5
        %v1119 = vsel %vm796, %v1117, %v1118
        %v1120 = vrot.slane %v1090, 5
        %v1121 = vrot.slane %v1120, 4
        %v1122 = vrot.slane %v1091, 5
        %v1123 = vsel %vm796, %v1121, %v1122
        %v1124 = vrot.slane %v1092, 5
        %v1125 = vrot.slane %v1124, 4
        %v1126 = vrot.slane %v1093, 5
        %v1127 = vsel %vm796, %v1125, %v1126
        %v1128 = vrot.slane %v1094, 5
        %v1129 = vrot.slane %v1128, 4
        %v1130 = vrot.slane %v1095, 5
        %v1131 = vsel %vm796, %v1129, %v1130
        %1132 = vrot.lane.b32.xlu0 %v1111, 8
        %v1133 = vpop.permute.xlu0 %1132
        %1134 = vrot.lane.b32.xlu0 %v1115, 8
        %v1135 = vpop.permute.xlu0 %1134
        %1136 = vrot.lane.b32.xlu0 %v1119, 8
        %v1137 = vpop.permute.xlu0 %1136
        %1138 = vrot.lane.b32.xlu0 %v1123, 8
        %v1139 = vpop.permute.xlu0 %1138
        %1140 = vrot.lane.b32.xlu0 %v1127, 8
        %v1141 = vpop.permute.xlu0 %1140
        %1142 = vrot.lane.b32.xlu0 %v1131, 8
        %v1143 = vpop.permute.xlu0 %1142
        %1150 = vst.msk [vmem:[#allocation4] sm:$0xf] %vm839, %v1133
        %1151 = vst.msk [vmem:[#allocation4 + $0x4] sm:$0xf] %vm839, %v1135
        %1152 = vst.msk [vmem:[#allocation4 + $0x8] sm:$0xf] %vm839, %v1137
        %1153 = vst.msk [vmem:[#allocation4 + $0xc] sm:$0xf] %vm839, %v1139
        %1154 = vst.msk [vmem:[#allocation4 + $0x10] sm:$0xf] %vm839, %v1141
        %1155 = vst.msk [vmem:[#allocation4 + $0x14] sm:$0xf] %vm839, %v1143
        %v1156 = vld [vmem:[#allocation4] sm:$0xf]
        %v1157 = vld [vmem:[#allocation4 + $0x4] sm:$0xf]
        %v1158 = vld [vmem:[#allocation4 + $0x8] sm:$0xf]
        %v1159 = vld [vmem:[#allocation4 + $0xc] sm:$0xf]
        %v1160 = vld [vmem:[#allocation4 + $0x10] sm:$0xf]
        %v1161 = vld [vmem:[#allocation4 + $0x14] sm:$0xf]
        %s1162 = scalar_lea.vmem %s2, 8
        %v1163 = vld [vmem:[%s1162] sm:$0xf]
        %v1164 = vld [vmem:[%s1162 + $0x4] sm:$0x3]
        %v1171 = vunpack.c.l.b16 %v1156
        %v1172 = vunpack.c.l.b16 %v1157
        %v1173 = vunpack.c.l.b16 %v1158
        %v1174 = vunpack.c.l.b16 %v1159
        %v1175 = vunpack.c.l.b16 %v1160
        %v1176 = vunpack.c.l.b16 %v1161
        %v1177 = vpack.c.b16 %v1172, %v1171
        %v1178 = vpack.c.b16 %v1174, %v1173
        %v1179 = vpack.c.b16 %v1176, %v1175
        %v1182 = vunpack.c.l.b16 %v1163
        %v1183 = vunpack.c.l.b16 %v1164
        %v1184 = vpack.c.b16 %v1183, %v1182
        %v1186 = vsel %vm874, %v1177, 0
        %v1189 = vsel %vm874, %v1178, 0
        %v1192 = vsel %vm874, %v1179, 0
        %v1195 = vsel %vm884, %v1184, 0
        %1197 = vmatprep.subr.bf16.mxu0 0
        %1198 = vmatpush1.bf16.msra.mxu0 0
        %1199 = vmatprep.subr.bf16.mxu0 0
        %1200 = vmatpush1.bf16.msra.mxu0 0
        %1201 = vmatprep.subr.bf16.mxu0 0
        %1202 = vmatpush1.bf16.msra.mxu0 0
        %1203 = vmatprep.subr.bf16.mxu0 0
        %1204 = vmatpush1.bf16.msra.mxu0 0
        %1205 = vmatprep.subr.bf16.mxu0 0
        %1206 = vmatpush1.bf16.msra.mxu0 0
        %1207 = vmatprep.subr.bf16.mxu0 0
        %1208 = vmatpush1.bf16.msra.mxu0 0
        %1209 = vmatprep.subr.bf16.mxu0 0
        %1210 = vmatpush1.bf16.msra.mxu0 0
        %1211 = vmatprep.subr.bf16.mxu0 0
        %1212 = vmatpush1.bf16.msra.mxu0 %v1195
        %1213 = vmatprep.subr.bf16.mxu0 0
        %1214 = vmatpush2.bf16.msra.mxu0 0
        %1215 = vmatprep.subr.bf16.mxu0 0
        %1216 = vmatpush2.bf16.msra.mxu0 0
        %1217 = vmatprep.subr.bf16.mxu0 0
        %1218 = vmatpush2.bf16.msra.mxu0 0
        %1219 = vmatprep.subr.bf16.mxu0 0
        %1220 = vmatpush2.bf16.msra.mxu0 0
        %1221 = vmatprep.subr.bf16.mxu0 0
        %1222 = vmatpush2.bf16.msra.mxu0 0
        %1223 = vmatprep.subr.bf16.mxu0 0
        %1224 = vmatpush2.bf16.msra.mxu0 0
        %1225 = vmatprep.subr.bf16.mxu0 0
        %1226 = vmatpush2.bf16.msra.mxu0 0
        %1227 = vmatprep.subr.bf16.mxu0 0
        %1228 = vmatpush2.bf16.msra.mxu0 0
        %1229 = vmatprep.mubr.bf16.mxu0 0
        %1230 = vmatmul.mubr.bf16.gmra.mxu0 %v1186
        %v1231 = vpop.f32.mrf.mxu0
        %v1232 = vadd.f32 0.0, %v1231
        %v1233 = vpop.f32.mrf.mxu0
        %v1234 = vpop.f32.mrf.mxu0
        %v1235 = vadd.f32 0.0, %v1234
        %v1236 = vpop.f32.mrf.mxu0
        %1237 = vmatprep.mubr.bf16.mxu0 0
        %1238 = vmatmul.mubr.bf16.gmra.mxu0 %v1189
        %v1239 = vpop.f32.mrf.mxu0
        %v1240 = vadd.f32 0.0, %v1239
        %v1241 = vpop.f32.mrf.mxu0
        %v1242 = vpop.f32.mrf.mxu0
        %v1243 = vadd.f32 0.0, %v1242
        %v1244 = vpop.f32.mrf.mxu0
        %1245 = vmatprep.mubr.bf16.mxu0 0
        %1246 = vmatmul.mubr.bf16.gmra.mxu0 %v1192
        %v1247 = vpop.f32.mrf.mxu0
        %v1248 = vadd.f32 0.0, %v1247
        %v1249 = vpop.f32.mrf.mxu0
        %v1250 = vpop.f32.mrf.mxu0
        %v1251 = vadd.f32 0.0, %v1250
        %v1252 = vpop.f32.mrf.mxu0
        %1253 = vdwg.mxu0
        %v1254 = vld [vmem:[#allocation6] sm:$0xff]
        %v1255 = vld [vmem:[#allocation6 + $0x8] sm:$0xff]
        %v1256 = vld [vmem:[#allocation6 + $0x10] sm:$0xff]
        %v1257 = vld [vmem:[#allocation6 + $0x18] sm:$0xff]
        %v1258 = vld [vmem:[#allocation6 + $0x20] sm:$0xff]
        %v1259 = vld [vmem:[#allocation6 + $0x28] sm:$0xff]
        %v1260 = vadd.f32 %v1254, %v1232
        %v1261 = vadd.f32 %v1255, %v1235
        %v1262 = vadd.f32 %v1256, %v1240
        %v1263 = vadd.f32 %v1257, %v1243
        %v1264 = vadd.f32 %v1258, %v1248
        %v1265 = vadd.f32 %v1259, %v1251
        %1266 = vst [vmem:[#allocation6] sm:$0xff] %v1260
        %1267 = vst [vmem:[#allocation6 + $0x8] sm:$0xff] %v1261
        %1268 = vst [vmem:[#allocation6 + $0x10] sm:$0xff] %v1262
        %1269 = vst [vmem:[#allocation6 + $0x18] sm:$0xff] %v1263
        %1270 = vst [vmem:[#allocation6 + $0x20] sm:$0xff] %v1264
        %1271 = vst [vmem:[#allocation6 + $0x28] sm:$0xff] %v1265
        %s1272 = scalar_lea.vmem [#allocation2], 16
        %v1273 = vld [vmem:[%s1272] sm:$0xf]
        %v1274 = vld [vmem:[%s1272 + $0x8] sm:$0xf]
        %v1275 = vld [vmem:[%s1272 + $0x10] sm:$0xf]
        %v1276 = vld [vmem:[%s1272 + $0x18] sm:$0xf]
        %v1277 = vld [vmem:[%s1272 + $0x20] sm:$0xf]
        %v1278 = vld [vmem:[%s1272 + $0x28] sm:$0xf]
        %1279 = vst.msk [vmem:[#allocation4] sm:$0xf] %vm639, %v1273
        %1280 = vst.msk [vmem:[#allocation4 + $0x4] sm:$0xf] %vm639, %v1274
        %1281 = vst.msk [vmem:[#allocation4 + $0x8] sm:$0xf] %vm639, %v1275
        %1282 = vst.msk [vmem:[#allocation4 + $0xc] sm:$0xf] %vm639, %v1276
        %1283 = vst.msk [vmem:[#allocation4 + $0x10] sm:$0xf] %vm639, %v1277
        %1284 = vst.msk [vmem:[#allocation4 + $0x14] sm:$0xf] %vm639, %v1278
        %v1285 = vld [vmem:[%s1272] sm:$0xf]
        %v1286 = vld [vmem:[%s1272 + $0x4] sm:$0x1]
        %v1287 = vld [vmem:[%s1272 + $0x8] sm:$0xf]
        %v1288 = vld [vmem:[%s1272 + $0xc] sm:$0x1]
        %v1289 = vld [vmem:[%s1272 + $0x10] sm:$0xf]
        %v1290 = vld [vmem:[%s1272 + $0x14] sm:$0x1]
        %v1291 = vld [vmem:[%s1272 + $0x18] sm:$0xf]
        %v1292 = vld [vmem:[%s1272 + $0x1c] sm:$0x1]
        %v1293 = vld [vmem:[%s1272 + $0x20] sm:$0xf]
        %v1294 = vld [vmem:[%s1272 + $0x24] sm:$0x1]
        %v1295 = vld [vmem:[%s1272 + $0x28] sm:$0xf]
        %v1296 = vld [vmem:[%s1272 + $0x2c] sm:$0x1]
        %v1298 = vshrl.u32 %v1285, 16
        %v1300 = vrot.slane %v1298, 4
        %v1301 = vshll.u32 %v1285, 16
        %v1303 = vrot.slane %v1301, 5
        %v1304 = vor.u32 %v1300, %v1303
        %v1305 = vrot.slane %v1304, 4
        %v1307 = vshll.u32 %v1286, 16
        %v1309 = vrot.slane %v1307, 5
        %v1310 = vsel %vm660, %v1305, %v1309
        %v1312 = vshrl.u32 %v1287, 16
        %v1314 = vrot.slane %v1312, 4
        %v1315 = vshll.u32 %v1287, 16
        %v1317 = vrot.slane %v1315, 5
        %v1318 = vor.u32 %v1314, %v1317
        %v1319 = vrot.slane %v1318, 4
        %v1321 = vshll.u32 %v1288, 16
        %v1323 = vrot.slane %v1321, 5
        %v1324 = vsel %vm660, %v1319, %v1323
        %v1326 = vshrl.u32 %v1289, 16
        %v1328 = vrot.slane %v1326, 4
        %v1329 = vshll.u32 %v1289, 16
        %v1331 = vrot.slane %v1329, 5
        %v1332 = vor.u32 %v1328, %v1331
        %v1333 = vrot.slane %v1332, 4
        %v1335 = vshll.u32 %v1290, 16
        %v1337 = vrot.slane %v1335, 5
        %v1338 = vsel %vm660, %v1333, %v1337
        %v1340 = vshrl.u32 %v1291, 16
        %v1342 = vrot.slane %v1340, 4
        %v1343 = vshll.u32 %v1291, 16
        %v1345 = vrot.slane %v1343, 5
        %v1346 = vor.u32 %v1342, %v1345
        %v1347 = vrot.slane %v1346, 4
        %v1349 = vshll.u32 %v1292, 16
        %v1351 = vrot.slane %v1349, 5
        %v1352 = vsel %vm660, %v1347, %v1351
        %v1354 = vshrl.u32 %v1293, 16
        %v1356 = vrot.slane %v1354, 4
        %v1357 = vshll.u32 %v1293, 16
        %v1359 = vrot.slane %v1357, 5
        %v1360 = vor.u32 %v1356, %v1359
        %v1361 = vrot.slane %v1360, 4
        %v1363 = vshll.u32 %v1294, 16
        %v1365 = vrot.slane %v1363, 5
        %v1366 = vsel %vm660, %v1361, %v1365
        %v1368 = vshrl.u32 %v1295, 16
        %v1370 = vrot.slane %v1368, 4
        %v1371 = vshll.u32 %v1295, 16
        %v1373 = vrot.slane %v1371, 5
        %v1374 = vor.u32 %v1370, %v1373
        %v1375 = vrot.slane %v1374, 4
        %v1377 = vshll.u32 %v1296, 16
        %v1379 = vrot.slane %v1377, 5
        %v1380 = vsel %vm660, %v1375, %v1379
        %1381 = vrot.lane.b32.xlu0 %v1310, 4
        %v1382 = vpop.permute.xlu0 %1381
        %1383 = vrot.lane.b32.xlu0 %v1324, 4
        %v1384 = vpop.permute.xlu0 %1383
        %1385 = vrot.lane.b32.xlu0 %v1338, 4
        %v1386 = vpop.permute.xlu0 %1385
        %1387 = vrot.lane.b32.xlu0 %v1352, 4
        %v1388 = vpop.permute.xlu0 %1387
        %1389 = vrot.lane.b32.xlu0 %v1366, 4
        %v1390 = vpop.permute.xlu0 %1389
        %1391 = vrot.lane.b32.xlu0 %v1380, 4
        %v1392 = vpop.permute.xlu0 %1391
        %1399 = vst.msk [vmem:[#allocation4] sm:$0xf] %vm763, %v1382
        %1400 = vst.msk [vmem:[#allocation4 + $0x4] sm:$0xf] %vm763, %v1384
        %1401 = vst.msk [vmem:[#allocation4 + $0x8] sm:$0xf] %vm763, %v1386
        %1402 = vst.msk [vmem:[#allocation4 + $0xc] sm:$0xf] %vm763, %v1388
        %1403 = vst.msk [vmem:[#allocation4 + $0x10] sm:$0xf] %vm763, %v1390
        %1404 = vst.msk [vmem:[#allocation4 + $0x14] sm:$0xf] %vm763, %v1392
        %v1405 = vld [vmem:[%s1272] sm:$0xe]
        %v1406 = vld [vmem:[%s1272 + $0x4] sm:$0x1]
        %v1407 = vld [vmem:[%s1272 + $0x8] sm:$0xe]
        %v1408 = vld [vmem:[%s1272 + $0xc] sm:$0x1]
        %v1409 = vld [vmem:[%s1272 + $0x10] sm:$0xe]
        %v1410 = vld [vmem:[%s1272 + $0x14] sm:$0x1]
        %v1411 = vld [vmem:[%s1272 + $0x18] sm:$0xe]
        %v1412 = vld [vmem:[%s1272 + $0x1c] sm:$0x1]
        %v1413 = vld [vmem:[%s1272 + $0x20] sm:$0xe]
        %v1414 = vld [vmem:[%s1272 + $0x24] sm:$0x1]
        %v1415 = vld [vmem:[%s1272 + $0x28] sm:$0xe]
        %v1416 = vld [vmem:[%s1272 + $0x2c] sm:$0x1]
        %v1429 = vrot.slane %v1405, 5
        %v1430 = vrot.slane %v1429, 4
        %v1431 = vrot.slane %v1406, 5
        %v1432 = vsel %vm796, %v1430, %v1431
        %v1433 = vrot.slane %v1407, 5
        %v1434 = vrot.slane %v1433, 4
        %v1435 = vrot.slane %v1408, 5
        %v1436 = vsel %vm796, %v1434, %v1435
        %v1437 = vrot.slane %v1409, 5
        %v1438 = vrot.slane %v1437, 4
        %v1439 = vrot.slane %v1410, 5
        %v1440 = vsel %vm796, %v1438, %v1439
        %v1441 = vrot.slane %v1411, 5
        %v1442 = vrot.slane %v1441, 4
        %v1443 = vrot.slane %v1412, 5
        %v1444 = vsel %vm796, %v1442, %v1443
        %v1445 = vrot.slane %v1413, 5
        %v1446 = vrot.slane %v1445, 4
        %v1447 = vrot.slane %v1414, 5
        %v1448 = vsel %vm796, %v1446, %v1447
        %v1449 = vrot.slane %v1415, 5
        %v1450 = vrot.slane %v1449, 4
        %v1451 = vrot.slane %v1416, 5
        %v1452 = vsel %vm796, %v1450, %v1451
        %1453 = vrot.lane.b32.xlu0 %v1432, 8
        %v1454 = vpop.permute.xlu0 %1453
        %1455 = vrot.lane.b32.xlu0 %v1436, 8
        %v1456 = vpop.permute.xlu0 %1455
        %1457 = vrot.lane.b32.xlu0 %v1440, 8
        %v1458 = vpop.permute.xlu0 %1457
        %1459 = vrot.lane.b32.xlu0 %v1444, 8
        %v1460 = vpop.permute.xlu0 %1459
        %1461 = vrot.lane.b32.xlu0 %v1448, 8
        %v1462 = vpop.permute.xlu0 %1461
        %1463 = vrot.lane.b32.xlu0 %v1452, 8
        %v1464 = vpop.permute.xlu0 %1463
        %1471 = vst.msk [vmem:[#allocation4] sm:$0xf] %vm839, %v1454
        %1472 = vst.msk [vmem:[#allocation4 + $0x4] sm:$0xf] %vm839, %v1456
        %1473 = vst.msk [vmem:[#allocation4 + $0x8] sm:$0xf] %vm839, %v1458
        %1474 = vst.msk [vmem:[#allocation4 + $0xc] sm:$0xf] %vm839, %v1460
        %1475 = vst.msk [vmem:[#allocation4 + $0x10] sm:$0xf] %vm839, %v1462
        %1476 = vst.msk [vmem:[#allocation4 + $0x14] sm:$0xf] %vm839, %v1464
        %v1477 = vld [vmem:[#allocation4] sm:$0xf]
        %v1478 = vld [vmem:[#allocation4 + $0x4] sm:$0xf]
        %v1479 = vld [vmem:[#allocation4 + $0x8] sm:$0xf]
        %v1480 = vld [vmem:[#allocation4 + $0xc] sm:$0xf]
        %v1481 = vld [vmem:[#allocation4 + $0x10] sm:$0xf]
        %v1482 = vld [vmem:[#allocation4 + $0x14] sm:$0xf]
        %s1483 = scalar_lea.vmem %s2, 16
        %v1484 = vld [vmem:[%s1483] sm:$0xf]
        %v1485 = vld [vmem:[%s1483 + $0x4] sm:$0x3]
        %v1492 = vunpack.c.l.b16 %v1477
        %v1493 = vunpack.c.l.b16 %v1478
        %v1494 = vunpack.c.l.b16 %v1479
        %v1495 = vunpack.c.l.b16 %v1480
        %v1496 = vunpack.c.l.b16 %v1481
        %v1497 = vunpack.c.l.b16 %v1482
        %v1498 = vpack.c.b16 %v1493, %v1492
        %v1499 = vpack.c.b16 %v1495, %v1494
        %v1500 = vpack.c.b16 %v1497, %v1496
        %v1503 = vunpack.c.l.b16 %v1484
        %v1504 = vunpack.c.l.b16 %v1485
        %v1505 = vpack.c.b16 %v1504, %v1503
        %v1507 = vsel %vm874, %v1498, 0
        %v1510 = vsel %vm874, %v1499, 0
        %v1513 = vsel %vm874, %v1500, 0
        %v1516 = vsel %vm884, %v1505, 0
        %1518 = vmatprep.subr.bf16.mxu0 0
        %1519 = vmatpush1.bf16.msra.mxu0 0
        %1520 = vmatprep.subr.bf16.mxu0 0
        %1521 = vmatpush1.bf16.msra.mxu0 0
        %1522 = vmatprep.subr.bf16.mxu0 0
        %1523 = vmatpush1.bf16.msra.mxu0 0
        %1524 = vmatprep.subr.bf16.mxu0 0
        %1525 = vmatpush1.bf16.msra.mxu0 0
        %1526 = vmatprep.subr.bf16.mxu0 0
        %1527 = vmatpush1.bf16.msra.mxu0 0
        %1528 = vmatprep.subr.bf16.mxu0 0
        %1529 = vmatpush1.bf16.msra.mxu0 0
        %1530 = vmatprep.subr.bf16.mxu0 0
        %1531 = vmatpush1.bf16.msra.mxu0 0
        %1532 = vmatprep.subr.bf16.mxu0 0
        %1533 = vmatpush1.bf16.msra.mxu0 %v1516
        %1534 = vmatprep.subr.bf16.mxu0 0
        %1535 = vmatpush2.bf16.msra.mxu0 0
        %1536 = vmatprep.subr.bf16.mxu0 0
        %1537 = vmatpush2.bf16.msra.mxu0 0
        %1538 = vmatprep.subr.bf16.mxu0 0
        %1539 = vmatpush2.bf16.msra.mxu0 0
        %1540 = vmatprep.subr.bf16.mxu0 0
        %1541 = vmatpush2.bf16.msra.mxu0 0
        %1542 = vmatprep.subr.bf16.mxu0 0
        %1543 = vmatpush2.bf16.msra.mxu0 0
        %1544 = vmatprep.subr.bf16.mxu0 0
        %1545 = vmatpush2.bf16.msra.mxu0 0
        %1546 = vmatprep.subr.bf16.mxu0 0
        %1547 = vmatpush2.bf16.msra.mxu0 0
        %1548 = vmatprep.subr.bf16.mxu0 0
        %1549 = vmatpush2.bf16.msra.mxu0 0
        %1550 = vmatprep.mubr.bf16.mxu0 0
        %1551 = vmatmul.mubr.bf16.gmra.mxu0 %v1507
        %v1552 = vpop.f32.mrf.mxu0
        %v1553 = vadd.f32 0.0, %v1552
        %v1554 = vpop.f32.mrf.mxu0
        %v1555 = vpop.f32.mrf.mxu0
        %v1556 = vadd.f32 0.0, %v1555
        %v1557 = vpop.f32.mrf.mxu0
        %1558 = vmatprep.mubr.bf16.mxu0 0
        %1559 = vmatmul.mubr.bf16.gmra.mxu0 %v1510
        %v1560 = vpop.f32.mrf.mxu0
        %v1561 = vadd.f32 0.0, %v1560
        %v1562 = vpop.f32.mrf.mxu0
        %v1563 = vpop.f32.mrf.mxu0
        %v1564 = vadd.f32 0.0, %v1563
        %v1565 = vpop.f32.mrf.mxu0
        %1566 = vmatprep.mubr.bf16.mxu0 0
        %1567 = vmatmul.mubr.bf16.gmra.mxu0 %v1513
        %v1568 = vpop.f32.mrf.mxu0
        %v1569 = vadd.f32 0.0, %v1568
        %v1570 = vpop.f32.mrf.mxu0
        %v1571 = vpop.f32.mrf.mxu0
        %v1572 = vadd.f32 0.0, %v1571
        %v1573 = vpop.f32.mrf.mxu0
        %1574 = vdwg.mxu0
        %v1575 = vld [vmem:[#allocation6] sm:$0xff]
        %v1576 = vld [vmem:[#allocation6 + $0x8] sm:$0xff]
        %v1577 = vld [vmem:[#allocation6 + $0x10] sm:$0xff]
        %v1578 = vld [vmem:[#allocation6 + $0x18] sm:$0xff]
        %v1579 = vld [vmem:[#allocation6 + $0x20] sm:$0xff]
        %v1580 = vld [vmem:[#allocation6 + $0x28] sm:$0xff]
        %v1581 = vadd.f32 %v1575, %v1553
        %v1582 = vadd.f32 %v1576, %v1556
        %v1583 = vadd.f32 %v1577, %v1561
        %v1584 = vadd.f32 %v1578, %v1564
        %v1585 = vadd.f32 %v1579, %v1569
        %v1586 = vadd.f32 %v1580, %v1572
        %1587 = vst [vmem:[#allocation6] sm:$0xff] %v1581
        %1588 = vst [vmem:[#allocation6 + $0x8] sm:$0xff] %v1582
        %1589 = vst [vmem:[#allocation6 + $0x10] sm:$0xff] %v1583
        %1590 = vst [vmem:[#allocation6 + $0x18] sm:$0xff] %v1584
        %1591 = vst [vmem:[#allocation6 + $0x20] sm:$0xff] %v1585
        %1592 = vst [vmem:[#allocation6 + $0x28] sm:$0xff] %v1586
        %v1593 = vld [vmem:[#allocation6] sm:$0xff]
        %v1594 = vld [vmem:[#allocation6 + $0x8] sm:$0xff]
        %v1595 = vld [vmem:[#allocation6 + $0x10] sm:$0xff]
        %v1596 = vld [vmem:[#allocation6 + $0x18] sm:$0xff]
        %v1597 = vld [vmem:[#allocation6 + $0x20] sm:$0xff]
        %v1598 = vld [vmem:[#allocation6 + $0x28] sm:$0xff]
        %v1599 = vld [vmem:[%s3] sm:$0x1]
        %v1601 = vlaneseq
        %v1602 = vshrl.u32 %v1601, 7
        %v1603 = vsub.s32 0, %v1602
        %v1604 = vrot.slane %v1599, %v1603
        %v1606 = vmul.f32 %v1593, %v1604
        %v1607 = vmul.f32 %v1594, %v1604
        %v1608 = vmul.f32 %v1595, %v1604
        %v1609 = vmul.f32 %v1596, %v1604
        %v1610 = vmul.f32 %v1597, %v1604
        %v1611 = vmul.f32 %v1598, %v1604
        %v1612 = vld [vmem:[%s4] sm:$0x1]
        %v1614 = vlaneseq
        %v1615 = vshrl.u32 %v1614, 7
        %v1616 = vsub.s32 0, %v1615
        %v1617 = vrot.slane %v1612, %v1616
        %v1619 = vadd.f32 %v1606, %v1617
        %v1620 = vadd.f32 %v1607, %v1617
        %v1621 = vadd.f32 %v1608, %v1617
        %v1622 = vadd.f32 %v1609, %v1617
        %v1623 = vadd.f32 %v1610, %v1617
        %v1624 = vadd.f32 %v1611, %v1617
        %v1625 = vmax.f32 %v1619, 0.0
        %v1626 = vmax.f32 %v1620, 0.0
        %v1627 = vmax.f32 %v1621, 0.0
        %v1628 = vmax.f32 %v1622, 0.0
        %v1629 = vmax.f32 %v1623, 0.0
        %v1630 = vmax.f32 %v1624, 0.0
        %vm1631 = vcmask 1040384
        %vm1632 = vmand %vm1631, %vm386
        %v1633 = vld [vmem:[#allocation3] sm:$0x1]
        %v1634 = vsel %vm1632, 0, %v1633
        %1635 = vst [vmem:[#allocation3] sm:$0x1] %v1634
        %v1636 = vld [vmem:[#allocation3 + $0x8] sm:$0x1]
        %v1637 = vsel %vm1632, 0, %v1636
        %1638 = vst [vmem:[#allocation3 + $0x8] sm:$0x1] %v1637
        %v1639 = vld [vmem:[#allocation3 + $0x10] sm:$0x1]
        %v1640 = vsel %vm1632, 0, %v1639
        %1641 = vst [vmem:[#allocation3 + $0x10] sm:$0x1] %v1640
        %v1642 = vld [vmem:[#allocation3 + $0x18] sm:$0x1]
        %v1643 = vsel %vm1632, 0, %v1642
        %1644 = vst [vmem:[#allocation3 + $0x18] sm:$0x1] %v1643
        %v1645 = vld [vmem:[#allocation3 + $0x20] sm:$0x1]
        %v1646 = vsel %vm1632, 0, %v1645
        %1647 = vst [vmem:[#allocation3 + $0x20] sm:$0x1] %v1646
        %v1648 = vld [vmem:[#allocation3 + $0x28] sm:$0x1]
        %v1649 = vsel %vm1632, 0, %v1648
        %1650 = vst [vmem:[#allocation3 + $0x28] sm:$0x1] %v1649
        %vm1651 = vmand %vm1631, %vm412
        %v1652 = vld [vmem:[#allocation3 + $0x4] sm:$0x1]
        %v1653 = vsel %vm1651, 0, %v1652
        %1654 = vst [vmem:[#allocation3 + $0x4] sm:$0x1] %v1653
        %v1655 = vld [vmem:[#allocation3 + $0xc] sm:$0x1]
        %v1656 = vsel %vm1651, 0, %v1655
        %1657 = vst [vmem:[#allocation3 + $0xc] sm:$0x1] %v1656
        %v1658 = vld [vmem:[#allocation3 + $0x14] sm:$0x1]
        %v1659 = vsel %vm1651, 0, %v1658
        %1660 = vst [vmem:[#allocation3 + $0x14] sm:$0x1] %v1659
        %v1661 = vld [vmem:[#allocation3 + $0x1c] sm:$0x1]
        %v1662 = vsel %vm1651, 0, %v1661
        %1663 = vst [vmem:[#allocation3 + $0x1c] sm:$0x1] %v1662
        %v1664 = vld [vmem:[#allocation3 + $0x24] sm:$0x1]
        %v1665 = vsel %vm1651, 0, %v1664
        %1666 = vst [vmem:[#allocation3 + $0x24] sm:$0x1] %v1665
        %v1667 = vld [vmem:[#allocation3 + $0x2c] sm:$0x1]
        %v1668 = vsel %vm1651, 0, %v1667
        %1669 = vst [vmem:[#allocation3 + $0x2c] sm:$0x1] %v1668
        %v1670 = vpack.c.bf16 %v1626, %v1625
        %v1671 = vpack.c.bf16 %v1628, %v1627
        %v1672 = vpack.c.bf16 %v1630, %v1629
        %v1676 = vunpack.c.l.b16 %v1670
        %v1677 = vunpack.c.h.b16 %v1670
        %v1678 = vunpack.c.l.b16 %v1671
        %v1679 = vunpack.c.h.b16 %v1671
        %v1680 = vunpack.c.l.b16 %v1672
        %v1681 = vunpack.c.h.b16 %v1672
        %v1682 = vpack.c.b16 %v1676, %v1676
        %v1683 = vpack.c.b16 %v1677, %v1677
        %v1684 = vpack.c.b16 %v1678, %v1678
        %v1685 = vpack.c.b16 %v1679, %v1679
        %v1686 = vpack.c.b16 %v1680, %v1680
        %v1687 = vpack.c.b16 %v1681, %v1681
        %v1689 = vshrl.u32 %v1682, 16
        %v1691 = vrot.slane %v1689, 7
        %v1692 = vshll.u32 %v1682, 16
        %v1694 = vor.u32 %v1691, %v1692
        %v1695 = vrot.slane %v1691, 4
        %v1697 = vshrl.u32 %v1683, 16
        %v1699 = vrot.slane %v1697, 7
        %v1700 = vshll.u32 %v1683, 16
        %v1702 = vor.u32 %v1699, %v1700
        %v1703 = vrot.slane %v1699, 4
        %v1705 = vshrl.u32 %v1684, 16
        %v1707 = vrot.slane %v1705, 7
        %v1708 = vshll.u32 %v1684, 16
        %v1710 = vor.u32 %v1707, %v1708
        %v1711 = vrot.slane %v1707, 4
        %v1713 = vshrl.u32 %v1685, 16
        %v1715 = vrot.slane %v1713, 7
        %v1716 = vshll.u32 %v1685, 16
        %v1718 = vor.u32 %v1715, %v1716
        %v1719 = vrot.slane %v1715, 4
        %v1721 = vshrl.u32 %v1686, 16
        %v1723 = vrot.slane %v1721, 7
        %v1724 = vshll.u32 %v1686, 16
        %v1726 = vor.u32 %v1723, %v1724
        %v1727 = vrot.slane %v1723, 4
        %v1729 = vshrl.u32 %v1687, 16
        %v1731 = vrot.slane %v1729, 7
        %v1732 = vshll.u32 %v1687, 16
        %v1734 = vor.u32 %v1731, %v1732
        %v1735 = vrot.slane %v1731, 4
        %vm1748 = vcmask 1043456
        %vm1749 = vmand %vm1748, %vm412
        %v1750 = vld [vmem:[#allocation3] sm:$0xf]
        %v1751 = vsel %vm1749, %v1694, %v1750
        %1752 = vst [vmem:[#allocation3] sm:$0xf] %v1751
        %v1753 = vld [vmem:[#allocation3 + $0x4] sm:$0x1]
        %v1754 = vsel %vm1632, %v1695, %v1753
        %1755 = vst [vmem:[#allocation3 + $0x4] sm:$0x1] %v1754
        %v1756 = vld [vmem:[#allocation3 + $0x8] sm:$0xf]
        %v1757 = vsel %vm1749, %v1702, %v1756
        %1758 = vst [vmem:[#allocation3 + $0x8] sm:$0xf] %v1757
        %v1759 = vld [vmem:[#allocation3 + $0xc] sm:$0x1]
        %v1760 = vsel %vm1632, %v1703, %v1759
        %1761 = vst [vmem:[#allocation3 + $0xc] sm:$0x1] %v1760
        %v1762 = vld [vmem:[#allocation3 + $0x10] sm:$0xf]
        %v1763 = vsel %vm1749, %v1710, %v1762
        %1764 = vst [vmem:[#allocation3 + $0x10] sm:$0xf] %v1763
        %v1765 = vld [vmem:[#allocation3 + $0x14] sm:$0x1]
        %v1766 = vsel %vm1632, %v1711, %v1765
        %1767 = vst [vmem:[#allocation3 + $0x14] sm:$0x1] %v1766
        %v1768 = vld [vmem:[#allocation3 + $0x18] sm:$0xf]
        %v1769 = vsel %vm1749, %v1718, %v1768
        %1770 = vst [vmem:[#allocation3 + $0x18] sm:$0xf] %v1769
        %v1771 = vld [vmem:[#allocation3 + $0x1c] sm:$0x1]
        %v1772 = vsel %vm1632, %v1719, %v1771
        %1773 = vst [vmem:[#allocation3 + $0x1c] sm:$0x1] %v1772
        %v1774 = vld [vmem:[#allocation3 + $0x20] sm:$0xf]
        %v1775 = vsel %vm1749, %v1726, %v1774
        %1776 = vst [vmem:[#allocation3 + $0x20] sm:$0xf] %v1775
        %v1777 = vld [vmem:[#allocation3 + $0x24] sm:$0x1]
        %v1778 = vsel %vm1632, %v1727, %v1777
        %1779 = vst [vmem:[#allocation3 + $0x24] sm:$0x1] %v1778
        %v1780 = vld [vmem:[#allocation3 + $0x28] sm:$0xf]
        %v1781 = vsel %vm1749, %v1734, %v1780
        %1782 = vst [vmem:[#allocation3 + $0x28] sm:$0xf] %v1781
        %v1783 = vld [vmem:[#allocation3 + $0x2c] sm:$0x1]
        %v1784 = vsel %vm1632, %v1735, %v1783
        %1785 = vst [vmem:[#allocation3 + $0x2c] sm:$0x1] %v1784
        %p1786 = scmp.eq.s32.totalorder %s27, 0
        // Predicated region
        $region53: #{tpu_custom_call.1} parent=51 // pred_check
          %p1787 = pneg %p1786
        $region54: #{tpu_custom_call.1} parent=51 // pred_check_branch
          %1789 = sbr.rel (%p1787) target = $region56
        $region55: #{tpu_custom_call.1} parent=51 // pred_region
          %1790 = vst [vmem:[#allocation3] sm:$0xf] 0
          %1791 = vst [vmem:[#allocation3 + $0x4] sm:$0x1] 0
        $region56: #{tpu_custom_call.1} parent=51 // pred_fallthru
          _
        %p1792 = scmp.eq.s32.totalorder %s27, 1
        // Predicated region
        $region57: #{tpu_custom_call.1} parent=51 // pred_check
          %p1793 = pneg %p1792
        $region58: #{tpu_custom_call.1} parent=51 // pred_check_branch
          %1795 = sbr.rel (%p1793) target = $region60
        $region59: #{tpu_custom_call.1} parent=51 // pred_region
          %s1796 = scalar_lea.vmem [#allocation3], 40
          %1797 = vst [vmem:[%s1796] sm:$0xf] 0
          %1798 = vst [vmem:[%s1796 + $0x4] sm:$0x1] 0
        $region60: #{tpu_custom_call.1} parent=51 // pred_fallthru
          _
        %v1799 = vld [vmem:[#allocation3] sm:$0xf]
        %v1800 = vld [vmem:[#allocation3 + $0x8] sm:$0xf]
        %v1801 = vld [vmem:[#allocation3 + $0x10] sm:$0xf]
        %v1802 = vld [vmem:[#allocation3 + $0x18] sm:$0xf]
        %1803 = vst [vmem:[#allocation5] sm:$0xf] %v1799
        %1804 = vst [vmem:[#allocation5 + $0xc] sm:$0xf] %v1800
        %1805 = vst [vmem:[#allocation5 + $0x18] sm:$0xf] %v1801
        %1806 = vst [vmem:[#allocation5 + $0x24] sm:$0xf] %v1802
        %v1807 = vld [vmem:[#allocation3] sm:$0xf]
        %v1808 = vld [vmem:[#allocation3 + $0x4] sm:$0x1]
        %v1809 = vld [vmem:[#allocation3 + $0x8] sm:$0xf]
        %v1810 = vld [vmem:[#allocation3 + $0xc] sm:$0x1]
        %v1811 = vld [vmem:[#allocation3 + $0x10] sm:$0xf]
        %v1812 = vld [vmem:[#allocation3 + $0x14] sm:$0x1]
        %v1813 = vld [vmem:[#allocation3 + $0x18] sm:$0xf]
        %v1814 = vld [vmem:[#allocation3 + $0x1c] sm:$0x1]
        %v1816 = vshrl.u32 %v1807, 16
        %v1818 = vrot.slane %v1816, 4
        %v1819 = vshll.u32 %v1807, 16
        %v1821 = vrot.slane %v1819, 5
        %v1822 = vor.u32 %v1818, %v1821
        %v1823 = vrot.slane %v1822, 4
        %v1825 = vshll.u32 %v1808, 16
        %v1827 = vrot.slane %v1825, 5
        %v1828 = vsel %vm660, %v1823, %v1827
        %v1830 = vshrl.u32 %v1809, 16
        %v1832 = vrot.slane %v1830, 4
        %v1833 = vshll.u32 %v1809, 16
        %v1835 = vrot.slane %v1833, 5
        %v1836 = vor.u32 %v1832, %v1835
        %v1837 = vrot.slane %v1836, 4
        %v1839 = vshll.u32 %v1810, 16
        %v1841 = vrot.slane %v1839, 5
        %v1842 = vsel %vm660, %v1837, %v1841
        %v1844 = vshrl.u32 %v1811, 16
        %v1846 = vrot.slane %v1844, 4
        %v1847 = vshll.u32 %v1811, 16
        %v1849 = vrot.slane %v1847, 5
        %v1850 = vor.u32 %v1846, %v1849
        %v1851 = vrot.slane %v1850, 4
        %v1853 = vshll.u32 %v1812, 16
        %v1855 = vrot.slane %v1853, 5
        %v1856 = vsel %vm660, %v1851, %v1855
        %v1858 = vshrl.u32 %v1813, 16
        %v1860 = vrot.slane %v1858, 4
        %v1861 = vshll.u32 %v1813, 16
        %v1863 = vrot.slane %v1861, 5
        %v1864 = vor.u32 %v1860, %v1863
        %v1865 = vrot.slane %v1864, 4
        %v1867 = vshll.u32 %v1814, 16
        %v1869 = vrot.slane %v1867, 5
        %v1870 = vsel %vm660, %v1865, %v1869
        %1875 = vst [vmem:[#allocation5 + $0x4] sm:$0xf] %v1828
        %1876 = vst [vmem:[#allocation5 + $0x10] sm:$0xf] %v1842
        %1877 = vst [vmem:[#allocation5 + $0x1c] sm:$0xf] %v1856
        %1878 = vst [vmem:[#allocation5 + $0x28] sm:$0xf] %v1870
        %v1879 = vld [vmem:[#allocation3] sm:$0xe]
        %v1880 = vld [vmem:[#allocation3 + $0x4] sm:$0x1]
        %v1881 = vld [vmem:[#allocation3 + $0x8] sm:$0xe]
        %v1882 = vld [vmem:[#allocation3 + $0xc] sm:$0x1]
        %v1883 = vld [vmem:[#allocation3 + $0x10] sm:$0xe]
        %v1884 = vld [vmem:[#allocation3 + $0x14] sm:$0x1]
        %v1885 = vld [vmem:[#allocation3 + $0x18] sm:$0xe]
        %v1886 = vld [vmem:[#allocation3 + $0x1c] sm:$0x1]
        %v1895 = vrot.slane %v1879, 5
        %v1896 = vrot.slane %v1895, 4
        %v1897 = vrot.slane %v1880, 5
        %v1898 = vsel %vm796, %v1896, %v1897
        %v1899 = vrot.slane %v1881, 5
        %v1900 = vrot.slane %v1899, 4
        %v1901 = vrot.slane %v1882, 5
        %v1902 = vsel %vm796, %v1900, %v1901
        %v1903 = vrot.slane %v1883, 5
        %v1904 = vrot.slane %v1903, 4
        %v1905 = vrot.slane %v1884, 5
        %v1906 = vsel %vm796, %v1904, %v1905
        %v1907 = vrot.slane %v1885, 5
        %v1908 = vrot.slane %v1907, 4
        %v1909 = vrot.slane %v1886, 5
        %v1910 = vsel %vm796, %v1908, %v1909
        %1915 = vst [vmem:[#allocation5 + $0x8] sm:$0xf] %v1898
        %1916 = vst [vmem:[#allocation5 + $0x14] sm:$0xf] %v1902
        %1917 = vst [vmem:[#allocation5 + $0x20] sm:$0xf] %v1906
        %1918 = vst [vmem:[#allocation5 + $0x2c] sm:$0xf] %v1910
        %v1919 = vld [vmem:[#allocation5] sm:$0xff]
        %v1920 = vld [vmem:[#allocation5 + $0x8] sm:$0xf]
        %v1921 = vld [vmem:[#allocation5 + $0xc] sm:$0xff]
        %v1922 = vld [vmem:[#allocation5 + $0x14] sm:$0xf]
        %v1923 = vld [vmem:[#allocation5 + $0x18] sm:$0xff]
        %v1924 = vld [vmem:[#allocation5 + $0x20] sm:$0xf]
        %v1925 = vld [vmem:[#allocation5 + $0x24] sm:$0xff]
        %v1926 = vld [vmem:[#allocation5 + $0x2c] sm:$0xf]
        %v1927 = vld [vmem:[%s5] sm:$0xf]
        %v1928 = vld [vmem:[%s5 + $0x4] sm:$0xf]
        %v1929 = vld [vmem:[%s5 + $0x8] sm:$0xf]
        %v1930 = vld [vmem:[%s5 + $0xc] sm:$0xf]
        %v1931 = vld [vmem:[%s5 + $0x10] sm:$0xf]
        %v1932 = vld [vmem:[%s5 + $0x14] sm:$0xf]
        %v1933 = vld [vmem:[%s5 + $0x18] sm:$0xf]
        %v1934 = vld [vmem:[%s5 + $0x1c] sm:$0xf]
        %v1935 = vld [vmem:[%s5 + $0x20] sm:$0xf]
        %v1936 = vld [vmem:[%s5 + $0x24] sm:$0xf]
        %v1937 = vld [vmem:[%s5 + $0x28] sm:$0xf]
        %v1938 = vld [vmem:[%s5 + $0x2c] sm:$0xf]
        %v1939 = vld [vmem:[%s5 + $0x30] sm:$0xf]
        %v1940 = vld [vmem:[%s5 + $0x34] sm:$0xf]
        %v1941 = vld [vmem:[%s5 + $0x38] sm:$0xf]
        %v1942 = vld [vmem:[%s5 + $0x3c] sm:$0xf]
        %v1943 = vld [vmem:[%s5 + $0x40] sm:$0xf]
        %v1944 = vld [vmem:[%s5 + $0x44] sm:$0xf]
        %v1945 = vld [vmem:[%s5 + $0x48] sm:$0xf]
        %v1946 = vld [vmem:[%s5 + $0x4c] sm:$0xf]
        %v1947 = vld [vmem:[%s5 + $0x50] sm:$0xf]
        %v1948 = vld [vmem:[%s5 + $0x54] sm:$0xf]
        %v1949 = vld [vmem:[%s5 + $0x58] sm:$0xf]
        %v1950 = vld [vmem:[%s5 + $0x5c] sm:$0xf]
        %v1951 = vld [vmem:[%s5 + $0x60] sm:$0xf]
        %v1952 = vld [vmem:[%s5 + $0x64] sm:$0xf]
        %v1953 = vld [vmem:[%s5 + $0x68] sm:$0xf]
        %v1954 = vld [vmem:[%s5 + $0x6c] sm:$0xf]
        %v1955 = vld [vmem:[%s5 + $0x70] sm:$0xf]
        %v1956 = vld [vmem:[%s5 + $0x74] sm:$0xf]
        %v1957 = vld [vmem:[%s5 + $0x78] sm:$0xf]
        %v1958 = vld [vmem:[%s5 + $0x7c] sm:$0xf]
        %v1959 = vld [vmem:[%s5 + $0x80] sm:$0xf]
        %v1960 = vld [vmem:[%s5 + $0x84] sm:$0xf]
        %v1961 = vld [vmem:[%s5 + $0x88] sm:$0xf]
        %v1962 = vld [vmem:[%s5 + $0x8c] sm:$0xf]
        %v1963 = vld [vmem:[%s5 + $0x90] sm:$0xf]
        %v1964 = vld [vmem:[%s5 + $0x94] sm:$0xf]
        %v1965 = vld [vmem:[%s5 + $0x98] sm:$0xf]
        %v1966 = vld [vmem:[%s5 + $0x9c] sm:$0xf]
        %v1967 = vld [vmem:[%s5 + $0xa0] sm:$0xf]
        %v1968 = vld [vmem:[%s5 + $0xa4] sm:$0xf]
        %v1969 = vld [vmem:[%s5 + $0xa8] sm:$0xf]
        %v1970 = vld [vmem:[%s5 + $0xac] sm:$0xf]
        %v1971 = vld [vmem:[%s5 + $0xb0] sm:$0xf]
        %v1972 = vld [vmem:[%s5 + $0xb4] sm:$0xf]
        %v1973 = vld [vmem:[%s5 + $0xb8] sm:$0xf]
        %v1974 = vld [vmem:[%s5 + $0xbc] sm:$0xf]
        %v1983 = vunpack.c.l.b16 %v1919
        %v1984 = vunpack.c.h.b16 %v1919
        %v1985 = vunpack.c.l.b16 %v1920
        %v1986 = vunpack.c.l.b16 %v1921
        %v1987 = vunpack.c.h.b16 %v1921
        %v1988 = vunpack.c.l.b16 %v1922
        %v1989 = vunpack.c.l.b16 %v1923
        %v1990 = vunpack.c.h.b16 %v1923
        %v1991 = vunpack.c.l.b16 %v1924
        %v1992 = vunpack.c.l.b16 %v1925
        %v1993 = vunpack.c.h.b16 %v1925
        %v1994 = vunpack.c.l.b16 %v1926
        %v1995 = vpack.c.b16 %v1986, %v1983
        %v1996 = vpack.c.b16 %v1987, %v1984
        %v1997 = vpack.c.b16 %v1988, %v1985
        %v1998 = vpack.c.b16 %v1992, %v1989
        %v1999 = vpack.c.b16 %v1993, %v1990
        %v2000 = vpack.c.b16 %v1994, %v1991
        %v2055 = vunpack.c.l.b16 %v1927
        %v2056 = vunpack.c.l.b16 %v1928
        %v2057 = vunpack.c.l.b16 %v1929
        %v2058 = vunpack.c.l.b16 %v1930
        %v2059 = vunpack.c.l.b16 %v1931
        %v2060 = vunpack.c.l.b16 %v1932
        %v2061 = vunpack.c.l.b16 %v1933
        %v2062 = vunpack.c.l.b16 %v1934
        %v2063 = vunpack.c.l.b16 %v1935
        %v2064 = vunpack.c.l.b16 %v1936
        %v2065 = vunpack.c.l.b16 %v1937
        %v2066 = vunpack.c.l.b16 %v1938
        %v2067 = vunpack.c.l.b16 %v1939
        %v2068 = vunpack.c.l.b16 %v1940
        %v2069 = vunpack.c.l.b16 %v1941
        %v2070 = vunpack.c.l.b16 %v1942
        %v2071 = vunpack.c.l.b16 %v1943
        %v2072 = vunpack.c.l.b16 %v1944
        %v2073 = vunpack.c.l.b16 %v1945
        %v2074 = vunpack.c.l.b16 %v1946
        %v2075 = vunpack.c.l.b16 %v1947
        %v2076 = vunpack.c.l.b16 %v1948
        %v2077 = vunpack.c.l.b16 %v1949
        %v2078 = vunpack.c.l.b16 %v1950
        %v2079 = vunpack.c.l.b16 %v1951
        %v2080 = vunpack.c.l.b16 %v1952
        %v2081 = vunpack.c.l.b16 %v1953
        %v2082 = vunpack.c.l.b16 %v1954
        %v2083 = vunpack.c.l.b16 %v1955
        %v2084 = vunpack.c.l.b16 %v1956
        %v2085 = vunpack.c.l.b16 %v1957
        %v2086 = vunpack.c.l.b16 %v1958
        %v2087 = vunpack.c.l.b16 %v1959
        %v2088 = vunpack.c.l.b16 %v1960
        %v2089 = vunpack.c.l.b16 %v1961
        %v2090 = vunpack.c.l.b16 %v1962
        %v2091 = vunpack.c.l.b16 %v1963
        %v2092 = vunpack.c.l.b16 %v1964
        %v2093 = vunpack.c.l.b16 %v1965
        %v2094 = vunpack.c.l.b16 %v1966
        %v2095 = vunpack.c.l.b16 %v1967
        %v2096 = vunpack.c.l.b16 %v1968
        %v2097 = vunpack.c.l.b16 %v1969
        %v2098 = vunpack.c.l.b16 %v1970
        %v2099 = vunpack.c.l.b16 %v1971
        %v2100 = vunpack.c.l.b16 %v1972
        %v2101 = vunpack.c.l.b16 %v1973
        %v2102 = vunpack.c.l.b16 %v1974
        %v2103 = vpack.c.b16 %v2056, %v2055
        %v2104 = vpack.c.b16 %v2058, %v2057
        %v2105 = vpack.c.b16 %v2060, %v2059
        %v2106 = vpack.c.b16 %v2062, %v2061
        %v2107 = vpack.c.b16 %v2064, %v2063
        %v2108 = vpack.c.b16 %v2066, %v2065
        %v2109 = vpack.c.b16 %v2068, %v2067
        %v2110 = vpack.c.b16 %v2070, %v2069
        %v2111 = vpack.c.b16 %v2072, %v2071
        %v2112 = vpack.c.b16 %v2074, %v2073
        %v2113 = vpack.c.b16 %v2076, %v2075
        %v2114 = vpack.c.b16 %v2078, %v2077
        %v2115 = vpack.c.b16 %v2080, %v2079
        %v2116 = vpack.c.b16 %v2082, %v2081
        %v2117 = vpack.c.b16 %v2084, %v2083
        %v2118 = vpack.c.b16 %v2086, %v2085
        %v2119 = vpack.c.b16 %v2088, %v2087
        %v2120 = vpack.c.b16 %v2090, %v2089
        %v2121 = vpack.c.b16 %v2092, %v2091
        %v2122 = vpack.c.b16 %v2094, %v2093
        %v2123 = vpack.c.b16 %v2096, %v2095
        %v2124 = vpack.c.b16 %v2098, %v2097
        %v2125 = vpack.c.b16 %v2100, %v2099
        %v2126 = vpack.c.b16 %v2102, %v2101
        %2151 = vmatprep.subr.bf16.mxu0 0
        %2152 = vmatpush1.bf16.msra.mxu0 %v2110
        %2153 = vmatprep.subr.bf16.mxu0 0
        %2154 = vmatpush1.bf16.msra.mxu0 %v2109
        %2155 = vmatprep.subr.bf16.mxu0 0
        %2156 = vmatpush1.bf16.msra.mxu0 %v2108
        %2157 = vmatprep.subr.bf16.mxu0 0
        %2158 = vmatpush1.bf16.msra.mxu0 %v2107
        %2159 = vmatprep.subr.bf16.mxu0 0
        %2160 = vmatpush1.bf16.msra.mxu0 %v2106
        %2161 = vmatprep.subr.bf16.mxu0 0
        %2162 = vmatpush1.bf16.msra.mxu0 %v2105
        %2163 = vmatprep.subr.bf16.mxu0 0
        %2164 = vmatpush1.bf16.msra.mxu0 %v2104
        %2165 = vmatprep.subr.bf16.mxu0 0
        %2166 = vmatpush1.bf16.msra.mxu0 %v2103
        %2167 = vmatprep.subr.bf16.mxu0 0
        %2168 = vmatpush2.bf16.msra.mxu0 %v2118
        %2169 = vmatprep.subr.bf16.mxu0 0
        %2170 = vmatpush2.bf16.msra.mxu0 %v2117
        %2171 = vmatprep.subr.bf16.mxu0 0
        %2172 = vmatpush2.bf16.msra.mxu0 %v2116
        %2173 = vmatprep.subr.bf16.mxu0 0
        %2174 = vmatpush2.bf16.msra.mxu0 %v2115
        %2175 = vmatprep.subr.bf16.mxu0 0
        %2176 = vmatpush2.bf16.msra.mxu0 %v2114
        %2177 = vmatprep.subr.bf16.mxu0 0
        %2178 = vmatpush2.bf16.msra.mxu0 %v2113
        %2179 = vmatprep.subr.bf16.mxu0 0
        %2180 = vmatpush2.bf16.msra.mxu0 %v2112
        %2181 = vmatprep.subr.bf16.mxu0 0
        %2182 = vmatpush2.bf16.msra.mxu0 %v2111
        %2183 = vmatprep.mubr.bf16.mxu0 %v1996
        %2184 = vmatmul.mubr.bf16.gmra.mxu0 %v1995
        %v2185 = vpop.f32.mrf.mxu0
        %v2186 = vadd.f32 0.0, %v2185
        %v2187 = vpop.f32.mrf.mxu0
        %v2188 = vpop.f32.mrf.mxu0
        %v2189 = vadd.f32 0.0, %v2188
        %v2190 = vpop.f32.mrf.mxu0
        %2191 = vmatprep.mubr.bf16.mxu0 %v1999
        %2192 = vmatmul.mubr.bf16.gmra.mxu0 %v1998
        %v2193 = vpop.f32.mrf.mxu0
        %v2194 = vadd.f32 0.0, %v2193
        %v2195 = vpop.f32.mrf.mxu0
        %v2196 = vpop.f32.mrf.mxu0
        %v2197 = vadd.f32 0.0, %v2196
        %v2198 = vpop.f32.mrf.mxu0
        %2199 = vdwg.mxu0
        %2200 = vmatprep.subr.bf16.mxu0 0
        %2201 = vmatpush1.bf16.msra.mxu0 %v2126
        %2202 = vmatprep.subr.bf16.mxu0 0
        %2203 = vmatpush1.bf16.msra.mxu0 %v2125
        %2204 = vmatprep.subr.bf16.mxu0 0
        %2205 = vmatpush1.bf16.msra.mxu0 %v2124
        %2206 = vmatprep.subr.bf16.mxu0 0
        %2207 = vmatpush1.bf16.msra.mxu0 %v2123
        %2208 = vmatprep.subr.bf16.mxu0 0
        %2209 = vmatpush1.bf16.msra.mxu0 %v2122
        %2210 = vmatprep.subr.bf16.mxu0 0
        %2211 = vmatpush1.bf16.msra.mxu0 %v2121
        %2212 = vmatprep.subr.bf16.mxu0 0
        %2213 = vmatpush1.bf16.msra.mxu0 %v2120
        %2214 = vmatprep.subr.bf16.mxu0 0
        %2215 = vmatpush1.bf16.msra.mxu0 %v2119
        %2216 = vmatprep.subr.bf16.mxu0 0
        %2217 = vmatpush2.bf16.msra.mxu0 0
        %2218 = vmatprep.subr.bf16.mxu0 0
        %2219 = vmatpush2.bf16.msra.mxu0 0
        %2220 = vmatprep.subr.bf16.mxu0 0
        %2221 = vmatpush2.bf16.msra.mxu0 0
        %2222 = vmatprep.subr.bf16.mxu0 0
        %2223 = vmatpush2.bf16.msra.mxu0 0
        %2224 = vmatprep.subr.bf16.mxu0 0
        %2225 = vmatpush2.bf16.msra.mxu0 0
        %2226 = vmatprep.subr.bf16.mxu0 0
        %2227 = vmatpush2.bf16.msra.mxu0 0
        %2228 = vmatprep.subr.bf16.mxu0 0
        %2229 = vmatpush2.bf16.msra.mxu0 0
        %2230 = vmatprep.subr.bf16.mxu0 0
        %2231 = vmatpush2.bf16.msra.mxu0 0
        %2232 = vmatprep.mubr.bf16.mxu0 0
        %2233 = vmatmul.mubr.bf16.gmra.mxu0 %v1997
        %v2234 = vpop.f32.mrf.mxu0
        %v2235 = vadd.f32 %v2186, %v2234
        %v2236 = vpop.f32.mrf.mxu0
        %v2237 = vpop.f32.mrf.mxu0
        %v2238 = vadd.f32 %v2189, %v2237
        %v2239 = vpop.f32.mrf.mxu0
        %2240 = vmatprep.mubr.bf16.mxu0 0
        %2241 = vmatmul.mubr.bf16.gmra.mxu0 %v2000
        %v2242 = vpop.f32.mrf.mxu0
        %v2243 = vadd.f32 %v2194, %v2242
        %v2244 = vpop.f32.mrf.mxu0
        %v2245 = vpop.f32.mrf.mxu0
        %v2246 = vadd.f32 %v2197, %v2245
        %v2247 = vpop.f32.mrf.mxu0
        %2248 = vdwg.mxu0
        %2249 = vst [vmem:[#allocation6] sm:$0xff] %v2235
        %2250 = vst [vmem:[#allocation6 + $0x8] sm:$0xff] %v2238
        %2251 = vst [vmem:[#allocation6 + $0x10] sm:$0xff] %v2243
        %2252 = vst [vmem:[#allocation6 + $0x18] sm:$0xff] %v2246
        %s2253 = scalar_lea.vmem [#allocation3], 8
        %v2254 = vld [vmem:[%s2253] sm:$0xf]
        %v2255 = vld [vmem:[%s2253 + $0x8] sm:$0xf]
        %v2256 = vld [vmem:[%s2253 + $0x10] sm:$0xf]
        %v2257 = vld [vmem:[%s2253 + $0x18] sm:$0xf]
        %2258 = vst [vmem:[#allocation5] sm:$0xf] %v2254
        %2259 = vst [vmem:[#allocation5 + $0xc] sm:$0xf] %v2255
        %2260 = vst [vmem:[#allocation5 + $0x18] sm:$0xf] %v2256
        %2261 = vst [vmem:[#allocation5 + $0x24] sm:$0xf] %v2257
        %v2262 = vld [vmem:[%s2253] sm:$0xf]
        %v2263 = vld [vmem:[%s2253 + $0x4] sm:$0x1]
        %v2264 = vld [vmem:[%s2253 + $0x8] sm:$0xf]
        %v2265 = vld [vmem:[%s2253 + $0xc] sm:$0x1]
        %v2266 = vld [vmem:[%s2253 + $0x10] sm:$0xf]
        %v2267 = vld [vmem:[%s2253 + $0x14] sm:$0x1]
        %v2268 = vld [vmem:[%s2253 + $0x18] sm:$0xf]
        %v2269 = vld [vmem:[%s2253 + $0x1c] sm:$0x1]
        %v2271 = vshrl.u32 %v2262, 16
        %v2273 = vrot.slane %v2271, 4
        %v2274 = vshll.u32 %v2262, 16
        %v2276 = vrot.slane %v2274, 5
        %v2277 = vor.u32 %v2273, %v2276
        %v2278 = vrot.slane %v2277, 4
        %v2280 = vshll.u32 %v2263, 16
        %v2282 = vrot.slane %v2280, 5
        %v2283 = vsel %vm660, %v2278, %v2282
        %v2285 = vshrl.u32 %v2264, 16
        %v2287 = vrot.slane %v2285, 4
        %v2288 = vshll.u32 %v2264, 16
        %v2290 = vrot.slane %v2288, 5
        %v2291 = vor.u32 %v2287, %v2290
        %v2292 = vrot.slane %v2291, 4
        %v2294 = vshll.u32 %v2265, 16
        %v2296 = vrot.slane %v2294, 5
        %v2297 = vsel %vm660, %v2292, %v2296
        %v2299 = vshrl.u32 %v2266, 16
        %v2301 = vrot.slane %v2299, 4
        %v2302 = vshll.u32 %v2266, 16
        %v2304 = vrot.slane %v2302, 5
        %v2305 = vor.u32 %v2301, %v2304
        %v2306 = vrot.slane %v2305, 4
        %v2308 = vshll.u32 %v2267, 16
        %v2310 = vrot.slane %v2308, 5
        %v2311 = vsel %vm660, %v2306, %v2310
        %v2313 = vshrl.u32 %v2268, 16
        %v2315 = vrot.slane %v2313, 4
        %v2316 = vshll.u32 %v2268, 16
        %v2318 = vrot.slane %v2316, 5
        %v2319 = vor.u32 %v2315, %v2318
        %v2320 = vrot.slane %v2319, 4
        %v2322 = vshll.u32 %v2269, 16
        %v2324 = vrot.slane %v2322, 5
        %v2325 = vsel %vm660, %v2320, %v2324
        %2330 = vst [vmem:[#allocation5 + $0x4] sm:$0xf] %v2283
        %2331 = vst [vmem:[#allocation5 + $0x10] sm:$0xf] %v2297
        %2332 = vst [vmem:[#allocation5 + $0x1c] sm:$0xf] %v2311
        %2333 = vst [vmem:[#allocation5 + $0x28] sm:$0xf] %v2325
        %v2334 = vld [vmem:[%s2253] sm:$0xe]
        %v2335 = vld [vmem:[%s2253 + $0x4] sm:$0x1]
        %v2336 = vld [vmem:[%s2253 + $0x8] sm:$0xe]
        %v2337 = vld [vmem:[%s2253 + $0xc] sm:$0x1]
        %v2338 = vld [vmem:[%s2253 + $0x10] sm:$0xe]
        %v2339 = vld [vmem:[%s2253 + $0x14] sm:$0x1]
        %v2340 = vld [vmem:[%s2253 + $0x18] sm:$0xe]
        %v2341 = vld [vmem:[%s2253 + $0x1c] sm:$0x1]
        %v2350 = vrot.slane %v2334, 5
        %v2351 = vrot.slane %v2350, 4
        %v2352 = vrot.slane %v2335, 5
        %v2353 = vsel %vm796, %v2351, %v2352
        %v2354 = vrot.slane %v2336, 5
        %v2355 = vrot.slane %v2354, 4
        %v2356 = vrot.slane %v2337, 5
        %v2357 = vsel %vm796, %v2355, %v2356
        %v2358 = vrot.slane %v2338, 5
        %v2359 = vrot.slane %v2358, 4
        %v2360 = vrot.slane %v2339, 5
        %v2361 = vsel %vm796, %v2359, %v2360
        %v2362 = vrot.slane %v2340, 5
        %v2363 = vrot.slane %v2362, 4
        %v2364 = vrot.slane %v2341, 5
        %v2365 = vsel %vm796, %v2363, %v2364
        %2370 = vst [vmem:[#allocation5 + $0x8] sm:$0xf] %v2353
        %2371 = vst [vmem:[#allocation5 + $0x14] sm:$0xf] %v2357
        %2372 = vst [vmem:[#allocation5 + $0x20] sm:$0xf] %v2361
        %2373 = vst [vmem:[#allocation5 + $0x2c] sm:$0xf] %v2365
        %v2374 = vld [vmem:[#allocation5] sm:$0xff]
        %v2375 = vld [vmem:[#allocation5 + $0x8] sm:$0xf]
        %v2376 = vld [vmem:[#allocation5 + $0xc] sm:$0xff]
        %v2377 = vld [vmem:[#allocation5 + $0x14] sm:$0xf]
        %v2378 = vld [vmem:[#allocation5 + $0x18] sm:$0xff]
        %v2379 = vld [vmem:[#allocation5 + $0x20] sm:$0xf]
        %v2380 = vld [vmem:[#allocation5 + $0x24] sm:$0xff]
        %v2381 = vld [vmem:[#allocation5 + $0x2c] sm:$0xf]
        %s2382 = scalar_lea.vmem %s5, 192
        %v2383 = vld [vmem:[%s2382] sm:$0xf]
        %v2384 = vld [vmem:[%s2382 + $0x4] sm:$0xf]
        %v2385 = vld [vmem:[%s2382 + $0x8] sm:$0xf]
        %v2386 = vld [vmem:[%s2382 + $0xc] sm:$0xf]
        %v2387 = vld [vmem:[%s2382 + $0x10] sm:$0xf]
        %v2388 = vld [vmem:[%s2382 + $0x14] sm:$0xf]
        %v2389 = vld [vmem:[%s2382 + $0x18] sm:$0xf]
        %v2390 = vld [vmem:[%s2382 + $0x1c] sm:$0xf]
        %v2391 = vld [vmem:[%s2382 + $0x20] sm:$0xf]
        %v2392 = vld [vmem:[%s2382 + $0x24] sm:$0xf]
        %v2393 = vld [vmem:[%s2382 + $0x28] sm:$0xf]
        %v2394 = vld [vmem:[%s2382 + $0x2c] sm:$0xf]
        %v2395 = vld [vmem:[%s2382 + $0x30] sm:$0xf]
        %v2396 = vld [vmem:[%s2382 + $0x34] sm:$0xf]
        %v2397 = vld [vmem:[%s2382 + $0x38] sm:$0xf]
        %v2398 = vld [vmem:[%s2382 + $0x3c] sm:$0xf]
        %v2399 = vld [vmem:[%s2382 + $0x40] sm:$0xf]
        %v2400 = vld [vmem:[%s2382 + $0x44] sm:$0xf]
        %v2401 = vld [vmem:[%s2382 + $0x48] sm:$0xf]
        %v2402 = vld [vmem:[%s2382 + $0x4c] sm:$0xf]
        %v2403 = vld [vmem:[%s2382 + $0x50] sm:$0xf]
        %v2404 = vld [vmem:[%s2382 + $0x54] sm:$0xf]
        %v2405 = vld [vmem:[%s2382 + $0x58] sm:$0xf]
        %v2406 = vld [vmem:[%s2382 + $0x5c] sm:$0xf]
        %v2407 = vld [vmem:[%s2382 + $0x60] sm:$0xf]
        %v2408 = vld [vmem:[%s2382 + $0x64] sm:$0xf]
        %v2409 = vld [vmem:[%s2382 + $0x68] sm:$0xf]
        %v2410 = vld [vmem:[%s2382 + $0x6c] sm:$0xf]
        %v2411 = vld [vmem:[%s2382 + $0x70] sm:$0xf]
        %v2412 = vld [vmem:[%s2382 + $0x74] sm:$0xf]
        %v2413 = vld [vmem:[%s2382 + $0x78] sm:$0xf]
        %v2414 = vld [vmem:[%s2382 + $0x7c] sm:$0xf]
        %v2415 = vld [vmem:[%s2382 + $0x80] sm:$0xf]
        %v2416 = vld [vmem:[%s2382 + $0x84] sm:$0xf]
        %v2417 = vld [vmem:[%s2382 + $0x88] sm:$0xf]
        %v2418 = vld [vmem:[%s2382 + $0x8c] sm:$0xf]
        %v2419 = vld [vmem:[%s2382 + $0x90] sm:$0xf]
        %v2420 = vld [vmem:[%s2382 + $0x94] sm:$0xf]
        %v2421 = vld [vmem:[%s2382 + $0x98] sm:$0xf]
        %v2422 = vld [vmem:[%s2382 + $0x9c] sm:$0xf]
        %v2423 = vld [vmem:[%s2382 + $0xa0] sm:$0xf]
        %v2424 = vld [vmem:[%s2382 + $0xa4] sm:$0xf]
        %v2425 = vld [vmem:[%s2382 + $0xa8] sm:$0xf]
        %v2426 = vld [vmem:[%s2382 + $0xac] sm:$0xf]
        %v2427 = vld [vmem:[%s2382 + $0xb0] sm:$0xf]
        %v2428 = vld [vmem:[%s2382 + $0xb4] sm:$0xf]
        %v2429 = vld [vmem:[%s2382 + $0xb8] sm:$0xf]
        %v2430 = vld [vmem:[%s2382 + $0xbc] sm:$0xf]
        %v2439 = vunpack.c.l.b16 %v2374
        %v2440 = vunpack.c.h.b16 %v2374
        %v2441 = vunpack.c.l.b16 %v2375
        %v2442 = vunpack.c.l.b16 %v2376
        %v2443 = vunpack.c.h.b16 %v2376
        %v2444 = vunpack.c.l.b16 %v2377
        %v2445 = vunpack.c.l.b16 %v2378
        %v2446 = vunpack.c.h.b16 %v2378
        %v2447 = vunpack.c.l.b16 %v2379
        %v2448 = vunpack.c.l.b16 %v2380
        %v2449 = vunpack.c.h.b16 %v2380
        %v2450 = vunpack.c.l.b16 %v2381
        %v2451 = vpack.c.b16 %v2442, %v2439
        %v2452 = vpack.c.b16 %v2443, %v2440
        %v2453 = vpack.c.b16 %v2444, %v2441
        %v2454 = vpack.c.b16 %v2448, %v2445
        %v2455 = vpack.c.b16 %v2449, %v2446
        %v2456 = vpack.c.b16 %v2450, %v2447
        %v2511 = vunpack.c.l.b16 %v2383
        %v2512 = vunpack.c.l.b16 %v2384
        %v2513 = vunpack.c.l.b16 %v2385
        %v2514 = vunpack.c.l.b16 %v2386
        %v2515 = vunpack.c.l.b16 %v2387
        %v2516 = vunpack.c.l.b16 %v2388
        %v2517 = vunpack.c.l.b16 %v2389
        %v2518 = vunpack.c.l.b16 %v2390
        %v2519 = vunpack.c.l.b16 %v2391
        %v2520 = vunpack.c.l.b16 %v2392
        %v2521 = vunpack.c.l.b16 %v2393
        %v2522 = vunpack.c.l.b16 %v2394
        %v2523 = vunpack.c.l.b16 %v2395
        %v2524 = vunpack.c.l.b16 %v2396
        %v2525 = vunpack.c.l.b16 %v2397
        %v2526 = vunpack.c.l.b16 %v2398
        %v2527 = vunpack.c.l.b16 %v2399
        %v2528 = vunpack.c.l.b16 %v2400
        %v2529 = vunpack.c.l.b16 %v2401
        %v2530 = vunpack.c.l.b16 %v2402
        %v2531 = vunpack.c.l.b16 %v2403
        %v2532 = vunpack.c.l.b16 %v2404
        %v2533 = vunpack.c.l.b16 %v2405
        %v2534 = vunpack.c.l.b16 %v2406
        %v2535 = vunpack.c.l.b16 %v2407
        %v2536 = vunpack.c.l.b16 %v2408
        %v2537 = vunpack.c.l.b16 %v2409
        %v2538 = vunpack.c.l.b16 %v2410
        %v2539 = vunpack.c.l.b16 %v2411
        %v2540 = vunpack.c.l.b16 %v2412
        %v2541 = vunpack.c.l.b16 %v2413
        %v2542 = vunpack.c.l.b16 %v2414
        %v2543 = vunpack.c.l.b16 %v2415
        %v2544 = vunpack.c.l.b16 %v2416
        %v2545 = vunpack.c.l.b16 %v2417
        %v2546 = vunpack.c.l.b16 %v2418
        %v2547 = vunpack.c.l.b16 %v2419
        %v2548 = vunpack.c.l.b16 %v2420
        %v2549 = vunpack.c.l.b16 %v2421
        %v2550 = vunpack.c.l.b16 %v2422
        %v2551 = vunpack.c.l.b16 %v2423
        %v2552 = vunpack.c.l.b16 %v2424
        %v2553 = vunpack.c.l.b16 %v2425
        %v2554 = vunpack.c.l.b16 %v2426
        %v2555 = vunpack.c.l.b16 %v2427
        %v2556 = vunpack.c.l.b16 %v2428
        %v2557 = vunpack.c.l.b16 %v2429
        %v2558 = vunpack.c.l.b16 %v2430
        %v2559 = vpack.c.b16 %v2512, %v2511
        %v2560 = vpack.c.b16 %v2514, %v2513
        %v2561 = vpack.c.b16 %v2516, %v2515
        %v2562 = vpack.c.b16 %v2518, %v2517
        %v2563 = vpack.c.b16 %v2520, %v2519
        %v2564 = vpack.c.b16 %v2522, %v2521
        %v2565 = vpack.c.b16 %v2524, %v2523
        %v2566 = vpack.c.b16 %v2526, %v2525
        %v2567 = vpack.c.b16 %v2528, %v2527
        %v2568 = vpack.c.b16 %v2530, %v2529
        %v2569 = vpack.c.b16 %v2532, %v2531
        %v2570 = vpack.c.b16 %v2534, %v2533
        %v2571 = vpack.c.b16 %v2536, %v2535
        %v2572 = vpack.c.b16 %v2538, %v2537
        %v2573 = vpack.c.b16 %v2540, %v2539
        %v2574 = vpack.c.b16 %v2542, %v2541
        %v2575 = vpack.c.b16 %v2544, %v2543
        %v2576 = vpack.c.b16 %v2546, %v2545
        %v2577 = vpack.c.b16 %v2548, %v2547
        %v2578 = vpack.c.b16 %v2550, %v2549
        %v2579 = vpack.c.b16 %v2552, %v2551
        %v2580 = vpack.c.b16 %v2554, %v2553
        %v2581 = vpack.c.b16 %v2556, %v2555
        %v2582 = vpack.c.b16 %v2558, %v2557
        %2607 = vmatprep.subr.bf16.mxu0 0
        %2608 = vmatpush1.bf16.msra.mxu0 %v2566
        %2609 = vmatprep.subr.bf16.mxu0 0
        %2610 = vmatpush1.bf16.msra.mxu0 %v2565
        %2611 = vmatprep.subr.bf16.mxu0 0
        %2612 = vmatpush1.bf16.msra.mxu0 %v2564
        %2613 = vmatprep.subr.bf16.mxu0 0
        %2614 = vmatpush1.bf16.msra.mxu0 %v2563
        %2615 = vmatprep.subr.bf16.mxu0 0
        %2616 = vmatpush1.bf16.msra.mxu0 %v2562
        %2617 = vmatprep.subr.bf16.mxu0 0
        %2618 = vmatpush1.bf16.msra.mxu0 %v2561
        %2619 = vmatprep.subr.bf16.mxu0 0
        %2620 = vmatpush1.bf16.msra.mxu0 %v2560
        %2621 = vmatprep.subr.bf16.mxu0 0
        %2622 = vmatpush1.bf16.msra.mxu0 %v2559
        %2623 = vmatprep.subr.bf16.mxu0 0
        %2624 = vmatpush2.bf16.msra.mxu0 %v2574
        %2625 = vmatprep.subr.bf16.mxu0 0
        %2626 = vmatpush2.bf16.msra.mxu0 %v2573
        %2627 = vmatprep.subr.bf16.mxu0 0
        %2628 = vmatpush2.bf16.msra.mxu0 %v2572
        %2629 = vmatprep.subr.bf16.mxu0 0
        %2630 = vmatpush2.bf16.msra.mxu0 %v2571
        %2631 = vmatprep.subr.bf16.mxu0 0
        %2632 = vmatpush2.bf16.msra.mxu0 %v2570
        %2633 = vmatprep.subr.bf16.mxu0 0
        %2634 = vmatpush2.bf16.msra.mxu0 %v2569
        %2635 = vmatprep.subr.bf16.mxu0 0
        %2636 = vmatpush2.bf16.msra.mxu0 %v2568
        %2637 = vmatprep.subr.bf16.mxu0 0
        %2638 = vmatpush2.bf16.msra.mxu0 %v2567
        %2639 = vmatprep.mubr.bf16.mxu0 %v2452
        %2640 = vmatmul.mubr.bf16.gmra.mxu0 %v2451
        %v2641 = vpop.f32.mrf.mxu0
        %v2642 = vadd.f32 0.0, %v2641
        %v2643 = vpop.f32.mrf.mxu0
        %v2644 = vpop.f32.mrf.mxu0
        %v2645 = vadd.f32 0.0, %v2644
        %v2646 = vpop.f32.mrf.mxu0
        %2647 = vmatprep.mubr.bf16.mxu0 %v2455
        %2648 = vmatmul.mubr.bf16.gmra.mxu0 %v2454
        %v2649 = vpop.f32.mrf.mxu0
        %v2650 = vadd.f32 0.0, %v2649
        %v2651 = vpop.f32.mrf.mxu0
        %v2652 = vpop.f32.mrf.mxu0
        %v2653 = vadd.f32 0.0, %v2652
        %v2654 = vpop.f32.mrf.mxu0
        %2655 = vdwg.mxu0
        %2656 = vmatprep.subr.bf16.mxu0 0
        %2657 = vmatpush1.bf16.msra.mxu0 %v2582
        %2658 = vmatprep.subr.bf16.mxu0 0
        %2659 = vmatpush1.bf16.msra.mxu0 %v2581
        %2660 = vmatprep.subr.bf16.mxu0 0
        %2661 = vmatpush1.bf16.msra.mxu0 %v2580
        %2662 = vmatprep.subr.bf16.mxu0 0
        %2663 = vmatpush1.bf16.msra.mxu0 %v2579
        %2664 = vmatprep.subr.bf16.mxu0 0
        %2665 = vmatpush1.bf16.msra.mxu0 %v2578
        %2666 = vmatprep.subr.bf16.mxu0 0
        %2667 = vmatpush1.bf16.msra.mxu0 %v2577
        %2668 = vmatprep.subr.bf16.mxu0 0
        %2669 = vmatpush1.bf16.msra.mxu0 %v2576
        %2670 = vmatprep.subr.bf16.mxu0 0
        %2671 = vmatpush1.bf16.msra.mxu0 %v2575
        %2672 = vmatprep.subr.bf16.mxu0 0
        %2673 = vmatpush2.bf16.msra.mxu0 0
        %2674 = vmatprep.subr.bf16.mxu0 0
        %2675 = vmatpush2.bf16.msra.mxu0 0
        %2676 = vmatprep.subr.bf16.mxu0 0
        %2677 = vmatpush2.bf16.msra.mxu0 0
        %2678 = vmatprep.subr.bf16.mxu0 0
        %2679 = vmatpush2.bf16.msra.mxu0 0
        %2680 = vmatprep.subr.bf16.mxu0 0
        %2681 = vmatpush2.bf16.msra.mxu0 0
        %2682 = vmatprep.subr.bf16.mxu0 0
        %2683 = vmatpush2.bf16.msra.mxu0 0
        %2684 = vmatprep.subr.bf16.mxu0 0
        %2685 = vmatpush2.bf16.msra.mxu0 0
        %2686 = vmatprep.subr.bf16.mxu0 0
        %2687 = vmatpush2.bf16.msra.mxu0 0
        %2688 = vmatprep.mubr.bf16.mxu0 0
        %2689 = vmatmul.mubr.bf16.gmra.mxu0 %v2453
        %v2690 = vpop.f32.mrf.mxu0
        %v2691 = vadd.f32 %v2642, %v2690
        %v2692 = vpop.f32.mrf.mxu0
        %v2693 = vpop.f32.mrf.mxu0
        %v2694 = vadd.f32 %v2645, %v2693
        %v2695 = vpop.f32.mrf.mxu0
        %2696 = vmatprep.mubr.bf16.mxu0 0
        %2697 = vmatmul.mubr.bf16.gmra.mxu0 %v2456
        %v2698 = vpop.f32.mrf.mxu0
        %v2699 = vadd.f32 %v2650, %v2698
        %v2700 = vpop.f32.mrf.mxu0
        %v2701 = vpop.f32.mrf.mxu0
        %v2702 = vadd.f32 %v2653, %v2701
        %v2703 = vpop.f32.mrf.mxu0
        %2704 = vdwg.mxu0
        %v2705 = vld [vmem:[#allocation6] sm:$0xff]
        %v2706 = vld [vmem:[#allocation6 + $0x8] sm:$0xff]
        %v2707 = vld [vmem:[#allocation6 + $0x10] sm:$0xff]
        %v2708 = vld [vmem:[#allocation6 + $0x18] sm:$0xff]
        %v2709 = vadd.f32 %v2705, %v2691
        %v2710 = vadd.f32 %v2706, %v2694
        %v2711 = vadd.f32 %v2707, %v2699
        %v2712 = vadd.f32 %v2708, %v2702
        %2713 = vst [vmem:[#allocation6] sm:$0xff] %v2709
        %2714 = vst [vmem:[#allocation6 + $0x8] sm:$0xff] %v2710
        %2715 = vst [vmem:[#allocation6 + $0x10] sm:$0xff] %v2711
        %2716 = vst [vmem:[#allocation6 + $0x18] sm:$0xff] %v2712
        %s2717 = scalar_lea.vmem [#allocation3], 16
        %v2718 = vld [vmem:[%s2717] sm:$0xf]
        %v2719 = vld [vmem:[%s2717 + $0x8] sm:$0xf]
        %v2720 = vld [vmem:[%s2717 + $0x10] sm:$0xf]
        %v2721 = vld [vmem:[%s2717 + $0x18] sm:$0xf]
        %2722 = vst [vmem:[#allocation5] sm:$0xf] %v2718
        %2723 = vst [vmem:[#allocation5 + $0xc] sm:$0xf] %v2719
        %2724 = vst [vmem:[#allocation5 + $0x18] sm:$0xf] %v2720
        %2725 = vst [vmem:[#allocation5 + $0x24] sm:$0xf] %v2721
        %v2726 = vld [vmem:[%s2717] sm:$0xf]
        %v2727 = vld [vmem:[%s2717 + $0x4] sm:$0x1]
        %v2728 = vld [vmem:[%s2717 + $0x8] sm:$0xf]
        %v2729 = vld [vmem:[%s2717 + $0xc] sm:$0x1]
        %v2730 = vld [vmem:[%s2717 + $0x10] sm:$0xf]
        %v2731 = vld [vmem:[%s2717 + $0x14] sm:$0x1]
        %v2732 = vld [vmem:[%s2717 + $0x18] sm:$0xf]
        %v2733 = vld [vmem:[%s2717 + $0x1c] sm:$0x1]
        %v2735 = vshrl.u32 %v2726, 16
        %v2737 = vrot.slane %v2735, 4
        %v2738 = vshll.u32 %v2726, 16
        %v2740 = vrot.slane %v2738, 5
        %v2741 = vor.u32 %v2737, %v2740
        %v2742 = vrot.slane %v2741, 4
        %v2744 = vshll.u32 %v2727, 16
        %v2746 = vrot.slane %v2744, 5
        %v2747 = vsel %vm660, %v2742, %v2746
        %v2749 = vshrl.u32 %v2728, 16
        %v2751 = vrot.slane %v2749, 4
        %v2752 = vshll.u32 %v2728, 16
        %v2754 = vrot.slane %v2752, 5
        %v2755 = vor.u32 %v2751, %v2754
        %v2756 = vrot.slane %v2755, 4
        %v2758 = vshll.u32 %v2729, 16
        %v2760 = vrot.slane %v2758, 5
        %v2761 = vsel %vm660, %v2756, %v2760
        %v2763 = vshrl.u32 %v2730, 16
        %v2765 = vrot.slane %v2763, 4
        %v2766 = vshll.u32 %v2730, 16
        %v2768 = vrot.slane %v2766, 5
        %v2769 = vor.u32 %v2765, %v2768
        %v2770 = vrot.slane %v2769, 4
        %v2772 = vshll.u32 %v2731, 16
        %v2774 = vrot.slane %v2772, 5
        %v2775 = vsel %vm660, %v2770, %v2774
        %v2777 = vshrl.u32 %v2732, 16
        %v2779 = vrot.slane %v2777, 4
        %v2780 = vshll.u32 %v2732, 16
        %v2782 = vrot.slane %v2780, 5
        %v2783 = vor.u32 %v2779, %v2782
        %v2784 = vrot.slane %v2783, 4
        %v2786 = vshll.u32 %v2733, 16
        %v2788 = vrot.slane %v2786, 5
        %v2789 = vsel %vm660, %v2784, %v2788
        %2794 = vst [vmem:[#allocation5 + $0x4] sm:$0xf] %v2747
        %2795 = vst [vmem:[#allocation5 + $0x10] sm:$0xf] %v2761
        %2796 = vst [vmem:[#allocation5 + $0x1c] sm:$0xf] %v2775
        %2797 = vst [vmem:[#allocation5 + $0x28] sm:$0xf] %v2789
        %v2798 = vld [vmem:[%s2717] sm:$0xe]
        %v2799 = vld [vmem:[%s2717 + $0x4] sm:$0x1]
        %v2800 = vld [vmem:[%s2717 + $0x8] sm:$0xe]
        %v2801 = vld [vmem:[%s2717 + $0xc] sm:$0x1]
        %v2802 = vld [vmem:[%s2717 + $0x10] sm:$0xe]
        %v2803 = vld [vmem:[%s2717 + $0x14] sm:$0x1]
        %v2804 = vld [vmem:[%s2717 + $0x18] sm:$0xe]
        %v2805 = vld [vmem:[%s2717 + $0x1c] sm:$0x1]
        %v2814 = vrot.slane %v2798, 5
        %v2815 = vrot.slane %v2814, 4
        %v2816 = vrot.slane %v2799, 5
        %v2817 = vsel %vm796, %v2815, %v2816
        %v2818 = vrot.slane %v2800, 5
        %v2819 = vrot.slane %v2818, 4
        %v2820 = vrot.slane %v2801, 5
        %v2821 = vsel %vm796, %v2819, %v2820
        %v2822 = vrot.slane %v2802, 5
        %v2823 = vrot.slane %v2822, 4
        %v2824 = vrot.slane %v2803, 5
        %v2825 = vsel %vm796, %v2823, %v2824
        %v2826 = vrot.slane %v2804, 5
        %v2827 = vrot.slane %v2826, 4
        %v2828 = vrot.slane %v2805, 5
        %v2829 = vsel %vm796, %v2827, %v2828
        %2834 = vst [vmem:[#allocation5 + $0x8] sm:$0xf] %v2817
        %2835 = vst [vmem:[#allocation5 + $0x14] sm:$0xf] %v2821
        %2836 = vst [vmem:[#allocation5 + $0x20] sm:$0xf] %v2825
        %2837 = vst [vmem:[#allocation5 + $0x2c] sm:$0xf] %v2829
        %v2838 = vld [vmem:[#allocation5] sm:$0xff]
        %v2839 = vld [vmem:[#allocation5 + $0x8] sm:$0xf]
        %v2840 = vld [vmem:[#allocation5 + $0xc] sm:$0xff]
        %v2841 = vld [vmem:[#allocation5 + $0x14] sm:$0xf]
        %v2842 = vld [vmem:[#allocation5 + $0x18] sm:$0xff]
        %v2843 = vld [vmem:[#allocation5 + $0x20] sm:$0xf]
        %v2844 = vld [vmem:[#allocation5 + $0x24] sm:$0xff]
        %v2845 = vld [vmem:[#allocation5 + $0x2c] sm:$0xf]
        %s2846 = scalar_lea.vmem %s5, 384
        %v2847 = vld [vmem:[%s2846] sm:$0xf]
        %v2848 = vld [vmem:[%s2846 + $0x4] sm:$0xf]
        %v2849 = vld [vmem:[%s2846 + $0x8] sm:$0xf]
        %v2850 = vld [vmem:[%s2846 + $0xc] sm:$0xf]
        %v2851 = vld [vmem:[%s2846 + $0x10] sm:$0xf]
        %v2852 = vld [vmem:[%s2846 + $0x14] sm:$0xf]
        %v2853 = vld [vmem:[%s2846 + $0x18] sm:$0xf]
        %v2854 = vld [vmem:[%s2846 + $0x1c] sm:$0xf]
        %v2855 = vld [vmem:[%s2846 + $0x20] sm:$0xf]
        %v2856 = vld [vmem:[%s2846 + $0x24] sm:$0xf]
        %v2857 = vld [vmem:[%s2846 + $0x28] sm:$0xf]
        %v2858 = vld [vmem:[%s2846 + $0x2c] sm:$0xf]
        %v2859 = vld [vmem:[%s2846 + $0x30] sm:$0xf]
        %v2860 = vld [vmem:[%s2846 + $0x34] sm:$0xf]
        %v2861 = vld [vmem:[%s2846 + $0x38] sm:$0xf]
        %v2862 = vld [vmem:[%s2846 + $0x3c] sm:$0xf]
        %v2863 = vld [vmem:[%s2846 + $0x40] sm:$0xf]
        %v2864 = vld [vmem:[%s2846 + $0x44] sm:$0xf]
        %v2865 = vld [vmem:[%s2846 + $0x48] sm:$0xf]
        %v2866 = vld [vmem:[%s2846 + $0x4c] sm:$0xf]
        %v2867 = vld [vmem:[%s2846 + $0x50] sm:$0xf]
        %v2868 = vld [vmem:[%s2846 + $0x54] sm:$0xf]
        %v2869 = vld [vmem:[%s2846 + $0x58] sm:$0xf]
        %v2870 = vld [vmem:[%s2846 + $0x5c] sm:$0xf]
        %v2871 = vld [vmem:[%s2846 + $0x60] sm:$0xf]
        %v2872 = vld [vmem:[%s2846 + $0x64] sm:$0xf]
        %v2873 = vld [vmem:[%s2846 + $0x68] sm:$0xf]
        %v2874 = vld [vmem:[%s2846 + $0x6c] sm:$0xf]
        %v2875 = vld [vmem:[%s2846 + $0x70] sm:$0xf]
        %v2876 = vld [vmem:[%s2846 + $0x74] sm:$0xf]
        %v2877 = vld [vmem:[%s2846 + $0x78] sm:$0xf]
        %v2878 = vld [vmem:[%s2846 + $0x7c] sm:$0xf]
        %v2879 = vld [vmem:[%s2846 + $0x80] sm:$0xf]
        %v2880 = vld [vmem:[%s2846 + $0x84] sm:$0xf]
        %v2881 = vld [vmem:[%s2846 + $0x88] sm:$0xf]
        %v2882 = vld [vmem:[%s2846 + $0x8c] sm:$0xf]
        %v2883 = vld [vmem:[%s2846 + $0x90] sm:$0xf]
        %v2884 = vld [vmem:[%s2846 + $0x94] sm:$0xf]
        %v2885 = vld [vmem:[%s2846 + $0x98] sm:$0xf]
        %v2886 = vld [vmem:[%s2846 + $0x9c] sm:$0xf]
        %v2887 = vld [vmem:[%s2846 + $0xa0] sm:$0xf]
        %v2888 = vld [vmem:[%s2846 + $0xa4] sm:$0xf]
        %v2889 = vld [vmem:[%s2846 + $0xa8] sm:$0xf]
        %v2890 = vld [vmem:[%s2846 + $0xac] sm:$0xf]
        %v2891 = vld [vmem:[%s2846 + $0xb0] sm:$0xf]
        %v2892 = vld [vmem:[%s2846 + $0xb4] sm:$0xf]
        %v2893 = vld [vmem:[%s2846 + $0xb8] sm:$0xf]
        %v2894 = vld [vmem:[%s2846 + $0xbc] sm:$0xf]
        %v2903 = vunpack.c.l.b16 %v2838
        %v2904 = vunpack.c.h.b16 %v2838
        %v2905 = vunpack.c.l.b16 %v2839
        %v2906 = vunpack.c.l.b16 %v2840
        %v2907 = vunpack.c.h.b16 %v2840
        %v2908 = vunpack.c.l.b16 %v2841
        %v2909 = vunpack.c.l.b16 %v2842
        %v2910 = vunpack.c.h.b16 %v2842
        %v2911 = vunpack.c.l.b16 %v2843
        %v2912 = vunpack.c.l.b16 %v2844
        %v2913 = vunpack.c.h.b16 %v2844
        %v2914 = vunpack.c.l.b16 %v2845
        %v2915 = vpack.c.b16 %v2906, %v2903
        %v2916 = vpack.c.b16 %v2907, %v2904
        %v2917 = vpack.c.b16 %v2908, %v2905
        %v2918 = vpack.c.b16 %v2912, %v2909
        %v2919 = vpack.c.b16 %v2913, %v2910
        %v2920 = vpack.c.b16 %v2914, %v2911
        %v2975 = vunpack.c.l.b16 %v2847
        %v2976 = vunpack.c.l.b16 %v2848
        %v2977 = vunpack.c.l.b16 %v2849
        %v2978 = vunpack.c.l.b16 %v2850
        %v2979 = vunpack.c.l.b16 %v2851
        %v2980 = vunpack.c.l.b16 %v2852
        %v2981 = vunpack.c.l.b16 %v2853
        %v2982 = vunpack.c.l.b16 %v2854
        %v2983 = vunpack.c.l.b16 %v2855
        %v2984 = vunpack.c.l.b16 %v2856
        %v2985 = vunpack.c.l.b16 %v2857
        %v2986 = vunpack.c.l.b16 %v2858
        %v2987 = vunpack.c.l.b16 %v2859
        %v2988 = vunpack.c.l.b16 %v2860
        %v2989 = vunpack.c.l.b16 %v2861
        %v2990 = vunpack.c.l.b16 %v2862
        %v2991 = vunpack.c.l.b16 %v2863
        %v2992 = vunpack.c.l.b16 %v2864
        %v2993 = vunpack.c.l.b16 %v2865
        %v2994 = vunpack.c.l.b16 %v2866
        %v2995 = vunpack.c.l.b16 %v2867
        %v2996 = vunpack.c.l.b16 %v2868
        %v2997 = vunpack.c.l.b16 %v2869
        %v2998 = vunpack.c.l.b16 %v2870
        %v2999 = vunpack.c.l.b16 %v2871
        %v3000 = vunpack.c.l.b16 %v2872
        %v3001 = vunpack.c.l.b16 %v2873
        %v3002 = vunpack.c.l.b16 %v2874
        %v3003 = vunpack.c.l.b16 %v2875
        %v3004 = vunpack.c.l.b16 %v2876
        %v3005 = vunpack.c.l.b16 %v2877
        %v3006 = vunpack.c.l.b16 %v2878
        %v3007 = vunpack.c.l.b16 %v2879
        %v3008 = vunpack.c.l.b16 %v2880
        %v3009 = vunpack.c.l.b16 %v2881
        %v3010 = vunpack.c.l.b16 %v2882
        %v3011 = vunpack.c.l.b16 %v2883
        %v3012 = vunpack.c.l.b16 %v2884
        %v3013 = vunpack.c.l.b16 %v2885
        %v3014 = vunpack.c.l.b16 %v2886
        %v3015 = vunpack.c.l.b16 %v2887
        %v3016 = vunpack.c.l.b16 %v2888
        %v3017 = vunpack.c.l.b16 %v2889
        %v3018 = vunpack.c.l.b16 %v2890
        %v3019 = vunpack.c.l.b16 %v2891
        %v3020 = vunpack.c.l.b16 %v2892
        %v3021 = vunpack.c.l.b16 %v2893
        %v3022 = vunpack.c.l.b16 %v2894
        %v3023 = vpack.c.b16 %v2976, %v2975
        %v3024 = vpack.c.b16 %v2978, %v2977
        %v3025 = vpack.c.b16 %v2980, %v2979
        %v3026 = vpack.c.b16 %v2982, %v2981
        %v3027 = vpack.c.b16 %v2984, %v2983
        %v3028 = vpack.c.b16 %v2986, %v2985
        %v3029 = vpack.c.b16 %v2988, %v2987
        %v3030 = vpack.c.b16 %v2990, %v2989
        %v3031 = vpack.c.b16 %v2992, %v2991
        %v3032 = vpack.c.b16 %v2994, %v2993
        %v3033 = vpack.c.b16 %v2996, %v2995
        %v3034 = vpack.c.b16 %v2998, %v2997
        %v3035 = vpack.c.b16 %v3000, %v2999
        %v3036 = vpack.c.b16 %v3002, %v3001
        %v3037 = vpack.c.b16 %v3004, %v3003
        %v3038 = vpack.c.b16 %v3006, %v3005
        %v3039 = vpack.c.b16 %v3008, %v3007
        %v3040 = vpack.c.b16 %v3010, %v3009
        %v3041 = vpack.c.b16 %v3012, %v3011
        %v3042 = vpack.c.b16 %v3014, %v3013
        %v3043 = vpack.c.b16 %v3016, %v3015
        %v3044 = vpack.c.b16 %v3018, %v3017
        %v3045 = vpack.c.b16 %v3020, %v3019
        %v3046 = vpack.c.b16 %v3022, %v3021
        %3071 = vmatprep.subr.bf16.mxu0 0
        %3072 = vmatpush1.bf16.msra.mxu0 %v3030
        %3073 = vmatprep.subr.bf16.mxu0 0
        %3074 = vmatpush1.bf16.msra.mxu0 %v3029
        %3075 = vmatprep.subr.bf16.mxu0 0
        %3076 = vmatpush1.bf16.msra.mxu0 %v3028
        %3077 = vmatprep.subr.bf16.mxu0 0
        %3078 = vmatpush1.bf16.msra.mxu0 %v3027
        %3079 = vmatprep.subr.bf16.mxu0 0
        %3080 = vmatpush1.bf16.msra.mxu0 %v3026
        %3081 = vmatprep.subr.bf16.mxu0 0
        %3082 = vmatpush1.bf16.msra.mxu0 %v3025
        %3083 = vmatprep.subr.bf16.mxu0 0
        %3084 = vmatpush1.bf16.msra.mxu0 %v3024
        %3085 = vmatprep.subr.bf16.mxu0 0
        %3086 = vmatpush1.bf16.msra.mxu0 %v3023
        %3087 = vmatprep.subr.bf16.mxu0 0
        %3088 = vmatpush2.bf16.msra.mxu0 %v3038
        %3089 = vmatprep.subr.bf16.mxu0 0
        %3090 = vmatpush2.bf16.msra.mxu0 %v3037
        %3091 = vmatprep.subr.bf16.mxu0 0
        %3092 = vmatpush2.bf16.msra.mxu0 %v3036
        %3093 = vmatprep.subr.bf16.mxu0 0
        %3094 = vmatpush2.bf16.msra.mxu0 %v3035
        %3095 = vmatprep.subr.bf16.mxu0 0
        %3096 = vmatpush2.bf16.msra.mxu0 %v3034
        %3097 = vmatprep.subr.bf16.mxu0 0
        %3098 = vmatpush2.bf16.msra.mxu0 %v3033
        %3099 = vmatprep.subr.bf16.mxu0 0
        %3100 = vmatpush2.bf16.msra.mxu0 %v3032
        %3101 = vmatprep.subr.bf16.mxu0 0
        %3102 = vmatpush2.bf16.msra.mxu0 %v3031
        %3103 = vmatprep.mubr.bf16.mxu0 %v2916
        %3104 = vmatmul.mubr.bf16.gmra.mxu0 %v2915
        %v3105 = vpop.f32.mrf.mxu0
        %v3106 = vadd.f32 0.0, %v3105
        %v3107 = vpop.f32.mrf.mxu0
        %v3108 = vpop.f32.mrf.mxu0
        %v3109 = vadd.f32 0.0, %v3108
        %v3110 = vpop.f32.mrf.mxu0
        %3111 = vmatprep.mubr.bf16.mxu0 %v2919
        %3112 = vmatmul.mubr.bf16.gmra.mxu0 %v2918
        %v3113 = vpop.f32.mrf.mxu0
        %v3114 = vadd.f32 0.0, %v3113
        %v3115 = vpop.f32.mrf.mxu0
        %v3116 = vpop.f32.mrf.mxu0
        %v3117 = vadd.f32 0.0, %v3116
        %v3118 = vpop.f32.mrf.mxu0
        %3119 = vdwg.mxu0
        %3120 = vmatprep.subr.bf16.mxu0 0
        %3121 = vmatpush1.bf16.msra.mxu0 %v3046
        %3122 = vmatprep.subr.bf16.mxu0 0
        %3123 = vmatpush1.bf16.msra.mxu0 %v3045
        %3124 = vmatprep.subr.bf16.mxu0 0
        %3125 = vmatpush1.bf16.msra.mxu0 %v3044
        %3126 = vmatprep.subr.bf16.mxu0 0
        %3127 = vmatpush1.bf16.msra.mxu0 %v3043
        %3128 = vmatprep.subr.bf16.mxu0 0
        %3129 = vmatpush1.bf16.msra.mxu0 %v3042
        %3130 = vmatprep.subr.bf16.mxu0 0
        %3131 = vmatpush1.bf16.msra.mxu0 %v3041
        %3132 = vmatprep.subr.bf16.mxu0 0
        %3133 = vmatpush1.bf16.msra.mxu0 %v3040
        %3134 = vmatprep.subr.bf16.mxu0 0
        %3135 = vmatpush1.bf16.msra.mxu0 %v3039
        %3136 = vmatprep.subr.bf16.mxu0 0
        %3137 = vmatpush2.bf16.msra.mxu0 0
        %3138 = vmatprep.subr.bf16.mxu0 0
        %3139 = vmatpush2.bf16.msra.mxu0 0
        %3140 = vmatprep.subr.bf16.mxu0 0
        %3141 = vmatpush2.bf16.msra.mxu0 0
        %3142 = vmatprep.subr.bf16.mxu0 0
        %3143 = vmatpush2.bf16.msra.mxu0 0
        %3144 = vmatprep.subr.bf16.mxu0 0
        %3145 = vmatpush2.bf16.msra.mxu0 0
        %3146 = vmatprep.subr.bf16.mxu0 0
        %3147 = vmatpush2.bf16.msra.mxu0 0
        %3148 = vmatprep.subr.bf16.mxu0 0
        %3149 = vmatpush2.bf16.msra.mxu0 0
        %3150 = vmatprep.subr.bf16.mxu0 0
        %3151 = vmatpush2.bf16.msra.mxu0 0
        %3152 = vmatprep.mubr.bf16.mxu0 0
        %3153 = vmatmul.mubr.bf16.gmra.mxu0 %v2917
        %v3154 = vpop.f32.mrf.mxu0
        %v3155 = vadd.f32 %v3106, %v3154
        %v3156 = vpop.f32.mrf.mxu0
        %v3157 = vpop.f32.mrf.mxu0
        %v3158 = vadd.f32 %v3109, %v3157
        %v3159 = vpop.f32.mrf.mxu0
        %3160 = vmatprep.mubr.bf16.mxu0 0
        %3161 = vmatmul.mubr.bf16.gmra.mxu0 %v2920
        %v3162 = vpop.f32.mrf.mxu0
        %v3163 = vadd.f32 %v3114, %v3162
        %v3164 = vpop.f32.mrf.mxu0
        %v3165 = vpop.f32.mrf.mxu0
        %v3166 = vadd.f32 %v3117, %v3165
        %v3167 = vpop.f32.mrf.mxu0
        %3168 = vdwg.mxu0
        %v3169 = vld [vmem:[#allocation6] sm:$0xff]
        %v3170 = vld [vmem:[#allocation6 + $0x8] sm:$0xff]
        %v3171 = vld [vmem:[#allocation6 + $0x10] sm:$0xff]
        %v3172 = vld [vmem:[#allocation6 + $0x18] sm:$0xff]
        %v3173 = vadd.f32 %v3169, %v3155
        %v3174 = vadd.f32 %v3170, %v3158
        %v3175 = vadd.f32 %v3171, %v3163
        %v3176 = vadd.f32 %v3172, %v3166
        %3177 = vst [vmem:[#allocation6] sm:$0xff] %v3173
        %3178 = vst [vmem:[#allocation6 + $0x8] sm:$0xff] %v3174
        %3179 = vst [vmem:[#allocation6 + $0x10] sm:$0xff] %v3175
        %3180 = vst [vmem:[#allocation6 + $0x18] sm:$0xff] %v3176
        %v3181 = vld [vmem:[#allocation6] sm:$0xff]
        %v3182 = vld [vmem:[#allocation6 + $0x8] sm:$0xff]
        %v3183 = vld [vmem:[#allocation6 + $0x10] sm:$0xff]
        %v3184 = vld [vmem:[#allocation6 + $0x18] sm:$0xff]
        %v3185 = vld [vmem:[%s6] sm:$0x1]
        %v3187 = vlaneseq
        %v3188 = vshrl.u32 %v3187, 7
        %v3189 = vsub.s32 0, %v3188
        %v3190 = vrot.slane %v3185, %v3189
        %v3192 = vmul.f32 %v3181, %v3190
        %v3193 = vmul.f32 %v3182, %v3190
        %v3194 = vmul.f32 %v3183, %v3190
        %v3195 = vmul.f32 %v3184, %v3190
        %v3196 = vld [vmem:[%s7] sm:$0x1]
        %v3198 = vlaneseq
        %v3199 = vshrl.u32 %v3198, 7
        %v3200 = vsub.s32 0, %v3199
        %v3201 = vrot.slane %v3196, %v3200
        %v3203 = vadd.f32 %v3192, %v3201
        %v3204 = vadd.f32 %v3193, %v3201
        %v3205 = vadd.f32 %v3194, %v3201
        %v3206 = vadd.f32 %v3195, %v3201
        %v3207 = vmax.f32 %v3203, 0.0
        %v3208 = vmax.f32 %v3204, 0.0
        %v3209 = vmax.f32 %v3205, 0.0
        %v3210 = vmax.f32 %v3206, 0.0
        %v3211 = vpack.c.bf16 %v3208, %v3207
        %v3212 = vpack.c.bf16 %v3210, %v3209
        %v3215 = vunpack.c.l.b16 %v3211
        %v3216 = vunpack.c.h.b16 %v3211
        %v3217 = vunpack.c.l.b16 %v3212
        %v3218 = vunpack.c.h.b16 %v3212
        %v3219 = vpack.c.b16 %v3215, %v3215
        %v3220 = vpack.c.b16 %v3216, %v3216
        %v3221 = vpack.c.b16 %v3217, %v3217
        %v3222 = vpack.c.b16 %v3218, %v3218
        %3227 = vst [vmem:[%s358] sm:$0xf] %v3219
        %3228 = vst [vmem:[%s358 + $0x4] sm:$0xf] %v3220
        %3229 = vst [vmem:[%s358 + $0x8] sm:$0xf] %v3221
        %3230 = vst [vmem:[%s358 + $0xc] sm:$0xf] %v3222
        %s3231 = sand.u32 %s228, 1
        %s3232 = scalar_lea.sflag [#allocation8], %s3231
        %s3233 = sand.u32 %s228, 1
        %s3234 = smul.addr %s3233, 16
        %s3235 = scalar_lea.vmem [#allocation7], %s3234
        // Predicated region
        $region61: #{tpu_custom_call.1} parent=51 // pred_check
          %p3236 = pneg %p238
        $region62: #{tpu_custom_call.1} parent=51 // pred_check_branch
          %3238 = sbr.rel (%p3236) target = $region64
        $region63: #{tpu_custom_call.1} parent=51 // pred_region
          %s3239 = smul.u32 4, %s27
          %s3241 = ssub.s32 256, 256
          %3242 = vsyncadd %s3232, %s3241
          %s3243 = smul.addr %s26, 8
          %s3244 = sadd.s32 %s3239, %s3243
          %s3245 = smul.addr %s3244, 64
          %s3246 = scalar_lea.hbm %s8, %s3245
          %s3247 = sshll.u32 %s3235, 4
          %s3248 = int_to_ptr.vmem [resolvable:$true] %s3247
          %3253 = dma.vmem_to_hbm [thread:$0]  %s3248, 256, %s3246, %s3232, 64, 64, 4
        $region64: #{tpu_custom_call.1} parent=51 // pred_fallthru
          _
      $region52: #{tpu_custom_call.1} parent=5 // pred_fallthru
        _
      %p3254 = scmp.le.s32.totalorder 2, %s17
      // Predicated region
      $region65: #{tpu_custom_call.1} parent=5 // pred_check
        %p3255 = pneg %p3254
      $region66: #{tpu_custom_call.1} parent=5 // pred_check_branch
        %3257 = sbr.rel (%p3255) target = $region68
      $region67: #{tpu_custom_call.1} parent=5 // pred_region
        %s3258 = ssub.s32 %s17, 2
        // Predicated region
        $region69: #{tpu_custom_call.1} parent=67 // pred_check
          %p3259 = pneg %p244
        $region70: #{tpu_custom_call.1} parent=67 // pred_check_branch
          %3261 = sbr.rel (%p3259) target = $region72
        $region71: #{tpu_custom_call.1} parent=67 // pred_region
          %s3262 = sand.u32 %s229, 1
          %s3263 = scalar_lea.sflag [#allocation8], %s3262
          %s3264 = sand.u32 %s229, 1
          %s3265 = smul.addr %s3264, 16
          %s3266 = scalar_lea.vmem [#allocation7], %s3265
          %3267 = dma.done %s3263, 256
        $region72: #{tpu_custom_call.1} parent=67 // pred_fallthru
          _
      $region68: #{tpu_custom_call.1} parent=5 // pred_fallthru
        _
    $region6: #{tpu_custom_call.1} parent=1 // loop_footer
      %s21 = sadd.s32 1, %s17
    $region7: #{tpu_custom_call.1} parent=1 // loop_footer_branch
      %16 = sbr.rel target = $region3
    $region8: #{tpu_custom_call.1} parent=1 // loop_exit
      _
    %3268 = vsyncpa [#allocation8], 1
    %s3269 = scalar_lea.sflag [#allocation8], 1
    %3270 = vsyncpa %s3269, 1

</llo_original>
